<compile_context>
chip_gen: v6e
topology: v6e:2x2x1
jax: 0.10.0
libtpu: 0.0.40
codegen_flags: <defaults>
</compile_context>

<pallas_src>
import functools

import jax
import jax.numpy as jnp
import numpy as np
from jax import lax
from jax.experimental import pallas as pl
from jax.experimental.pallas import tpu as pltpu


def residual_block_kernel(xc_ref, xprev_ref, xnext_ref,
                          w1_ref, b1_ref, w2_ref, wd_ref, bout_ref,
                          out_ref, xp_ref, yp_ref,
                          *, TD, H, W, Cin, Cout):
    """One (sample, D-slab) tile of the residual block.

    xc_ref   : (TD, H, W*Cin)        current D-slab of the input (lane-dense)
    xprev_ref: (2, H, W*Cin)         2 rows below the slab (garbage at d==0)
    xnext_ref: (2, H, W*Cin)         2 rows above the slab (garbage at last d)
    w1_ref   : (9, W*Cin, W*Cout)    conv1 banded weights per (dz,dh): dw taps,
                                     W zero-padding and BN1 scale folded in
    b1_ref   : (1, W*Cout)           BN1 bias tiled over W (lane-dense)
    w2_ref   : (9, W*Cout, W*Cout)   conv2 banded weights, BN2 scale folded
    wd_ref   : (W*Cin, W*Cout)       block-diagonal 1x1x1 downsample weights,
                                     BNd scale folded
    bout_ref : (1, W*Cout)           (BN2 bias + BNd bias) tiled over W
    out_ref  : (TD*H, W*Cout)        lane-dense output block
    xp_ref   : (TD+4, H+2, W*Cin)    VMEM scratch: D/H zero-padded input slab
    yp_ref   : (TD+2, H+2, W*Cout)   VMEM scratch: H-padded conv1 output
    """
    d = pl.program_id(1)
    nD = pl.num_programs(1)
    WCi = W * Cin
    WCo = W * Cout
    cdt = xp_ref.dtype
    ydt = yp_ref.dtype

    # ---- assemble the padded input slab in VMEM ------------------------------
    # H halo faces: 2 lane-dense row stores (interior / D-halo overwritten).
    xp_ref[:, 0:1, :] = jnp.zeros((TD + 4, 1, WCi), cdt)
    xp_ref[:, H + 1:H + 2, :] = jnp.zeros((TD + 4, 1, WCi), cdt)
    xp_ref[2:TD + 2, 1:H + 1, :] = xc_ref[...]

    # D halo (2 rows each side); zero at the global volume boundary.
    @pl.when(d > 0)
    def _():
        xp_ref[0:2, 1:H + 1, :] = xprev_ref[...]

    @pl.when(d == 0)
    def _():
        xp_ref[0:2, 1:H + 1, :] = jnp.zeros((2, H, WCi), cdt)

    @pl.when(d < nD - 1)
    def _():
        xp_ref[TD + 2:TD + 4, 1:H + 1, :] = xnext_ref[...]

    @pl.when(d == nD - 1)
    def _():
        xp_ref[TD + 2:TD + 4, 1:H + 1, :] = jnp.zeros((2, H, WCi), cdt)

    # ---- conv1 (3x3x3): 9 accumulated banded matmuls over TD+2 halo rows -----
    TDo = TD + 2                      # conv1 output rows needed by conv2
    M1 = TDo * H
    acc1 = None
    for k in range(9):
        dz, dh = divmod(k, 3)
        a = xp_ref[dz:dz + TDo, dh:dh + H, :].reshape(M1, WCi)
        p = jnp.dot(a, w1_ref[k], preferred_element_type=jnp.float32)
        acc1 = p if acc1 is None else acc1 + p
    y1 = jnp.maximum(acc1 + b1_ref[...], 0.0)            # BN1 bias + ReLU

    # H-padded conv1 output (W padding is folded into the conv2 weights).
    yp_ref[:, 0:1, :] = jnp.zeros((TDo, 1, WCo), ydt)
    yp_ref[:, H + 1:H + 2, :] = jnp.zeros((TDo, 1, WCo), ydt)
    yp_ref[:, 1:H + 1, :] = y1.reshape(TDo, H, WCo).astype(ydt)

    # conv2 must see zero padding of y1 at the global D boundary: zero only the
    # boundary rows and only on the boundary slabs (replaces iota+where mask).
    @pl.when(d == 0)
    def _():
        yp_ref[0:1, 1:H + 1, :] = jnp.zeros((1, H, WCo), ydt)

    @pl.when(d == nD - 1)
    def _():
        yp_ref[TDo - 1:TDo, 1:H + 1, :] = jnp.zeros((1, H, WCo), ydt)

    # ---- conv2 (3x3x3) + fused 1x1x1 downsample ------------------------------
    M2 = TD * H
    # Downsample (block-diagonal 1x1x1 conv, BNd scale folded) initializes acc2.
    acc2 = jnp.dot(xc_ref[...].reshape(M2, WCi), wd_ref[...],
                   preferred_element_type=jnp.float32)
    for k in range(9):
        dz, dh = divmod(k, 3)
        a = yp_ref[dz:dz + TD, dh:dh + H, :].reshape(M2, WCo)
        acc2 = acc2 + jnp.dot(a, w2_ref[k], preferred_element_type=jnp.float32)

    # ---- lane-dense epilogue: merged biases + final ReLU ----------------------
    out_ref[...] = jnp.maximum(acc2 + bout_ref[...], 0.0).astype(out_ref.dtype)


def _band_conv_weights(w, scale, W):
    """w: (27, Ci, Co) in (dz, dh, dw) kernel-major order; scale: (1, Co).

    Returns (9, W*Ci, W*Co): per (dz, dh) a banded matrix that folds the 3 dw
    taps and the SAME zero-padding along W (out-of-range taps simply omitted).
    """
    w = np.asarray(w, np.float32) * np.asarray(scale, np.float32).reshape(1, 1, -1)
    Ci, Co = w.shape[1], w.shape[2]
    w = w.reshape(3, 3, 3, Ci, Co)
    out = np.zeros((3, 3, W * Ci, W * Co), np.float32)
    for wo in range(W):
        for dw in range(3):
            wi = wo + dw - 1
            if 0 <= wi < W:
                out[:, :, wi * Ci:(wi + 1) * Ci, wo * Co:(wo + 1) * Co] = w[:, :, dw]
    return out.reshape(9, W * Ci, W * Co)


def _blockdiag_weights(wd, scale, W):
    """wd: (Ci, Co) 1x1x1 conv; scale: (1, Co). Returns (W*Ci, W*Co) block-diag."""
    wd = np.asarray(wd, np.float32) * np.asarray(scale, np.float32).reshape(1, -1)
    Ci, Co = wd.shape
    out = np.zeros((W * Ci, W * Co), np.float32)
    for wo in range(W):
        out[wo * Ci:(wo + 1) * Ci, wo * Co:(wo + 1) * Co] = wd
    return out


def residual_block(x, params, *, td=None, compute_dtype=jnp.float32):
    """x: (N, D, H, W, Cin) float32.  Returns (N, D, H, W, Cout) float32.

    compute_dtype=jnp.bfloat16 halves HBM/VMEM traffic on v6e/v7x (matmuls
    still accumulate in f32); default stays f32 for bit-tight validation.
    """
    N, D, H, W, Cin = x.shape
    Cout = params["w1"].shape[-1]

    if td is None:
        # One slab per sample for small volumes; otherwise the largest even
        # divisor of D <= 16 (keeps the 4-row halo overhead <= 25% of reads).
        td = D if D <= 16 else max(t for t in (16, 8, 4, 2) if D % t == 0)
    assert td >= 2 and td % 2 == 0 and D % td == 0 and D % 2 == 0
    nD = D // td
    half = td // 2

    # Host-side one-time weight transforms: BN scales folded, dw taps + W
    # zero-padding folded into banded matrices, biases tiled lane-dense.
    w1b = jnp.asarray(_band_conv_weights(params["w1"], params["s1"], W), compute_dtype)
    w2b = jnp.asarray(_band_conv_weights(params["w2"], params["s2"], W), compute_dtype)
    wdb = jnp.asarray(_blockdiag_weights(params["wd"], params["sd"], W), compute_dtype)
    b1k = jnp.tile(params["b1"].astype(jnp.float32), (1, W))            # (1, W*Cout)
    boutk = jnp.tile((params["b2"] + params["bd"]).astype(jnp.float32), (1, W))

    xc = x.reshape(N, D, H, W * Cin).astype(compute_dtype)              # lane-dense

    kernel = functools.partial(residual_block_kernel,
                               TD=td, H=H, W=W, Cin=Cin, Cout=Cout)

    x_curr_spec = pl.BlockSpec((None, td, H, W * Cin),
                               lambda n, d: (n, d, 0, 0))
    x_prev_spec = pl.BlockSpec(
        (None, 2, H, W * Cin),
        lambda n, d: (n, jnp.maximum(d * half - 1, 0), 0, 0))
    x_next_spec = pl.BlockSpec(
        (None, 2, H, W * Cin),
        lambda n, d: (n, jnp.minimum((d + 1) * half, D // 2 - 1), 0, 0))

    w1_spec = pl.BlockSpec((9, W * Cin, W * Cout), lambda n, d: (0, 0, 0))
    b1_spec = pl.BlockSpec((1, W * Cout), lambda n, d: (0, 0))
    w2_spec = pl.BlockSpec((9, W * Cout, W * Cout), lambda n, d: (0, 0, 0))
    wd_spec = pl.BlockSpec((W * Cin, W * Cout), lambda n, d: (0, 0))
    bout_spec = pl.BlockSpec((1, W * Cout), lambda n, d: (0, 0))

    out_spec = pl.BlockSpec((None, td * H, W * Cout), lambda n, d: (n, d, 0))

    # Generation-aware VMEM budget: ~3/4 of this chip's VMEM, capped — leaves
    # headroom on v7x (64 MiB) while letting v5e/v6e (128 MiB) go bigger.
    try:
        vmem_cap = pltpu.get_tpu_info().vmem_capacity_bytes
    except Exception:
        vmem_cap = 64 * 1024 * 1024
    vmem_limit = int(min(vmem_cap * 3 // 4, 100 * 1024 * 1024))

    out2d = pl.pallas_call(
        kernel,
        grid=(N, nD),
        in_specs=[x_curr_spec, x_prev_spec, x_next_spec,
                  w1_spec, b1_spec, w2_spec, wd_spec, bout_spec],
        out_specs=out_spec,
        out_shape=jax.ShapeDtypeStruct((N, D * H, W * Cout), jnp.float32),
        scratch_shapes=[
            pltpu.VMEM((td + 4, H + 2, W * Cin), compute_dtype),
            pltpu.VMEM((td + 2, H + 2, W * Cout), compute_dtype),
        ],
        compiler_params=pltpu.CompilerParams(
            dimension_semantics=("parallel", "parallel"),
            vmem_limit_bytes=vmem_limit),
    )(xc, xc, xc, w1b, b1k, w2b, wdb, boutk)

    return out2d.reshape(N, D, H, W, Cout)


def _folded_bn(kg, kb, km, kv, c, eps=1e-5):
    gamma = 1.0 + 0.1 * jax.random.normal(kg, (c,), jnp.float32)
    beta = 0.1 * jax.random.normal(kb, (c,), jnp.float32)
    mean = 0.1 * jax.random.normal(km, (c,), jnp.float32)
    var = 1.0 + 0.1 * jnp.abs(jax.random.normal(kv, (c,), jnp.float32))
    scale = gamma / jnp.sqrt(var + eps)
    bias = beta - mean * scale
    return scale.reshape(1, c), bias.reshape(1, c)


def init_params(key, cin, cout):
    ks = jax.random.split(key, 15)
    w1 = 0.1 * jax.random.normal(ks[0], (27, cin, cout), jnp.float32)
    w2 = 0.1 * jax.random.normal(ks[1], (27, cout, cout), jnp.float32)
    wd = 0.1 * jax.random.normal(ks[2], (cin, cout), jnp.float32)
    s1, b1 = _folded_bn(ks[3], ks[4], ks[5], ks[6], cout)
    s2, b2 = _folded_bn(ks[7], ks[8], ks[9], ks[10], cout)
    sd, bd = _folded_bn(ks[11], ks[12], ks[13], ks[14], cout)
    return dict(w1=w1, s1=s1, b1=b1, w2=w2, s2=s2, b2=b2, wd=wd, sd=sd, bd=bd)


def reference_forward(x, params):
    """Pure-JAX reference (dense NDHWC convs, eval-mode BN, unfolded weights)."""
    cin = x.shape[-1]
    cout = params["w1"].shape[-1]
    dn = ("NDHWC", "DHWIO", "NDHWC")
    hi = lax.Precision.HIGHEST

    w1 = params["w1"].reshape(3, 3, 3, cin, cout)
    y = lax.conv_general_dilated(x, w1, (1, 1, 1), "SAME",
                                 dimension_numbers=dn, precision=hi)
    y = jnp.maximum(y * params["s1"] + params["b1"], 0.0)

    w2 = params["w2"].reshape(3, 3, 3, cout, cout)
    y = lax.conv_general_dilated(y, w2, (1, 1, 1), "SAME",
                                 dimension_numbers=dn, precision=hi)
    y = y * params["s2"] + params["b2"]

    d = jnp.einsum("ndhwc,co->ndhwo", x, params["wd"], precision=hi)
    d = d * params["sd"] + params["bd"]

    return jnp.maximum(y + d, 0.0)


if __name__ == "__main__":
    N, D, H, W = 2, 8, 8, 8
    Cin, Cout = 8, 16            # inc != outc -> downsample branch is exercised

    key = jax.random.PRNGKey(0)
    kx, kp = jax.random.split(key)
    x = jax.random.normal(kx, (N, D, H, W, Cin), jnp.float32)
    params = init_params(kp, Cin, Cout)

    ref = jax.block_until_ready(reference_forward(x, params))

    # Default: one D-slab per sample (td == D) for the toy 8^3 problem.
    out = jax.block_until_ready(residual_block(x, params))
    np.testing.assert_allclose(np.asarray(out), np.asarray(ref),
                               rtol=2e-3, atol=2e-3)

    # Also exercise the multi-slab / D-halo path.
    out4 = jax.block_until_ready(residual_block(x, params, td=4))
    np.testing.assert_allclose(np.asarray(out4), np.asarray(ref),
                               rtol=2e-3, atol=2e-3)

    print("KERNEL_OK")
</pallas_src>

<mosaic_0001>
module attributes {stable_mosaic.version = 11 : i64} {
  func.func @residual_block_kernel(%arg0: i32, %arg1: i32, %arg2: memref<1x8x8x64xf32, #tpu.memory_space<vmem>>, %arg3: memref<1x2x8x64xf32, #tpu.memory_space<vmem>>, %arg4: memref<1x2x8x64xf32, #tpu.memory_space<vmem>>, %arg5: memref<9x64x128xf32, #tpu.memory_space<vmem>>, %arg6: memref<1x128xf32, #tpu.memory_space<vmem>>, %arg7: memref<9x128x128xf32, #tpu.memory_space<vmem>>, %arg8: memref<64x128xf32, #tpu.memory_space<vmem>>, %arg9: memref<1x128xf32, #tpu.memory_space<vmem>>, %arg10: memref<1x64x128xf32, #tpu.memory_space<vmem>>, %arg11: memref<12x10x64xf32, #tpu.memory_space<vmem>>, %arg12: memref<10x10x128xf32, #tpu.memory_space<vmem>>) attributes {dimension_semantics = [#tpu.dimension_semantics<parallel>, #tpu.dimension_semantics<parallel>], iteration_bounds = array<i64: 2, 1>, scalar_prefetch = 0 : i64, scratch_operands = 2 : i64, tpu.core_type = #tpu.core_type<tc>, window_params = [{transform_indices = @transform_0, window_bounds = array<i64: 1, 8, 8, 64>}, {transform_indices = @transform_1, window_bounds = array<i64: 1, 2, 8, 64>}, {transform_indices = @transform_2, window_bounds = array<i64: 1, 2, 8, 64>}, {pipeline_mode = #tpu.pipeline_mode<synchronous>, transform_indices = @transform_3, window_bounds = array<i64: 9, 64, 128>}, {pipeline_mode = #tpu.pipeline_mode<synchronous>, transform_indices = @transform_4, window_bounds = array<i64: 1, 128>}, {pipeline_mode = #tpu.pipeline_mode<synchronous>, transform_indices = @transform_5, window_bounds = array<i64: 9, 128, 128>}, {pipeline_mode = #tpu.pipeline_mode<synchronous>, transform_indices = @transform_6, window_bounds = array<i64: 64, 128>}, {pipeline_mode = #tpu.pipeline_mode<synchronous>, transform_indices = @transform_7, window_bounds = array<i64: 1, 128>}, {transform_indices = @transform_8, window_bounds = array<i64: 1, 64, 128>}]} {
    %cst = arith.constant 0.000000e+00 : f32
    %0 = vector.broadcast %cst : f32 to vector<12x1x64xf32>
    %c0 = arith.constant 0 : index
    %c0_0 = arith.constant 0 : index
    %c0_1 = arith.constant 0 : index
    %1 = vector.load %arg11[%c0, %c0_0, %c0_1] : memref<12x10x64xf32, #tpu.memory_space<vmem>>, vector<12x1x64xf32>
    tpu.vector_store %arg11[%c0, %c0_0, %c0_1], %0 {strides = array<i32>} : memref<12x10x64xf32, #tpu.memory_space<vmem>>, vector<12x1x64xf32>,
    %cst_2 = arith.constant 0.000000e+00 : f32
    %2 = vector.broadcast %cst_2 : f32 to vector<12x1x64xf32>
    %c0_3 = arith.constant 0 : index
    %c9 = arith.constant 9 : index
    %c0_4 = arith.constant 0 : index
    %3 = vector.load %arg11[%c0_3, %c9, %c0_4] : memref<12x10x64xf32, #tpu.memory_space<vmem>>, vector<12x1x64xf32>
    tpu.vector_store %arg11[%c0_3, %c9, %c0_4], %2 {strides = array<i32>} : memref<12x10x64xf32, #tpu.memory_space<vmem>>, vector<12x1x64xf32>,
    %c0_5 = arith.constant 0 : index
    %c0_6 = arith.constant 0 : index
    %c0_7 = arith.constant 0 : index
    %c0_8 = arith.constant 0 : index
    %4 = vector.load %arg2[%c0_5, %c0_6, %c0_7, %c0_8] : memref<1x8x8x64xf32, #tpu.memory_space<vmem>>, vector<1x8x8x64xf32>
    %5 = vector.shape_cast %4 : vector<1x8x8x64xf32> to vector<8x8x64xf32>
    %c2 = arith.constant 2 : index
    %c1 = arith.constant 1 : index
    %c0_9 = arith.constant 0 : index
    %6 = vector.load %arg11[%c2, %c1, %c0_9] : memref<12x10x64xf32, #tpu.memory_space<vmem>>, vector<8x8x64xf32>
    tpu.vector_store %arg11[%c2, %c1, %c0_9], %5 {strides = array<i32>} : memref<12x10x64xf32, #tpu.memory_space<vmem>>, vector<8x8x64xf32>,
    %c0_i32 = arith.constant 0 : i32
    %7 = arith.cmpi sgt, %arg1, %c0_i32 : i32
    %8 = arith.extui %7 : i1 to i32
    %c0_i32_10 = arith.constant 0 : i32
    %9 = arith.cmpi ne, %8, %c0_i32_10 : i32
    scf.if %9 {
      %c0_168 = arith.constant 0 : index
      %c0_169 = arith.constant 0 : index
      %c0_170 = arith.constant 0 : index
      %c0_171 = arith.constant 0 : index
      %156 = vector.load %arg3[%c0_168, %c0_169, %c0_170, %c0_171] : memref<1x2x8x64xf32, #tpu.memory_space<vmem>>, vector<1x2x8x64xf32>
      %157 = vector.shape_cast %156 : vector<1x2x8x64xf32> to vector<2x8x64xf32>
      %c0_172 = arith.constant 0 : index
      %c1_173 = arith.constant 1 : index
      %c0_174 = arith.constant 0 : index
      %158 = vector.load %arg11[%c0_172, %c1_173, %c0_174] : memref<12x10x64xf32, #tpu.memory_space<vmem>>, vector<2x8x64xf32>
      tpu.vector_store %arg11[%c0_172, %c1_173, %c0_174], %157 {strides = array<i32>} : memref<12x10x64xf32, #tpu.memory_space<vmem>>, vector<2x8x64xf32>,
    } else {
    }
    %c0_i32_11 = arith.constant 0 : i32
    %10 = arith.cmpi eq, %arg1, %c0_i32_11 : i32
    %11 = arith.extui %10 : i1 to i32
    %c0_i32_12 = arith.constant 0 : i32
    %12 = arith.cmpi ne, %11, %c0_i32_12 : i32
    scf.if %12 {
      %cst_168 = arith.constant 0.000000e+00 : f32
      %156 = vector.broadcast %cst_168 : f32 to vector<2x8x64xf32>
      %c0_169 = arith.constant 0 : index
      %c1_170 = arith.constant 1 : index
      %c0_171 = arith.constant 0 : index
      %157 = vector.load %arg11[%c0_169, %c1_170, %c0_171] : memref<12x10x64xf32, #tpu.memory_space<vmem>>, vector<2x8x64xf32>
      tpu.vector_store %arg11[%c0_169, %c1_170, %c0_171], %156 {strides = array<i32>} : memref<12x10x64xf32, #tpu.memory_space<vmem>>, vector<2x8x64xf32>,
    } else {
    }
    %c0_i32_13 = arith.constant 0 : i32
    %13 = arith.cmpi slt, %arg1, %c0_i32_13 : i32
    %14 = arith.extui %13 : i1 to i32
    %c0_i32_14 = arith.constant 0 : i32
    %15 = arith.cmpi ne, %14, %c0_i32_14 : i32
    scf.if %15 {
      %c0_168 = arith.constant 0 : index
      %c0_169 = arith.constant 0 : index
      %c0_170 = arith.constant 0 : index
      %c0_171 = arith.constant 0 : index
      %156 = vector.load %arg4[%c0_168, %c0_169, %c0_170, %c0_171] : memref<1x2x8x64xf32, #tpu.memory_space<vmem>>, vector<1x2x8x64xf32>
      %157 = vector.shape_cast %156 : vector<1x2x8x64xf32> to vector<2x8x64xf32>
      %c10 = arith.constant 10 : index
      %c1_172 = arith.constant 1 : index
      %c0_173 = arith.constant 0 : index
      %158 = vector.load %arg11[%c10, %c1_172, %c0_173] : memref<12x10x64xf32, #tpu.memory_space<vmem>>, vector<2x8x64xf32>
      tpu.vector_store %arg11[%c10, %c1_172, %c0_173], %157 {strides = array<i32>} : memref<12x10x64xf32, #tpu.memory_space<vmem>>, vector<2x8x64xf32>,
    } else {
    }
    %c0_i32_15 = arith.constant 0 : i32
    %16 = arith.cmpi eq, %arg1, %c0_i32_15 : i32
    %17 = arith.extui %16 : i1 to i32
    %c0_i32_16 = arith.constant 0 : i32
    %18 = arith.cmpi ne, %17, %c0_i32_16 : i32
    scf.if %18 {
      %cst_168 = arith.constant 0.000000e+00 : f32
      %156 = vector.broadcast %cst_168 : f32 to vector<2x8x64xf32>
      %c10 = arith.constant 10 : index
      %c1_169 = arith.constant 1 : index
      %c0_170 = arith.constant 0 : index
      %157 = vector.load %arg11[%c10, %c1_169, %c0_170] : memref<12x10x64xf32, #tpu.memory_space<vmem>>, vector<2x8x64xf32>
      tpu.vector_store %arg11[%c10, %c1_169, %c0_170], %156 {strides = array<i32>} : memref<12x10x64xf32, #tpu.memory_space<vmem>>, vector<2x8x64xf32>,
    } else {
    }
    %c0_17 = arith.constant 0 : index
    %c0_18 = arith.constant 0 : index
    %c0_19 = arith.constant 0 : index
    %19 = vector.load %arg11[%c0_17, %c0_18, %c0_19] : memref<12x10x64xf32, #tpu.memory_space<vmem>>, vector<10x8x64xf32>
    %20 = vector.shape_cast %19 : vector<10x8x64xf32> to vector<80x64xf32>
    %c0_20 = arith.constant 0 : index
    %c0_21 = arith.constant 0 : index
    %c0_22 = arith.constant 0 : index
    %21 = vector.load %arg5[%c0_20, %c0_21, %c0_22] : memref<9x64x128xf32, #tpu.memory_space<vmem>>, vector<1x64x128xf32>
    %22 = vector.shape_cast %21 : vector<1x64x128xf32> to vector<64x128xf32>
    %cst_23 = arith.constant dense<0.000000e+00> : vector<80x128xf32>
    %23 = tpu.matmul %20, %22, %cst_23 {dimension_numbers = #tpu.dot_dimension_numbers<[1], [0], [0], [1], [0, 0, 1, 1], [], []>} : vector<80x64xf32>, vector<64x128xf32>, vector<80x128xf32> -> vector<80x128xf32>
    %c0_24 = arith.constant 0 : index
    %c1_25 = arith.constant 1 : index
    %c0_26 = arith.constant 0 : index
    %24 = vector.load %arg11[%c0_24, %c1_25, %c0_26] : memref<12x10x64xf32, #tpu.memory_space<vmem>>, vector<10x8x64xf32>
    %25 = vector.shape_cast %24 : vector<10x8x64xf32> to vector<80x64xf32>
    %c1_27 = arith.constant 1 : index
    %c0_28 = arith.constant 0 : index
    %c0_29 = arith.constant 0 : index
    %26 = vector.load %arg5[%c1_27, %c0_28, %c0_29] : memref<9x64x128xf32, #tpu.memory_space<vmem>>, vector<1x64x128xf32>
    %27 = vector.shape_cast %26 : vector<1x64x128xf32> to vector<64x128xf32>
    %cst_30 = arith.constant dense<0.000000e+00> : vector<80x128xf32>
    %28 = tpu.matmul %25, %27, %cst_30 {dimension_numbers = #tpu.dot_dimension_numbers<[1], [0], [0], [1], [0, 0, 1, 1], [], []>} : vector<80x64xf32>, vector<64x128xf32>, vector<80x128xf32> -> vector<80x128xf32>
    %29 = arith.addf %23, %28 : vector<80x128xf32>
    %c0_31 = arith.constant 0 : index
    %c2_32 = arith.constant 2 : index
    %c0_33 = arith.constant 0 : index
    %30 = vector.load %arg11[%c0_31, %c2_32, %c0_33] : memref<12x10x64xf32, #tpu.memory_space<vmem>>, vector<10x8x64xf32>
    %31 = vector.shape_cast %30 : vector<10x8x64xf32> to vector<80x64xf32>
    %c2_34 = arith.constant 2 : index
    %c0_35 = arith.constant 0 : index
    %c0_36 = arith.constant 0 : index
    %32 = vector.load %arg5[%c2_34, %c0_35, %c0_36] : memref<9x64x128xf32, #tpu.memory_space<vmem>>, vector<1x64x128xf32>
    %33 = vector.shape_cast %32 : vector<1x64x128xf32> to vector<64x128xf32>
    %cst_37 = arith.constant dense<0.000000e+00> : vector<80x128xf32>
    %34 = tpu.matmul %31, %33, %cst_37 {dimension_numbers = #tpu.dot_dimension_numbers<[1], [0], [0], [1], [0, 0, 1, 1], [], []>} : vector<80x64xf32>, vector<64x128xf32>, vector<80x128xf32> -> vector<80x128xf32>
    %35 = arith.addf %29, %34 : vector<80x128xf32>
    %c1_38 = arith.constant 1 : index
    %c0_39 = arith.constant 0 : index
    %c0_40 = arith.constant 0 : index
    %36 = vector.load %arg11[%c1_38, %c0_39, %c0_40] : memref<12x10x64xf32, #tpu.memory_space<vmem>>, vector<10x8x64xf32>
    %37 = vector.shape_cast %36 : vector<10x8x64xf32> to vector<80x64xf32>
    %c3 = arith.constant 3 : index
    %c0_41 = arith.constant 0 : index
    %c0_42 = arith.constant 0 : index
    %38 = vector.load %arg5[%c3, %c0_41, %c0_42] : memref<9x64x128xf32, #tpu.memory_space<vmem>>, vector<1x64x128xf32>
    %39 = vector.shape_cast %38 : vector<1x64x128xf32> to vector<64x128xf32>
    %cst_43 = arith.constant dense<0.000000e+00> : vector<80x128xf32>
    %40 = tpu.matmul %37, %39, %cst_43 {dimension_numbers = #tpu.dot_dimension_numbers<[1], [0], [0], [1], [0, 0, 1, 1], [], []>} : vector<80x64xf32>, vector<64x128xf32>, vector<80x128xf32> -> vector<80x128xf32>
    %41 = arith.addf %35, %40 : vector<80x128xf32>
    %c1_44 = arith.constant 1 : index
    %c1_45 = arith.constant 1 : index
    %c0_46 = arith.constant 0 : index
    %42 = vector.load %arg11[%c1_44, %c1_45, %c0_46] : memref<12x10x64xf32, #tpu.memory_space<vmem>>, vector<10x8x64xf32>
    %43 = vector.shape_cast %42 : vector<10x8x64xf32> to vector<80x64xf32>
    %c4 = arith.constant 4 : index
    %c0_47 = arith.constant 0 : index
    %c0_48 = arith.constant 0 : index
    %44 = vector.load %arg5[%c4, %c0_47, %c0_48] : memref<9x64x128xf32, #tpu.memory_space<vmem>>, vector<1x64x128xf32>
    %45 = vector.shape_cast %44 : vector<1x64x128xf32> to vector<64x128xf32>
    %cst_49 = arith.constant dense<0.000000e+00> : vector<80x128xf32>
    %46 = tpu.matmul %43, %45, %cst_49 {dimension_numbers = #tpu.dot_dimension_numbers<[1], [0], [0], [1], [0, 0, 1, 1], [], []>} : vector<80x64xf32>, vector<64x128xf32>, vector<80x128xf32> -> vector<80x128xf32>
    %47 = arith.addf %41, %46 : vector<80x128xf32>
    %c1_50 = arith.constant 1 : index
    %c2_51 = arith.constant 2 : index
    %c0_52 = arith.constant 0 : index
    %48 = vector.load %arg11[%c1_50, %c2_51, %c0_52] : memref<12x10x64xf32, #tpu.memory_space<vmem>>, vector<10x8x64xf32>
    %49 = vector.shape_cast %48 : vector<10x8x64xf32> to vector<80x64xf32>
    %c5 = arith.constant 5 : index
    %c0_53 = arith.constant 0 : index
    %c0_54 = arith.constant 0 : index
    %50 = vector.load %arg5[%c5, %c0_53, %c0_54] : memref<9x64x128xf32, #tpu.memory_space<vmem>>, vector<1x64x128xf32>
    %51 = vector.shape_cast %50 : vector<1x64x128xf32> to vector<64x128xf32>
    %cst_55 = arith.constant dense<0.000000e+00> : vector<80x128xf32>
    %52 = tpu.matmul %49, %51, %cst_55 {dimension_numbers = #tpu.dot_dimension_numbers<[1], [0], [0], [1], [0, 0, 1, 1], [], []>} : vector<80x64xf32>, vector<64x128xf32>, vector<80x128xf32> -> vector<80x128xf32>
    %53 = arith.addf %47, %52 : vector<80x128xf32>
    %c2_56 = arith.constant 2 : index
    %c0_57 = arith.constant 0 : index
    %c0_58 = arith.constant 0 : index
    %54 = vector.load %arg11[%c2_56, %c0_57, %c0_58] : memref<12x10x64xf32, #tpu.memory_space<vmem>>, vector<10x8x64xf32>
    %55 = vector.shape_cast %54 : vector<10x8x64xf32> to vector<80x64xf32>
    %c6 = arith.constant 6 : index
    %c0_59 = arith.constant 0 : index
    %c0_60 = arith.constant 0 : index
    %56 = vector.load %arg5[%c6, %c0_59, %c0_60] : memref<9x64x128xf32, #tpu.memory_space<vmem>>, vector<1x64x128xf32>
    %57 = vector.shape_cast %56 : vector<1x64x128xf32> to vector<64x128xf32>
    %cst_61 = arith.constant dense<0.000000e+00> : vector<80x128xf32>
    %58 = tpu.matmul %55, %57, %cst_61 {dimension_numbers = #tpu.dot_dimension_numbers<[1], [0], [0], [1], [0, 0, 1, 1], [], []>} : vector<80x64xf32>, vector<64x128xf32>, vector<80x128xf32> -> vector<80x128xf32>
    %59 = arith.addf %53, %58 : vector<80x128xf32>
    %c2_62 = arith.constant 2 : index
    %c1_63 = arith.constant 1 : index
    %c0_64 = arith.constant 0 : index
    %60 = vector.load %arg11[%c2_62, %c1_63, %c0_64] : memref<12x10x64xf32, #tpu.memory_space<vmem>>, vector<10x8x64xf32>
    %61 = vector.shape_cast %60 : vector<10x8x64xf32> to vector<80x64xf32>
    %c7 = arith.constant 7 : index
    %c0_65 = arith.constant 0 : index
    %c0_66 = arith.constant 0 : index
    %62 = vector.load %arg5[%c7, %c0_65, %c0_66] : memref<9x64x128xf32, #tpu.memory_space<vmem>>, vector<1x64x128xf32>
    %63 = vector.shape_cast %62 : vector<1x64x128xf32> to vector<64x128xf32>
    %cst_67 = arith.constant dense<0.000000e+00> : vector<80x128xf32>
    %64 = tpu.matmul %61, %63, %cst_67 {dimension_numbers = #tpu.dot_dimension_numbers<[1], [0], [0], [1], [0, 0, 1, 1], [], []>} : vector<80x64xf32>, vector<64x128xf32>, vector<80x128xf32> -> vector<80x128xf32>
    %65 = arith.addf %59, %64 : vector<80x128xf32>
    %c2_68 = arith.constant 2 : index
    %c2_69 = arith.constant 2 : index
    %c0_70 = arith.constant 0 : index
    %66 = vector.load %arg11[%c2_68, %c2_69, %c0_70] : memref<12x10x64xf32, #tpu.memory_space<vmem>>, vector<10x8x64xf32>
    %67 = vector.shape_cast %66 : vector<10x8x64xf32> to vector<80x64xf32>
    %c8 = arith.constant 8 : index
    %c0_71 = arith.constant 0 : index
    %c0_72 = arith.constant 0 : index
    %68 = vector.load %arg5[%c8, %c0_71, %c0_72] : memref<9x64x128xf32, #tpu.memory_space<vmem>>, vector<1x64x128xf32>
    %69 = vector.shape_cast %68 : vector<1x64x128xf32> to vector<64x128xf32>
    %cst_73 = arith.constant dense<0.000000e+00> : vector<80x128xf32>
    %70 = tpu.matmul %67, %69, %cst_73 {dimension_numbers = #tpu.dot_dimension_numbers<[1], [0], [0], [1], [0, 0, 1, 1], [], []>} : vector<80x64xf32>, vector<64x128xf32>, vector<80x128xf32> -> vector<80x128xf32>
    %71 = arith.addf %65, %70 : vector<80x128xf32>
    %c0_74 = arith.constant 0 : index
    %c0_75 = arith.constant 0 : index
    %72 = vector.load %arg6[%c0_74, %c0_75] : memref<1x128xf32, #tpu.memory_space<vmem>>, vector<1x128xf32>
    %73 = vector.broadcast %72 : vector<1x128xf32> to vector<80x128xf32>
    %74 = arith.addf %71, %73 : vector<80x128xf32>
    %cst_76 = arith.constant 0.000000e+00 : f32
    %75 = vector.broadcast %cst_76 : f32 to vector<80x128xf32>
    %76 = arith.maximumf %74, %75 : vector<80x128xf32>
    %cst_77 = arith.constant 0.000000e+00 : f32
    %77 = vector.broadcast %cst_77 : f32 to vector<10x1x128xf32>
    %c0_78 = arith.constant 0 : index
    %c0_79 = arith.constant 0 : index
    %c0_80 = arith.constant 0 : index
    %78 = vector.load %arg12[%c0_78, %c0_79, %c0_80] : memref<10x10x128xf32, #tpu.memory_space<vmem>>, vector<10x1x128xf32>
    tpu.vector_store %arg12[%c0_78, %c0_79, %c0_80], %77 {strides = array<i32>} : memref<10x10x128xf32, #tpu.memory_space<vmem>>, vector<10x1x128xf32>,
    %cst_81 = arith.constant 0.000000e+00 : f32
    %79 = vector.broadcast %cst_81 : f32 to vector<10x1x128xf32>
    %c0_82 = arith.constant 0 : index
    %c9_83 = arith.constant 9 : index
    %c0_84 = arith.constant 0 : index
    %80 = vector.load %arg12[%c0_82, %c9_83, %c0_84] : memref<10x10x128xf32, #tpu.memory_space<vmem>>, vector<10x1x128xf32>
    tpu.vector_store %arg12[%c0_82, %c9_83, %c0_84], %79 {strides = array<i32>} : memref<10x10x128xf32, #tpu.memory_space<vmem>>, vector<10x1x128xf32>,
    %81 = vector.shape_cast %76 : vector<80x128xf32> to vector<10x8x128xf32>
    %c0_85 = arith.constant 0 : index
    %c1_86 = arith.constant 1 : index
    %c0_87 = arith.constant 0 : index
    %82 = vector.load %arg12[%c0_85, %c1_86, %c0_87] : memref<10x10x128xf32, #tpu.memory_space<vmem>>, vector<10x8x128xf32>
    tpu.vector_store %arg12[%c0_85, %c1_86, %c0_87], %81 {strides = array<i32>} : memref<10x10x128xf32, #tpu.memory_space<vmem>>, vector<10x8x128xf32>,
    %c0_i32_88 = arith.constant 0 : i32
    %83 = arith.cmpi eq, %arg1, %c0_i32_88 : i32
    %84 = arith.extui %83 : i1 to i32
    %c0_i32_89 = arith.constant 0 : i32
    %85 = arith.cmpi ne, %84, %c0_i32_89 : i32
    scf.if %85 {
      %cst_168 = arith.constant 0.000000e+00 : f32
      %156 = vector.broadcast %cst_168 : f32 to vector<1x8x128xf32>
      %c0_169 = arith.constant 0 : index
      %c1_170 = arith.constant 1 : index
      %c0_171 = arith.constant 0 : index
      %157 = vector.load %arg12[%c0_169, %c1_170, %c0_171] : memref<10x10x128xf32, #tpu.memory_space<vmem>>, vector<1x8x128xf32>
      tpu.vector_store %arg12[%c0_169, %c1_170, %c0_171], %156 {strides = array<i32>} : memref<10x10x128xf32, #tpu.memory_space<vmem>>, vector<1x8x128xf32>,
    } else {
    }
    %c0_i32_90 = arith.constant 0 : i32
    %86 = arith.cmpi eq, %arg1, %c0_i32_90 : i32
    %87 = arith.extui %86 : i1 to i32
    %c0_i32_91 = arith.constant 0 : i32
    %88 = arith.cmpi ne, %87, %c0_i32_91 : i32
    scf.if %88 {
      %cst_168 = arith.constant 0.000000e+00 : f32
      %156 = vector.broadcast %cst_168 : f32 to vector<1x8x128xf32>
      %c9_169 = arith.constant 9 : index
      %c1_170 = arith.constant 1 : index
      %c0_171 = arith.constant 0 : index
      %157 = vector.load %arg12[%c9_169, %c1_170, %c0_171] : memref<10x10x128xf32, #tpu.memory_space<vmem>>, vector<1x8x128xf32>
      tpu.vector_store %arg12[%c9_169, %c1_170, %c0_171], %156 {strides = array<i32>} : memref<10x10x128xf32, #tpu.memory_space<vmem>>, vector<1x8x128xf32>,
    } else {
    }
    %c0_92 = arith.constant 0 : index
    %c0_93 = arith.constant 0 : index
    %c0_94 = arith.constant 0 : index
    %c0_95 = arith.constant 0 : index
    %89 = vector.load %arg2[%c0_92, %c0_93, %c0_94, %c0_95] : memref<1x8x8x64xf32, #tpu.memory_space<vmem>>, vector<1x8x8x64xf32>
    %90 = vector.shape_cast %89 : vector<1x8x8x64xf32> to vector<8x8x64xf32>
    %91 = vector.shape_cast %90 : vector<8x8x64xf32> to vector<64x64xf32>
    %c0_96 = arith.constant 0 : index
    %c0_97 = arith.constant 0 : index
    %92 = vector.load %arg8[%c0_96, %c0_97] : memref<64x128xf32, #tpu.memory_space<vmem>>, vector<64x128xf32>
    %cst_98 = arith.constant dense<0.000000e+00> : vector<64x128xf32>
    %93 = tpu.matmul %91, %92, %cst_98 {dimension_numbers = #tpu.dot_dimension_numbers<[1], [0], [0], [1], [0, 0, 1, 1], [], []>} : vector<64x64xf32>, vector<64x128xf32>, vector<64x128xf32> -> vector<64x128xf32>
    %c0_99 = arith.constant 0 : index
    %c0_100 = arith.constant 0 : index
    %c0_101 = arith.constant 0 : index
    %94 = vector.load %arg12[%c0_99, %c0_100, %c0_101] : memref<10x10x128xf32, #tpu.memory_space<vmem>>, vector<8x8x128xf32>
    %95 = vector.shape_cast %94 : vector<8x8x128xf32> to vector<64x128xf32>
    %c0_102 = arith.constant 0 : index
    %c0_103 = arith.constant 0 : index
    %c0_104 = arith.constant 0 : index
    %96 = vector.load %arg7[%c0_102, %c0_103, %c0_104] : memref<9x128x128xf32, #tpu.memory_space<vmem>>, vector<1x128x128xf32>
    %97 = vector.shape_cast %96 : vector<1x128x128xf32> to vector<128x128xf32>
    %cst_105 = arith.constant dense<0.000000e+00> : vector<64x128xf32>
    %98 = tpu.matmul %95, %97, %cst_105 {dimension_numbers = #tpu.dot_dimension_numbers<[1], [0], [0], [1], [0, 0, 1, 1], [], []>} : vector<64x128xf32>, vector<128x128xf32>, vector<64x128xf32> -> vector<64x128xf32>
    %99 = arith.addf %93, %98 : vector<64x128xf32>
    %c0_106 = arith.constant 0 : index
    %c1_107 = arith.constant 1 : index
    %c0_108 = arith.constant 0 : index
    %100 = vector.load %arg12[%c0_106, %c1_107, %c0_108] : memref<10x10x128xf32, #tpu.memory_space<vmem>>, vector<8x8x128xf32>
    %101 = vector.shape_cast %100 : vector<8x8x128xf32> to vector<64x128xf32>
    %c1_109 = arith.constant 1 : index
    %c0_110 = arith.constant 0 : index
    %c0_111 = arith.constant 0 : index
    %102 = vector.load %arg7[%c1_109, %c0_110, %c0_111] : memref<9x128x128xf32, #tpu.memory_space<vmem>>, vector<1x128x128xf32>
    %103 = vector.shape_cast %102 : vector<1x128x128xf32> to vector<128x128xf32>
    %cst_112 = arith.constant dense<0.000000e+00> : vector<64x128xf32>
    %104 = tpu.matmul %101, %103, %cst_112 {dimension_numbers = #tpu.dot_dimension_numbers<[1], [0], [0], [1], [0, 0, 1, 1], [], []>} : vector<64x128xf32>, vector<128x128xf32>, vector<64x128xf32> -> vector<64x128xf32>
    %105 = arith.addf %99, %104 : vector<64x128xf32>
    %c0_113 = arith.constant 0 : index
    %c2_114 = arith.constant 2 : index
    %c0_115 = arith.constant 0 : index
    %106 = vector.load %arg12[%c0_113, %c2_114, %c0_115] : memref<10x10x128xf32, #tpu.memory_space<vmem>>, vector<8x8x128xf32>
    %107 = vector.shape_cast %106 : vector<8x8x128xf32> to vector<64x128xf32>
    %c2_116 = arith.constant 2 : index
    %c0_117 = arith.constant 0 : index
    %c0_118 = arith.constant 0 : index
    %108 = vector.load %arg7[%c2_116, %c0_117, %c0_118] : memref<9x128x128xf32, #tpu.memory_space<vmem>>, vector<1x128x128xf32>
    %109 = vector.shape_cast %108 : vector<1x128x128xf32> to vector<128x128xf32>
    %cst_119 = arith.constant dense<0.000000e+00> : vector<64x128xf32>
    %110 = tpu.matmul %107, %109, %cst_119 {dimension_numbers = #tpu.dot_dimension_numbers<[1], [0], [0], [1], [0, 0, 1, 1], [], []>} : vector<64x128xf32>, vector<128x128xf32>, vector<64x128xf32> -> vector<64x128xf32>
    %111 = arith.addf %105, %110 : vector<64x128xf32>
    %c1_120 = arith.constant 1 : index
    %c0_121 = arith.constant 0 : index
    %c0_122 = arith.constant 0 : index
    %112 = vector.load %arg12[%c1_120, %c0_121, %c0_122] : memref<10x10x128xf32, #tpu.memory_space<vmem>>, vector<8x8x128xf32>
    %113 = vector.shape_cast %112 : vector<8x8x128xf32> to vector<64x128xf32>
    %c3_123 = arith.constant 3 : index
    %c0_124 = arith.constant 0 : index
    %c0_125 = arith.constant 0 : index
    %114 = vector.load %arg7[%c3_123, %c0_124, %c0_125] : memref<9x128x128xf32, #tpu.memory_space<vmem>>, vector<1x128x128xf32>
    %115 = vector.shape_cast %114 : vector<1x128x128xf32> to vector<128x128xf32>
    %cst_126 = arith.constant dense<0.000000e+00> : vector<64x128xf32>
    %116 = tpu.matmul %113, %115, %cst_126 {dimension_numbers = #tpu.dot_dimension_numbers<[1], [0], [0], [1], [0, 0, 1, 1], [], []>} : vector<64x128xf32>, vector<128x128xf32>, vector<64x128xf32> -> vector<64x128xf32>
    %117 = arith.addf %111, %116 : vector<64x128xf32>
    %c1_127 = arith.constant 1 : index
    %c1_128 = arith.constant 1 : index
    %c0_129 = arith.constant 0 : index
    %118 = vector.load %arg12[%c1_127, %c1_128, %c0_129] : memref<10x10x128xf32, #tpu.memory_space<vmem>>, vector<8x8x128xf32>
    %119 = vector.shape_cast %118 : vector<8x8x128xf32> to vector<64x128xf32>
    %c4_130 = arith.constant 4 : index
    %c0_131 = arith.constant 0 : index
    %c0_132 = arith.constant 0 : index
    %120 = vector.load %arg7[%c4_130, %c0_131, %c0_132] : memref<9x128x128xf32, #tpu.memory_space<vmem>>, vector<1x128x128xf32>
    %121 = vector.shape_cast %120 : vector<1x128x128xf32> to vector<128x128xf32>
    %cst_133 = arith.constant dense<0.000000e+00> : vector<64x128xf32>
    %122 = tpu.matmul %119, %121, %cst_133 {dimension_numbers = #tpu.dot_dimension_numbers<[1], [0], [0], [1], [0, 0, 1, 1], [], []>} : vector<64x128xf32>, vector<128x128xf32>, vector<64x128xf32> -> vector<64x128xf32>
    %123 = arith.addf %117, %122 : vector<64x128xf32>
    %c1_134 = arith.constant 1 : index
    %c2_135 = arith.constant 2 : index
    %c0_136 = arith.constant 0 : index
    %124 = vector.load %arg12[%c1_134, %c2_135, %c0_136] : memref<10x10x128xf32, #tpu.memory_space<vmem>>, vector<8x8x128xf32>
    %125 = vector.shape_cast %124 : vector<8x8x128xf32> to vector<64x128xf32>
    %c5_137 = arith.constant 5 : index
    %c0_138 = arith.constant 0 : index
    %c0_139 = arith.constant 0 : index
    %126 = vector.load %arg7[%c5_137, %c0_138, %c0_139] : memref<9x128x128xf32, #tpu.memory_space<vmem>>, vector<1x128x128xf32>
    %127 = vector.shape_cast %126 : vector<1x128x128xf32> to vector<128x128xf32>
    %cst_140 = arith.constant dense<0.000000e+00> : vector<64x128xf32>
    %128 = tpu.matmul %125, %127, %cst_140 {dimension_numbers = #tpu.dot_dimension_numbers<[1], [0], [0], [1], [0, 0, 1, 1], [], []>} : vector<64x128xf32>, vector<128x128xf32>, vector<64x128xf32> -> vector<64x128xf32>
    %129 = arith.addf %123, %128 : vector<64x128xf32>
    %c2_141 = arith.constant 2 : index
    %c0_142 = arith.constant 0 : index
    %c0_143 = arith.constant 0 : index
    %130 = vector.load %arg12[%c2_141, %c0_142, %c0_143] : memref<10x10x128xf32, #tpu.memory_space<vmem>>, vector<8x8x128xf32>
    %131 = vector.shape_cast %130 : vector<8x8x128xf32> to vector<64x128xf32>
    %c6_144 = arith.constant 6 : index
    %c0_145 = arith.constant 0 : index
    %c0_146 = arith.constant 0 : index
    %132 = vector.load %arg7[%c6_144, %c0_145, %c0_146] : memref<9x128x128xf32, #tpu.memory_space<vmem>>, vector<1x128x128xf32>
    %133 = vector.shape_cast %132 : vector<1x128x128xf32> to vector<128x128xf32>
    %cst_147 = arith.constant dense<0.000000e+00> : vector<64x128xf32>
    %134 = tpu.matmul %131, %133, %cst_147 {dimension_numbers = #tpu.dot_dimension_numbers<[1], [0], [0], [1], [0, 0, 1, 1], [], []>} : vector<64x128xf32>, vector<128x128xf32>, vector<64x128xf32> -> vector<64x128xf32>
    %135 = arith.addf %129, %134 : vector<64x128xf32>
    %c2_148 = arith.constant 2 : index
    %c1_149 = arith.constant 1 : index
    %c0_150 = arith.constant 0 : index
    %136 = vector.load %arg12[%c2_148, %c1_149, %c0_150] : memref<10x10x128xf32, #tpu.memory_space<vmem>>, vector<8x8x128xf32>
    %137 = vector.shape_cast %136 : vector<8x8x128xf32> to vector<64x128xf32>
    %c7_151 = arith.constant 7 : index
    %c0_152 = arith.constant 0 : index
    %c0_153 = arith.constant 0 : index
    %138 = vector.load %arg7[%c7_151, %c0_152, %c0_153] : memref<9x128x128xf32, #tpu.memory_space<vmem>>, vector<1x128x128xf32>
    %139 = vector.shape_cast %138 : vector<1x128x128xf32> to vector<128x128xf32>
    %cst_154 = arith.constant dense<0.000000e+00> : vector<64x128xf32>
    %140 = tpu.matmul %137, %139, %cst_154 {dimension_numbers = #tpu.dot_dimension_numbers<[1], [0], [0], [1], [0, 0, 1, 1], [], []>} : vector<64x128xf32>, vector<128x128xf32>, vector<64x128xf32> -> vector<64x128xf32>
    %141 = arith.addf %135, %140 : vector<64x128xf32>
    %c2_155 = arith.constant 2 : index
    %c2_156 = arith.constant 2 : index
    %c0_157 = arith.constant 0 : index
    %142 = vector.load %arg12[%c2_155, %c2_156, %c0_157] : memref<10x10x128xf32, #tpu.memory_space<vmem>>, vector<8x8x128xf32>
    %143 = vector.shape_cast %142 : vector<8x8x128xf32> to vector<64x128xf32>
    %c8_158 = arith.constant 8 : index
    %c0_159 = arith.constant 0 : index
    %c0_160 = arith.constant 0 : index
    %144 = vector.load %arg7[%c8_158, %c0_159, %c0_160] : memref<9x128x128xf32, #tpu.memory_space<vmem>>, vector<1x128x128xf32>
    %145 = vector.shape_cast %144 : vector<1x128x128xf32> to vector<128x128xf32>
    %cst_161 = arith.constant dense<0.000000e+00> : vector<64x128xf32>
    %146 = tpu.matmul %143, %145, %cst_161 {dimension_numbers = #tpu.dot_dimension_numbers<[1], [0], [0], [1], [0, 0, 1, 1], [], []>} : vector<64x128xf32>, vector<128x128xf32>, vector<64x128xf32> -> vector<64x128xf32>
    %147 = arith.addf %141, %146 : vector<64x128xf32>
    %c0_162 = arith.constant 0 : index
    %c0_163 = arith.constant 0 : index
    %148 = vector.load %arg9[%c0_162, %c0_163] : memref<1x128xf32, #tpu.memory_space<vmem>>, vector<1x128xf32>
    %149 = vector.broadcast %148 : vector<1x128xf32> to vector<64x128xf32>
    %150 = arith.addf %147, %149 : vector<64x128xf32>
    %cst_164 = arith.constant 0.000000e+00 : f32
    %151 = vector.broadcast %cst_164 : f32 to vector<64x128xf32>
    %152 = arith.maximumf %150, %151 : vector<64x128xf32>
    %c0_165 = arith.constant 0 : index
    %c0_166 = arith.constant 0 : index
    %c0_167 = arith.constant 0 : index
    %153 = vector.load %arg10[%c0_165, %c0_166, %c0_167] : memref<1x64x128xf32, #tpu.memory_space<vmem>>, vector<1x64x128xf32>
    %154 = vector.shape_cast %153 : vector<1x64x128xf32> to vector<64x128xf32>
    %155 = vector.shape_cast %152 : vector<64x128xf32> to vector<1x64x128xf32>
    tpu.vector_store %arg10[%c0_165, %c0_166, %c0_167], %155 {strides = array<i32>} : memref<1x64x128xf32, #tpu.memory_space<vmem>>, vector<1x64x128xf32>,
    return
  }
  func.func @transform_0(%arg0: i32, %arg1: i32) -> (i32, i32, i32, i32) {
    %c0_i32 = arith.constant 0 : i32
    %c0_i32_0 = arith.constant 0 : i32
    %c0_i32_1 = arith.constant 0 : i32
    return %arg0, %arg1, %c0_i32, %c0_i32_0 : i32, i32, i32, i32
  }
  func.func @transform_1(%arg0: i32, %arg1: i32) -> (i32, i32, i32, i32) {
    %c4_i32 = arith.constant 4 : i32
    %0 = arith.muli %arg1, %c4_i32 : i32
    %c1_i32 = arith.constant 1 : i32
    %1 = arith.subi %0, %c1_i32 : i32
    %c0_i32 = arith.constant 0 : i32
    %2 = arith.maxsi %1, %c0_i32 : i32
    %c0_i32_0 = arith.constant 0 : i32
    %c0_i32_1 = arith.constant 0 : i32
    %c0_i32_2 = arith.constant 0 : i32
    return %arg0, %2, %c0_i32_0, %c0_i32_1 : i32, i32, i32, i32
  }
  func.func @transform_2(%arg0: i32, %arg1: i32) -> (i32, i32, i32, i32) {
    %c1_i32 = arith.constant 1 : i32
    %0 = arith.addi %arg1, %c1_i32 : i32
    %c4_i32 = arith.constant 4 : i32
    %1 = arith.muli %0, %c4_i32 : i32
    %c3_i32 = arith.constant 3 : i32
    %2 = arith.minsi %1, %c3_i32 : i32
    %c0_i32 = arith.constant 0 : i32
    %c0_i32_0 = arith.constant 0 : i32
    %c0_i32_1 = arith.constant 0 : i32
    return %arg0, %2, %c0_i32, %c0_i32_0 : i32, i32, i32, i32
  }
  func.func @transform_3(%arg0: i32, %arg1: i32) -> (i32, i32, i32) {
    %c0_i32 = arith.constant 0 : i32
    %c0_i32_0 = arith.constant 0 : i32
    %c0_i32_1 = arith.constant 0 : i32
    %c0_i32_2 = arith.constant 0 : i32
    return %c0_i32, %c0_i32_0, %c0_i32_1 : i32, i32, i32
  }
  func.func @transform_4(%arg0: i32, %arg1: i32) -> (i32, i32) {
    %c0_i32 = arith.constant 0 : i32
    %c0_i32_0 = arith.constant 0 : i32
    %c0_i32_1 = arith.constant 0 : i32
    return %c0_i32, %c0_i32_0 : i32, i32
  }
  func.func @transform_5(%arg0: i32, %arg1: i32) -> (i32, i32, i32) {
    %c0_i32 = arith.constant 0 : i32
    %c0_i32_0 = arith.constant 0 : i32
    %c0_i32_1 = arith.constant 0 : i32
    %c0_i32_2 = arith.constant 0 : i32
    return %c0_i32, %c0_i32_0, %c0_i32_1 : i32, i32, i32
  }
  func.func @transform_6(%arg0: i32, %arg1: i32) -> (i32, i32) {
    %c0_i32 = arith.constant 0 : i32
    %c0_i32_0 = arith.constant 0 : i32
    %c0_i32_1 = arith.constant 0 : i32
    return %c0_i32, %c0_i32_0 : i32, i32
  }
  func.func @transform_7(%arg0: i32, %arg1: i32) -> (i32, i32) {
    %c0_i32 = arith.constant 0 : i32
    %c0_i32_0 = arith.constant 0 : i32
    %c0_i32_1 = arith.constant 0 : i32
    return %c0_i32, %c0_i32_0 : i32, i32
  }
  func.func @transform_8(%arg0: i32, %arg1: i32) -> (i32, i32, i32) {
    %c0_i32 = arith.constant 0 : i32
    %c0_i32_0 = arith.constant 0 : i32
    return %arg0, %arg1, %c0_i32 : i32, i32, i32
  }
}

</mosaic_0001>

<llo_original>
// kernel: tpu_custom_call.1
$region0: #{tpu_custom_call.1}
  #allocation0 [shape = 'u32[]', space=smem, size = 0x4, offset = 0x4, fixed_abs, tag = 'smem constant byte address 0x4 - core index']
  #allocation1 [shape = 'u32[144,128]{1,0:T(1,128)}', space=vmem, size = 0x12000, scoped, tag = 'internal scratch']
  #allocation2 [shape = 'f32[12,10,64]{2,1,0:T(8,128)}', space=vmem, size = 0x18000, scoped, tag = 'scratch operand']
  #allocation3 [shape = 'f32[10,10,128]{2,1,0:T(8,128)}', space=vmem, size = 0x14000, scoped, tag = 'scratch operand']
  %s0 = inlined_call_operand.hbm [shape: f32[2,8,8,64], index: 0, kind: input, shape index: {}]
  %s1 = inlined_call_operand.hbm [shape: f32[2,8,8,64], index: 1, kind: input, shape index: {}]
  %s2 = inlined_call_operand.hbm [shape: f32[2,8,8,64], index: 2, kind: input, shape index: {}]
  %s3 = inlined_call_operand.hbm [shape: f32[9,64,128], index: 3, kind: input, shape index: {}]
  %s4 = inlined_call_operand.vmem [shape: f32[1,128], index: 4, kind: input, shape index: {}]
  %s5 = inlined_call_operand.hbm [shape: f32[9,128,128], index: 5, kind: input, shape index: {}]
  %s6 = inlined_call_operand.hbm [shape: f32[64,128], index: 6, kind: input, shape index: {}]
  %s7 = inlined_call_operand.vmem [shape: f32[1,128], index: 7, kind: input, shape index: {}]
  %s8 = inlined_call_operand.hbm [shape: f32[2,64,128], index: 8, kind: output, shape index: {}]
  %s9 = sld [smem:[#allocation0]]
  $region109: #{tpu_custom_call.1} parent=0
    _
  %s11 = ssub.s32 1, %s9
  %s12 = scalar_select 0, %s11, %s9
  $region1: #{tpu_custom_call.1} parent=0
    #allocation4 [shape = 'u8[65536]{0}', space=vmem, size = 0x10000, scoped, tag = 'input window, operand 0']
    #allocation5 [shape = 's32[2]{0}', space=sflag, size = 0x8, scoped, tag = 'scoped memory for tpu_custom_call.1']
    #allocation6 [shape = 's32[2]{0}', space=sflag, size = 0x8, scoped, tag = 'scoped memory for tpu_custom_call.1']
    #allocation7 [shape = 'u8[16384]{0}', space=vmem, size = 0x4000, scoped, tag = 'input window, operand 1']
    #allocation8 [shape = 's32[2]{0}', space=sflag, size = 0x8, scoped, tag = 'scoped memory for tpu_custom_call.1']
    #allocation9 [shape = 'u8[16384]{0}', space=vmem, size = 0x4000, scoped, tag = 'input window, operand 2']
    #allocation10 [shape = 'u8[294912]{0}', space=vmem, size = 0x48000, scoped, tag = 'input window, operand 3, single buffered']
    #allocation11 [shape = 's32[1]{0}', space=sflag, size = 0x4, scoped, tag = 'scoped memory for tpu_custom_call.1']
    #allocation12 [shape = 'u8[589824]{0}', space=vmem, size = 0x90000, scoped, tag = 'input window, operand 5, single buffered']
    #allocation13 [shape = 'u8[32768]{0}', space=vmem, size = 0x8000, scoped, tag = 'input window, operand 6, single buffered']
    #allocation14 [shape = 's32[1]{0}', space=sflag, size = 0x4, scoped, tag = 'scoped memory for tpu_custom_call.1']
    #allocation15 [shape = 'u8[65536]{0}', space=vmem, size = 0x10000, scoped, tag = 'output window, operand 0']
    %13 = vsyncpa [#allocation5], 0
    %s14 = scalar_lea.sflag [#allocation5], 1
    %15 = vsyncpa %s14, 0
    %16 = vsyncpa [#allocation8], 0
    %s17 = scalar_lea.sflag [#allocation8], 1
    %18 = vsyncpa %s17, 0
    %19 = vsyncpa [#allocation11], 0
    %20 = vsyncpa [#allocation14], 0
    %21 = vsyncpa [#allocation6], 0
    %s22 = scalar_lea.sflag [#allocation6], 1
    %23 = vsyncpa %s22, 0
    loop: start=0, step=1, limit=4
    $region2: #{tpu_custom_call.1} parent=1 // loop_pre_header
      _
    $region3: #{tpu_custom_call.1} parent=1 // loop_header
      %s25 = sphi 0, %s29
      %p26 = scmp.ge.s32.totalorder %s25, 4
      %s32 = sphi 0, %s44
      %s33 = sphi 0, %s40
      %s34 = sphi 0, %s32
      %s35 = sphi 0, %s33
      %s36 = sphi 0, %s34
      %s37 = sphi 0, %s35
      %s49 = sphi 0, %s51
      %s52 = sphi 0, %s49
      %s53 = sphi 0, %s52
      %s69 = sphi 0, %s53
      %s85 = sphi 0, %s87
      %s88 = sphi 0, %s85
      %s89 = sphi 0, %s88
      %s105 = sphi 0, %s89
      %s121 = sphi 0, %s123
      %s124 = sphi 0, %s121
      %s125 = sphi 0, %s124
      %s141 = sphi 0, %s125
      %s145 = sphi 0, %s145
      %s147 = sphi 0, %s145
      %s148 = sphi 0, %s147
      %s162 = sphi 0, %s148
      %s166 = sphi 0, %s166
      %s168 = sphi 0, %s166
      %s169 = sphi 0, %s168
      %s183 = sphi 0, %s169
      %s187 = sphi 0, %s187
      %s189 = sphi 0, %s187
      %s190 = sphi 0, %s189
      %s204 = sphi 0, %s190
      %s208 = sphi 0, %s208
      %s210 = sphi 0, %s208
      %s211 = sphi 0, %s210
      %s225 = sphi 0, %s211
      %s229 = sphi 0, %s229
      %s231 = sphi 0, %s229
      %s232 = sphi 0, %s231
      %s246 = sphi 0, %s232
      %s254 = sphi 0, %s256
      %s257 = sphi 0, %s254
      %s258 = sphi 0, %s257
      %s274 = sphi 0, %s258
    $region4: #{tpu_custom_call.1} parent=1 // loop_header_branch
      %28 = sbr.rel (%p26) target = $region8
    $region5: #{tpu_custom_call.1} parent=1 // loop_body
      %s30 = ssub.s32 %s25, 1
      %s31 = ssub.s32 %s25, 2
      %s38 = sadd.s32 1, %s33
      %p39 = scmp.ge.s32.totalorder %s38, 1
      %s40 = scalar_select %p39, 0, %s38
      %s41 = sadd.s32 1, %s32
      %s42 = scalar_select %p39, %s41, %s32
      %p43 = scmp.ge.s32.totalorder %s42, 2
      %s44 = scalar_select %p43, 0, %s42
      %s45 = ssub.s32 %s32, %s44
      %s46 = ssub.s32 %s33, %s40
      %s47 = sor.u32 %s45, %s46
      %p48 = scmp.eq.s32.totalorder %s47, 0
      %s50 = sadd.s32 %s49, 1
      %s51 = scalar_select %p48, %s49, %s50
      %p54 = pneg %p48
      %p55 = scmp.eq.s32.totalorder %s25, 1
      %p56 = por %p54, %p55
      %p57 = scmp.ne.s32.totalorder %s49, %s52
      %p58 = scmp.eq.s32.totalorder %s25, 0
      %p59 = por %p57, %p58
      %p60 = scmp.ne.s32.totalorder %s49, %s52
      %p61 = scmp.eq.s32.totalorder %s30, 1
      %p62 = por %p60, %p61
      %p63 = scmp.ne.s32.totalorder %s52, %s53
      %p64 = scmp.eq.s32.totalorder %s30, 0
      %p65 = por %p63, %p64
      %p66 = scmp.ne.s32.totalorder %s52, %s53
      %p67 = scmp.eq.s32.totalorder %s31, 1
      %p68 = por %p66, %p67
      %p70 = scmp.ne.s32.totalorder %s53, %s69
      %p71 = scmp.eq.s32.totalorder %s31, 0
      %p72 = por %p70, %p71
      %s73 = smul.u32 %s33, 4
      %s74 = ssub.s32 %s73, 1
      %p75 = scmp.gt.s32.totalorder %s74, 0
      %s76 = scalar_select %p75, %s74, 0
      %s77 = smul.u32 %s40, 4
      %s78 = ssub.s32 %s77, 1
      %p79 = scmp.gt.s32.totalorder %s78, 0
      %s80 = scalar_select %p79, %s78, 0
      %s81 = ssub.s32 %s32, %s44
      %s82 = ssub.s32 %s76, %s80
      %s83 = sor.u32 %s81, %s82
      %p84 = scmp.eq.s32.totalorder %s83, 0
      %s86 = sadd.s32 %s85, 1
      %s87 = scalar_select %p84, %s85, %s86
      %p90 = pneg %p84
      %p91 = scmp.eq.s32.totalorder %s25, 1
      %p92 = por %p90, %p91
      %p93 = scmp.ne.s32.totalorder %s85, %s88
      %p94 = scmp.eq.s32.totalorder %s25, 0
      %p95 = por %p93, %p94
      %p96 = scmp.ne.s32.totalorder %s85, %s88
      %p97 = scmp.eq.s32.totalorder %s30, 1
      %p98 = por %p96, %p97
      %p99 = scmp.ne.s32.totalorder %s88, %s89
      %p100 = scmp.eq.s32.totalorder %s30, 0
      %p101 = por %p99, %p100
      %p102 = scmp.ne.s32.totalorder %s88, %s89
      %p103 = scmp.eq.s32.totalorder %s31, 1
      %p104 = por %p102, %p103
      %p106 = scmp.ne.s32.totalorder %s89, %s105
      %p107 = scmp.eq.s32.totalorder %s31, 0
      %p108 = por %p106, %p107
      %s109 = sadd.s32 %s33, 1
      %s110 = smul.u32 %s109, 4
      %p111 = scmp.lt.s32.totalorder %s110, 3
      %s112 = scalar_select %p111, %s110, 3
      %s113 = sadd.s32 %s40, 1
      %s114 = smul.u32 %s113, 4
      %p115 = scmp.lt.s32.totalorder %s114, 3
      %s116 = scalar_select %p115, %s114, 3
      %s117 = ssub.s32 %s32, %s44
      %s118 = ssub.s32 %s112, %s116
      %s119 = sor.u32 %s117, %s118
      %p120 = scmp.eq.s32.totalorder %s119, 0
      %s122 = sadd.s32 %s121, 1
      %s123 = scalar_select %p120, %s121, %s122
      %p126 = pneg %p120
      %p127 = scmp.eq.s32.totalorder %s25, 1
      %p128 = por %p126, %p127
      %p129 = scmp.ne.s32.totalorder %s121, %s124
      %p130 = scmp.eq.s32.totalorder %s25, 0
      %p131 = por %p129, %p130
      %p132 = scmp.ne.s32.totalorder %s121, %s124
      %p133 = scmp.eq.s32.totalorder %s30, 1
      %p134 = por %p132, %p133
      %p135 = scmp.ne.s32.totalorder %s124, %s125
      %p136 = scmp.eq.s32.totalorder %s30, 0
      %p137 = por %p135, %p136
      %p138 = scmp.ne.s32.totalorder %s124, %s125
      %p139 = scmp.eq.s32.totalorder %s31, 1
      %p140 = por %p138, %p139
      %p142 = scmp.ne.s32.totalorder %s125, %s141
      %p143 = scmp.eq.s32.totalorder %s31, 0
      %p144 = por %p142, %p143
      %s146 = sadd.s32 %s145, 1
      %p149 = scmp.eq.s32.totalorder %s25, 1
      %p150 = scmp.ne.s32.totalorder %s145, %s147
      %p151 = scmp.eq.s32.totalorder %s25, 0
      %p152 = por %p150, %p151
      %p153 = scmp.ne.s32.totalorder %s145, %s147
      %p154 = scmp.eq.s32.totalorder %s30, 1
      %p155 = por %p153, %p154
      %p156 = scmp.ne.s32.totalorder %s147, %s148
      %p157 = scmp.eq.s32.totalorder %s30, 0
      %p158 = por %p156, %p157
      %p159 = scmp.ne.s32.totalorder %s147, %s148
      %p160 = scmp.eq.s32.totalorder %s31, 1
      %p161 = por %p159, %p160
      %p163 = scmp.ne.s32.totalorder %s148, %s162
      %p164 = scmp.eq.s32.totalorder %s31, 0
      %p165 = por %p163, %p164
      %s167 = sadd.s32 %s166, 1
      %p170 = scmp.eq.s32.totalorder %s25, 1
      %p171 = scmp.ne.s32.totalorder %s166, %s168
      %p172 = scmp.eq.s32.totalorder %s25, 0
      %p173 = por %p171, %p172
      %p174 = scmp.ne.s32.totalorder %s166, %s168
      %p175 = scmp.eq.s32.totalorder %s30, 1
      %p176 = por %p174, %p175
      %p177 = scmp.ne.s32.totalorder %s168, %s169
      %p178 = scmp.eq.s32.totalorder %s30, 0
      %p179 = por %p177, %p178
      %p180 = scmp.ne.s32.totalorder %s168, %s169
      %p181 = scmp.eq.s32.totalorder %s31, 1
      %p182 = por %p180, %p181
      %p184 = scmp.ne.s32.totalorder %s169, %s183
      %p185 = scmp.eq.s32.totalorder %s31, 0
      %p186 = por %p184, %p185
      %s188 = sadd.s32 %s187, 1
      %p191 = scmp.eq.s32.totalorder %s25, 1
      %p192 = scmp.ne.s32.totalorder %s187, %s189
      %p193 = scmp.eq.s32.totalorder %s25, 0
      %p194 = por %p192, %p193
      %p195 = scmp.ne.s32.totalorder %s187, %s189
      %p196 = scmp.eq.s32.totalorder %s30, 1
      %p197 = por %p195, %p196
      %p198 = scmp.ne.s32.totalorder %s189, %s190
      %p199 = scmp.eq.s32.totalorder %s30, 0
      %p200 = por %p198, %p199
      %p201 = scmp.ne.s32.totalorder %s189, %s190
      %p202 = scmp.eq.s32.totalorder %s31, 1
      %p203 = por %p201, %p202
      %p205 = scmp.ne.s32.totalorder %s190, %s204
      %p206 = scmp.eq.s32.totalorder %s31, 0
      %p207 = por %p205, %p206
      %s209 = sadd.s32 %s208, 1
      %p212 = scmp.eq.s32.totalorder %s25, 1
      %p213 = scmp.ne.s32.totalorder %s208, %s210
      %p214 = scmp.eq.s32.totalorder %s25, 0
      %p215 = por %p213, %p214
      %p216 = scmp.ne.s32.totalorder %s208, %s210
      %p217 = scmp.eq.s32.totalorder %s30, 1
      %p218 = por %p216, %p217
      %p219 = scmp.ne.s32.totalorder %s210, %s211
      %p220 = scmp.eq.s32.totalorder %s30, 0
      %p221 = por %p219, %p220
      %p222 = scmp.ne.s32.totalorder %s210, %s211
      %p223 = scmp.eq.s32.totalorder %s31, 1
      %p224 = por %p222, %p223
      %p226 = scmp.ne.s32.totalorder %s211, %s225
      %p227 = scmp.eq.s32.totalorder %s31, 0
      %p228 = por %p226, %p227
      %s230 = sadd.s32 %s229, 1
      %p233 = scmp.eq.s32.totalorder %s25, 1
      %p234 = scmp.ne.s32.totalorder %s229, %s231
      %p235 = scmp.eq.s32.totalorder %s25, 0
      %p236 = por %p234, %p235
      %p237 = scmp.ne.s32.totalorder %s229, %s231
      %p238 = scmp.eq.s32.totalorder %s30, 1
      %p239 = por %p237, %p238
      %p240 = scmp.ne.s32.totalorder %s231, %s232
      %p241 = scmp.eq.s32.totalorder %s30, 0
      %p242 = por %p240, %p241
      %p243 = scmp.ne.s32.totalorder %s231, %s232
      %p244 = scmp.eq.s32.totalorder %s31, 1
      %p245 = por %p243, %p244
      %p247 = scmp.ne.s32.totalorder %s232, %s246
      %p248 = scmp.eq.s32.totalorder %s31, 0
      %p249 = por %p247, %p248
      %s250 = ssub.s32 %s32, %s44
      %s251 = ssub.s32 %s33, %s40
      %s252 = sor.u32 %s250, %s251
      %p253 = scmp.eq.s32.totalorder %s252, 0
      %s255 = sadd.s32 %s254, 1
      %s256 = scalar_select %p253, %s254, %s255
      %p259 = pneg %p253
      %p260 = scmp.eq.s32.totalorder %s25, 1
      %p261 = por %p259, %p260
      %p262 = scmp.ne.s32.totalorder %s254, %s257
      %p263 = scmp.eq.s32.totalorder %s25, 0
      %p264 = por %p262, %p263
      %p265 = scmp.ne.s32.totalorder %s254, %s257
      %p266 = scmp.eq.s32.totalorder %s30, 1
      %p267 = por %p265, %p266
      %p268 = scmp.ne.s32.totalorder %s257, %s258
      %p269 = scmp.eq.s32.totalorder %s30, 0
      %p270 = por %p268, %p269
      %p271 = scmp.ne.s32.totalorder %s257, %s258
      %p272 = scmp.eq.s32.totalorder %s31, 1
      %p273 = por %p271, %p272
      %p275 = scmp.ne.s32.totalorder %s258, %s274
      %p276 = scmp.eq.s32.totalorder %s31, 0
      %p277 = por %p275, %p276
      %p278 = scmp.le.s32.totalorder 1, %s25
      %p279 = scmp.lt.s32.totalorder %s25, 3
      %p280 = pnand %p278, %p279
      %p281 = pneg %p280
      // Predicated region
      $region9: #{tpu_custom_call.1} parent=5 // pred_check
        _
      $region10: #{tpu_custom_call.1} parent=5 // pred_check_branch
        %283 = sbr.rel (%p280) target = $region12
      $region11: #{tpu_custom_call.1} parent=5 // pred_region
        %s284 = ssub.s32 %s25, 1
        // Predicated region
        $region13: #{tpu_custom_call.1} parent=11 // pred_check
          %p285 = pneg %p158
        $region14: #{tpu_custom_call.1} parent=11 // pred_check_branch
          %287 = sbr.rel (%p285) target = $region16
        $region15: #{tpu_custom_call.1} parent=11 // pred_region
          %s289 = ssub.s32 9216, 9216
          %290 = vsyncadd [#allocation11], %s289
          %s291 = sshll.u32 [#allocation10], 4
          %s292 = int_to_ptr.vmem [resolvable:$true] %s291
          %297 = dma.hbm_to_vmem [thread:$0]  %s3, 9216, %s292, [#allocation11], 128, 128, 8
        $region16: #{tpu_custom_call.1} parent=11 // pred_fallthru
          _
        // Predicated region
        $region17: #{tpu_custom_call.1} parent=11 // pred_check
          %p298 = pneg %p179
        $region18: #{tpu_custom_call.1} parent=11 // pred_check_branch
          %300 = sbr.rel (%p298) target = $region20
        $region19: #{tpu_custom_call.1} parent=11 // pred_region
          _
        $region20: #{tpu_custom_call.1} parent=11 // pred_fallthru
          _
        // Predicated region
        $region21: #{tpu_custom_call.1} parent=11 // pred_check
          %p301 = pneg %p200
        $region22: #{tpu_custom_call.1} parent=11 // pred_check_branch
          %303 = sbr.rel (%p301) target = $region24
        $region23: #{tpu_custom_call.1} parent=11 // pred_region
          %s305 = ssub.s32 18432, 18432
          %306 = vsyncadd [#allocation11], %s305
          %s307 = sshll.u32 [#allocation12], 4
          %s308 = int_to_ptr.vmem [resolvable:$true] %s307
          %313 = dma.hbm_to_vmem [thread:$0]  %s5, 18432, %s308, [#allocation11], 128, 128, 8
        $region24: #{tpu_custom_call.1} parent=11 // pred_fallthru
          _
        // Predicated region
        $region25: #{tpu_custom_call.1} parent=11 // pred_check
          %p314 = pneg %p221
        $region26: #{tpu_custom_call.1} parent=11 // pred_check_branch
          %316 = sbr.rel (%p314) target = $region28
        $region27: #{tpu_custom_call.1} parent=11 // pred_region
          %s318 = ssub.s32 1024, 1024
          %319 = vsyncadd [#allocation14], %s318
          %s320 = sshll.u32 [#allocation13], 4
          %s321 = int_to_ptr.vmem [resolvable:$true] %s320
          %326 = dma.hbm_to_vmem [thread:$0]  %s6, 1024, %s321, [#allocation14], 128, 128, 8
        $region28: #{tpu_custom_call.1} parent=11 // pred_fallthru
          _
        // Predicated region
        $region29: #{tpu_custom_call.1} parent=11 // pred_check
          %p327 = pneg %p242
        $region30: #{tpu_custom_call.1} parent=11 // pred_check_branch
          %329 = sbr.rel (%p327) target = $region32
        $region31: #{tpu_custom_call.1} parent=11 // pred_region
          _
        $region32: #{tpu_custom_call.1} parent=11 // pred_fallthru
          _
      $region12: #{tpu_custom_call.1} parent=5 // pred_fallthru
        _
      %p330 = scmp.lt.s32.totalorder %s25, 2
      // Predicated region
      $region33: #{tpu_custom_call.1} parent=5 // pred_check
        %p331 = pneg %p330
      $region34: #{tpu_custom_call.1} parent=5 // pred_check_branch
        %333 = sbr.rel (%p331) target = $region36
      $region35: #{tpu_custom_call.1} parent=5 // pred_region
        // Predicated region
        $region37: #{tpu_custom_call.1} parent=35 // pred_check
          %p334 = pneg %p59
        $region38: #{tpu_custom_call.1} parent=35 // pred_check_branch
          %336 = sbr.rel (%p334) target = $region40
        $region39: #{tpu_custom_call.1} parent=35 // pred_region
          %s337 = sand.u32 %s49, 1
          %s338 = scalar_lea.sflag [#allocation5], %s337
          %s339 = sand.u32 %s49, 1
          %s340 = smul.addr %s339, 64
          %s341 = scalar_lea.vmem [#allocation4], %s340
          %s342 = smul.u32 8, %s33
          %s344 = ssub.s32 1024, 1024
          %345 = vsyncadd %s338, %s344
          %s346 = smul.addr %s32, 8
          %s347 = sadd.s32 %s342, %s346
          %s348 = smul.addr %s347, 128
          %s349 = scalar_lea.hbm %s0, %s348
          %s350 = sshll.u32 %s341, 4
          %s351 = int_to_ptr.vmem [resolvable:$true] %s350
          %356 = dma.hbm_to_vmem [thread:$0]  %s349, 1024, %s351, %s338, 128, 128, 8
        $region40: #{tpu_custom_call.1} parent=35 // pred_fallthru
          _
        // Predicated region
        $region41: #{tpu_custom_call.1} parent=35 // pred_check
          %p357 = pneg %p95
        $region42: #{tpu_custom_call.1} parent=35 // pred_check_branch
          %359 = sbr.rel (%p357) target = $region44
        $region43: #{tpu_custom_call.1} parent=35 // pred_region
          %s360 = sand.u32 %s25, 1
          %s361 = scalar_lea.sflag [#allocation8], %s360
          %s362 = sand.u32 %s85, 1
          %s363 = smul.addr %s362, 16
          %s364 = scalar_lea.vmem [#allocation7], %s363
          %s365 = smul.u32 %s33, 4
          %s366 = ssub.s32 %s365, 1
          %p367 = scmp.gt.s32.totalorder %s366, 0
          %s368 = scalar_select %p367, %s366, 0
          %s369 = smul.u32 2, %s368
          %s371 = ssub.s32 256, 256
          %372 = vsyncadd %s361, %s371
          %s373 = smul.addr %s32, 8
          %s374 = sadd.s32 %s369, %s373
          %s375 = smul.addr %s374, 128
          %s376 = scalar_lea.hbm %s1, %s375
          %s377 = sshll.u32 %s364, 4
          %s378 = int_to_ptr.vmem [resolvable:$true] %s377
          %383 = dma.hbm_to_vmem [thread:$0]  %s376, 256, %s378, %s361, 128, 128, 8
        $region44: #{tpu_custom_call.1} parent=35 // pred_fallthru
          _
        // Predicated region
        $region45: #{tpu_custom_call.1} parent=35 // pred_check
          %p384 = pneg %p131
        $region46: #{tpu_custom_call.1} parent=35 // pred_check_branch
          %386 = sbr.rel (%p384) target = $region48
        $region47: #{tpu_custom_call.1} parent=35 // pred_region
          %s387 = sand.u32 %s25, 1
          %s388 = scalar_lea.sflag [#allocation8], %s387
          %s389 = sand.u32 %s121, 1
          %s390 = smul.addr %s389, 16
          %s391 = scalar_lea.vmem [#allocation9], %s390
          %s392 = sadd.s32 %s33, 1
          %s393 = smul.u32 %s392, 4
          %p394 = scmp.lt.s32.totalorder %s393, 3
          %s395 = scalar_select %p394, %s393, 3
          %s396 = smul.u32 2, %s395
          %s398 = ssub.s32 256, 256
          %399 = vsyncadd %s388, %s398
          %s400 = smul.addr %s32, 8
          %s401 = sadd.s32 %s396, %s400
          %s402 = smul.addr %s401, 128
          %s403 = scalar_lea.hbm %s2, %s402
          %s404 = sshll.u32 %s391, 4
          %s405 = int_to_ptr.vmem [resolvable:$true] %s404
          %410 = dma.hbm_to_vmem [thread:$0]  %s403, 256, %s405, %s388, 128, 128, 8
        $region48: #{tpu_custom_call.1} parent=35 // pred_fallthru
          _
      $region36: #{tpu_custom_call.1} parent=5 // pred_fallthru
        _
      %p411 = scmp.le.s32.totalorder 1, %s25
      %p412 = scmp.lt.s32.totalorder %s25, 3
      %p413 = pnand %p411, %p412
      %p414 = pneg %p413
      // Predicated region
      $region49: #{tpu_custom_call.1} parent=5 // pred_check
        _
      $region50: #{tpu_custom_call.1} parent=5 // pred_check_branch
        %416 = sbr.rel (%p413) target = $region52
      $region51: #{tpu_custom_call.1} parent=5 // pred_region
        %s417 = ssub.s32 %s25, 1
        %s418 = sand.u32 %s52, 1
        %s419 = scalar_lea.sflag [#allocation5], %s418
        %s420 = sand.u32 %s52, 1
        %s421 = smul.addr %s420, 64
        %s422 = scalar_lea.vmem [#allocation4], %s421
        // Predicated region
        $region53: #{tpu_custom_call.1} parent=51 // pred_check
          %p423 = pneg %p65
        $region54: #{tpu_custom_call.1} parent=51 // pred_check_branch
          %425 = sbr.rel (%p423) target = $region56
        $region55: #{tpu_custom_call.1} parent=51 // pred_region
          %426 = dma.done %s419, 1024
        $region56: #{tpu_custom_call.1} parent=51 // pred_fallthru
          _
        %s427 = sand.u32 %s30, 1
        %s428 = scalar_lea.sflag [#allocation8], %s427
        %s429 = sand.u32 %s88, 1
        %s430 = smul.addr %s429, 16
        %s431 = scalar_lea.vmem [#allocation7], %s430
        // Predicated region
        $region57: #{tpu_custom_call.1} parent=51 // pred_check
          %p432 = pneg %p101
        $region58: #{tpu_custom_call.1} parent=51 // pred_check_branch
          %434 = sbr.rel (%p432) target = $region60
        $region59: #{tpu_custom_call.1} parent=51 // pred_region
          %435 = dma.done %s428, 256
        $region60: #{tpu_custom_call.1} parent=51 // pred_fallthru
          _
        %s436 = sand.u32 %s30, 1
        %s437 = scalar_lea.sflag [#allocation8], %s436
        %s438 = sand.u32 %s124, 1
        %s439 = smul.addr %s438, 16
        %s440 = scalar_lea.vmem [#allocation9], %s439
        // Predicated region
        $region61: #{tpu_custom_call.1} parent=51 // pred_check
          %p441 = pneg %p137
        $region62: #{tpu_custom_call.1} parent=51 // pred_check_branch
          %443 = sbr.rel (%p441) target = $region64
        $region63: #{tpu_custom_call.1} parent=51 // pred_region
          %444 = dma.done %s437, 256
        $region64: #{tpu_custom_call.1} parent=51 // pred_fallthru
          _
        // Predicated region
        $region65: #{tpu_custom_call.1} parent=51 // pred_check
          %p445 = pneg %p158
        $region66: #{tpu_custom_call.1} parent=51 // pred_check_branch
          %447 = sbr.rel (%p445) target = $region68
        $region67: #{tpu_custom_call.1} parent=51 // pred_region
          %448 = dma.done [#allocation11], 9216
        $region68: #{tpu_custom_call.1} parent=51 // pred_fallthru
          _
        // Predicated region
        $region69: #{tpu_custom_call.1} parent=51 // pred_check
          %p449 = pneg %p200
        $region70: #{tpu_custom_call.1} parent=51 // pred_check_branch
          %451 = sbr.rel (%p449) target = $region72
        $region71: #{tpu_custom_call.1} parent=51 // pred_region
          %452 = dma.done [#allocation11], 18432
        $region72: #{tpu_custom_call.1} parent=51 // pred_fallthru
          _
        // Predicated region
        $region73: #{tpu_custom_call.1} parent=51 // pred_check
          %p453 = pneg %p221
        $region74: #{tpu_custom_call.1} parent=51 // pred_check_branch
          %455 = sbr.rel (%p453) target = $region76
        $region75: #{tpu_custom_call.1} parent=51 // pred_region
          %456 = dma.done [#allocation14], 1024
        $region76: #{tpu_custom_call.1} parent=51 // pred_fallthru
          _
        %s457 = sand.u32 %s52, 1
        %s458 = scalar_lea.sflag [#allocation5], %s457
        %s459 = sand.u32 %s52, 1
        %s460 = smul.addr %s459, 64
        %s461 = scalar_lea.vmem [#allocation4], %s460
        %p462 = pneg %p65
        %p463 = pneg %p62
        %s464 = sand.u32 %s30, 1
        %s465 = scalar_lea.sflag [#allocation8], %s464
        %s466 = sand.u32 %s88, 1
        %s467 = smul.addr %s466, 16
        %s468 = scalar_lea.vmem [#allocation7], %s467
        %p469 = pneg %p101
        %p470 = pneg %p98
        %s471 = sand.u32 %s30, 1
        %s472 = scalar_lea.sflag [#allocation8], %s471
        %s473 = sand.u32 %s124, 1
        %s474 = smul.addr %s473, 16
        %s475 = scalar_lea.vmem [#allocation9], %s474
        %p476 = pneg %p137
        %p477 = pneg %p134
        %p478 = pneg %p158
        %p479 = pneg %p155
        %p480 = pneg %p179
        %p481 = pneg %p176
        %p482 = pneg %p200
        %p483 = pneg %p197
        %p484 = pneg %p221
        %p485 = pneg %p218
        %p486 = pneg %p242
        %p487 = pneg %p239
        %p488 = pneg %p270
        %p489 = pneg %p267
        %s490 = sand.u32 %s257, 1
        %s491 = scalar_lea.sflag [#allocation6], %s490
        %s492 = sand.u32 %s257, 1
        %s493 = smul.addr %s492, 64
        %s494 = scalar_lea.vmem [#allocation15], %s493
        %s495 = smul.u32 8, %s35
        %s496 = smul.u32 %s35, 4
        %s497 = ssub.s32 %s496, 1
        %p498 = scmp.gt.s32.totalorder %s497, 0
        %s499 = scalar_select %p498, %s497, 0
        %s500 = smul.u32 2, %s499
        %s501 = sadd.s32 %s35, 1
        %s502 = smul.u32 %s501, 4
        %p503 = scmp.lt.s32.totalorder %s502, 3
        %s504 = scalar_select %p503, %s502, 3
        %s505 = smul.u32 2, %s504
        %s506 = smul.u32 8, %s35
        %vm507 = vcmask 516096
        %508 = vst.msk [vmem:[#allocation2] sm:$0x1] %vm507, 0.0
        %509 = vst.msk [vmem:[#allocation2 + $0x10] sm:$0x1] %vm507, 0.0
        %510 = vst.msk [vmem:[#allocation2 + $0x20] sm:$0x1] %vm507, 0.0
        %511 = vst.msk [vmem:[#allocation2 + $0x30] sm:$0x1] %vm507, 0.0
        %512 = vst.msk [vmem:[#allocation2 + $0x40] sm:$0x1] %vm507, 0.0
        %513 = vst.msk [vmem:[#allocation2 + $0x50] sm:$0x1] %vm507, 0.0
        %514 = vst.msk [vmem:[#allocation2 + $0x60] sm:$0x1] %vm507, 0.0
        %515 = vst.msk [vmem:[#allocation2 + $0x70] sm:$0x1] %vm507, 0.0
        %516 = vst.msk [vmem:[#allocation2 + $0x80] sm:$0x1] %vm507, 0.0
        %517 = vst.msk [vmem:[#allocation2 + $0x90] sm:$0x1] %vm507, 0.0
        %518 = vst.msk [vmem:[#allocation2 + $0xa0] sm:$0x1] %vm507, 0.0
        %519 = vst.msk [vmem:[#allocation2 + $0xb0] sm:$0x1] %vm507, 0.0
        %520 = vst.msk [vmem:[#allocation2 + $0x9] sm:$0x1] %vm507, 0.0
        %521 = vst.msk [vmem:[#allocation2 + $0x19] sm:$0x1] %vm507, 0.0
        %522 = vst.msk [vmem:[#allocation2 + $0x29] sm:$0x1] %vm507, 0.0
        %523 = vst.msk [vmem:[#allocation2 + $0x39] sm:$0x1] %vm507, 0.0
        %524 = vst.msk [vmem:[#allocation2 + $0x49] sm:$0x1] %vm507, 0.0
        %525 = vst.msk [vmem:[#allocation2 + $0x59] sm:$0x1] %vm507, 0.0
        %526 = vst.msk [vmem:[#allocation2 + $0x69] sm:$0x1] %vm507, 0.0
        %527 = vst.msk [vmem:[#allocation2 + $0x79] sm:$0x1] %vm507, 0.0
        %528 = vst.msk [vmem:[#allocation2 + $0x89] sm:$0x1] %vm507, 0.0
        %529 = vst.msk [vmem:[#allocation2 + $0x99] sm:$0x1] %vm507, 0.0
        %530 = vst.msk [vmem:[#allocation2 + $0xa9] sm:$0x1] %vm507, 0.0
        %531 = vst.msk [vmem:[#allocation2 + $0xb9] sm:$0x1] %vm507, 0.0
        %v532 = vld [vmem:[%s422] sm:$0xff]
        %v533 = vld [vmem:[%s422 + $0x8] sm:$0xff]
        %v534 = vld [vmem:[%s422 + $0x10] sm:$0xff]
        %v535 = vld [vmem:[%s422 + $0x18] sm:$0xff]
        %v536 = vld [vmem:[%s422 + $0x20] sm:$0xff]
        %v537 = vld [vmem:[%s422 + $0x28] sm:$0xff]
        %v538 = vld [vmem:[%s422 + $0x30] sm:$0xff]
        %v539 = vld [vmem:[%s422 + $0x38] sm:$0xff]
        %s540 = scalar_lea.vmem [#allocation2], 32
        %vm541 = vcmask 523264
        %542 = vst.msk [vmem:[%s540 + $0x1] sm:$0xff] %vm541, %v532
        %543 = vst.msk [vmem:[%s540 + $0x11] sm:$0xff] %vm541, %v533
        %544 = vst.msk [vmem:[%s540 + $0x21] sm:$0xff] %vm541, %v534
        %545 = vst.msk [vmem:[%s540 + $0x31] sm:$0xff] %vm541, %v535
        %546 = vst.msk [vmem:[%s540 + $0x41] sm:$0xff] %vm541, %v536
        %547 = vst.msk [vmem:[%s540 + $0x51] sm:$0xff] %vm541, %v537
        %548 = vst.msk [vmem:[%s540 + $0x61] sm:$0xff] %vm541, %v538
        %549 = vst.msk [vmem:[%s540 + $0x71] sm:$0xff] %vm541, %v539
        %p550 = scmp.gt.s32.totalorder %s35, 0
        // Predicated region
        $region77: #{tpu_custom_call.1} parent=51 // pred_check
          %p551 = pneg %p550
        $region78: #{tpu_custom_call.1} parent=51 // pred_check_branch
          %553 = sbr.rel (%p551) target = $region80
        $region79: #{tpu_custom_call.1} parent=51 // pred_region
          %v554 = vld [vmem:[%s431] sm:$0xff]
          %v555 = vld [vmem:[%s431 + $0x8] sm:$0xff]
          %556 = vst.msk [vmem:[#allocation2 + $0x1] sm:$0xff] %vm541, %v554
          %557 = vst.msk [vmem:[#allocation2 + $0x11] sm:$0xff] %vm541, %v555
        $region80: #{tpu_custom_call.1} parent=51 // pred_fallthru
          _
        %p558 = scmp.eq.s32.totalorder %s35, 0
        // Predicated region
        $region81: #{tpu_custom_call.1} parent=51 // pred_check
          %p559 = pneg %p558
        $region82: #{tpu_custom_call.1} parent=51 // pred_check_branch
          %561 = sbr.rel (%p559) target = $region84
        $region83: #{tpu_custom_call.1} parent=51 // pred_region
          %562 = vst.msk [vmem:[#allocation2 + $0x1] sm:$0xff] %vm541, 0.0
          %563 = vst.msk [vmem:[#allocation2 + $0x11] sm:$0xff] %vm541, 0.0
        $region84: #{tpu_custom_call.1} parent=51 // pred_fallthru
          _
        %p564 = scmp.lt.s32.totalorder %s35, 0
        // Predicated region
        $region85: #{tpu_custom_call.1} parent=51 // pred_check
          %p565 = pneg %p564
        $region86: #{tpu_custom_call.1} parent=51 // pred_check_branch
          %567 = sbr.rel (%p565) target = $region88
        $region87: #{tpu_custom_call.1} parent=51 // pred_region
          %v568 = vld [vmem:[%s440] sm:$0xff]
          %v569 = vld [vmem:[%s440 + $0x8] sm:$0xff]
          %s570 = scalar_lea.vmem [#allocation2], 160
          %571 = vst.msk [vmem:[%s570 + $0x1] sm:$0xff] %vm541, %v568
          %572 = vst.msk [vmem:[%s570 + $0x11] sm:$0xff] %vm541, %v569
        $region88: #{tpu_custom_call.1} parent=51 // pred_fallthru
          _
        // Predicated region
        $region89: #{tpu_custom_call.1} parent=51 // pred_check
          %p573 = pneg %p558
        $region90: #{tpu_custom_call.1} parent=51 // pred_check_branch
          %575 = sbr.rel (%p573) target = $region92
        $region91: #{tpu_custom_call.1} parent=51 // pred_region
          %s576 = scalar_lea.vmem [#allocation2], 160
          %577 = vst.msk [vmem:[%s576 + $0x1] sm:$0xff] %vm541, 0.0
          %578 = vst.msk [vmem:[%s576 + $0x11] sm:$0xff] %vm541, 0.0
        $region92: #{tpu_custom_call.1} parent=51 // pred_fallthru
          _
        %v579 = vld [vmem:[#allocation2] sm:$0xff]
        %v580 = vld [vmem:[#allocation2 + $0x10] sm:$0xff]
        %v581 = vld [vmem:[#allocation2 + $0x20] sm:$0xff]
        %v582 = vld [vmem:[#allocation2 + $0x30] sm:$0xff]
        %v583 = vld [vmem:[#allocation2 + $0x40] sm:$0xff]
        %v584 = vld [vmem:[#allocation2 + $0x50] sm:$0xff]
        %v585 = vld [vmem:[#allocation2 + $0x60] sm:$0xff]
        %v586 = vld [vmem:[#allocation2 + $0x70] sm:$0xff]
        %v587 = vld [vmem:[#allocation2 + $0x80] sm:$0xff]
        %v588 = vld [vmem:[#allocation2 + $0x90] sm:$0xff]
        %v589 = vld [vmem:[#allocation10] sm:$0xff]
        %v590 = vld [vmem:[#allocation10 + $0x8] sm:$0xff]
        %v591 = vld [vmem:[#allocation10 + $0x10] sm:$0xff]
        %v592 = vld [vmem:[#allocation10 + $0x18] sm:$0xff]
        %v593 = vld [vmem:[#allocation10 + $0x20] sm:$0xff]
        %v594 = vld [vmem:[#allocation10 + $0x28] sm:$0xff]
        %v595 = vld [vmem:[#allocation10 + $0x30] sm:$0xff]
        %v596 = vld [vmem:[#allocation10 + $0x38] sm:$0xff]
        %v597 = vld [vmem:[#allocation2 + $0x1] sm:$0xff]
        %v598 = vld [vmem:[#allocation2 + $0x11] sm:$0xff]
        %v599 = vld [vmem:[#allocation2 + $0x21] sm:$0xff]
        %v600 = vld [vmem:[#allocation2 + $0x31] sm:$0xff]
        %v601 = vld [vmem:[#allocation2 + $0x41] sm:$0xff]
        %v602 = vld [vmem:[#allocation2 + $0x51] sm:$0xff]
        %v603 = vld [vmem:[#allocation2 + $0x61] sm:$0xff]
        %v604 = vld [vmem:[#allocation2 + $0x71] sm:$0xff]
        %v605 = vld [vmem:[#allocation2 + $0x81] sm:$0xff]
        %v606 = vld [vmem:[#allocation2 + $0x91] sm:$0xff]
        %s607 = scalar_lea.vmem [#allocation10], 64
        %v608 = vld [vmem:[%s607] sm:$0xff]
        %v609 = vld [vmem:[%s607 + $0x8] sm:$0xff]
        %v610 = vld [vmem:[%s607 + $0x10] sm:$0xff]
        %v611 = vld [vmem:[%s607 + $0x18] sm:$0xff]
        %v612 = vld [vmem:[%s607 + $0x20] sm:$0xff]
        %v613 = vld [vmem:[%s607 + $0x28] sm:$0xff]
        %v614 = vld [vmem:[%s607 + $0x30] sm:$0xff]
        %v615 = vld [vmem:[%s607 + $0x38] sm:$0xff]
        %v617 = vsel %vm541, %v597, 0
        %v620 = vsel %vm541, %v598, 0
        %v623 = vsel %vm541, %v599, 0
        %v626 = vsel %vm541, %v600, 0
        %v629 = vsel %vm541, %v601, 0
        %v632 = vsel %vm541, %v602, 0
        %v635 = vsel %vm541, %v603, 0
        %v638 = vsel %vm541, %v604, 0
        %v641 = vsel %vm541, %v605, 0
        %v644 = vsel %vm541, %v606, 0
        %646 = vmatprep.subr.mxu0 0.0
        %647 = vmatpush1.msra.mxu0 0.0
        %648 = vmatprep.subr.mxu0 0.0
        %649 = vmatpush1.msra.mxu0 0.0
        %650 = vmatprep.subr.mxu0 0.0
        %651 = vmatpush1.msra.mxu0 0.0
        %652 = vmatprep.subr.mxu0 0.0
        %653 = vmatpush1.msra.mxu0 0.0
        %654 = vmatprep.subr.mxu0 0.0
        %655 = vmatpush1.msra.mxu0 0.0
        %656 = vmatprep.subr.mxu0 0.0
        %657 = vmatpush1.msra.mxu0 0.0
        %658 = vmatprep.subr.mxu0 0.0
        %659 = vmatpush1.msra.mxu0 0.0
        %660 = vmatprep.subr.mxu0 0.0
        %661 = vmatpush1.msra.mxu0 0.0
        %662 = vmatprep.subr.mxu0 0.0
        %663 = vmatpush1.msra.mxu0 %v615
        %664 = vmatprep.subr.mxu0 0.0
        %665 = vmatpush1.msra.mxu0 %v614
        %666 = vmatprep.subr.mxu0 0.0
        %667 = vmatpush1.msra.mxu0 %v613
        %668 = vmatprep.subr.mxu0 0.0
        %669 = vmatpush1.msra.mxu0 %v612
        %670 = vmatprep.subr.mxu0 0.0
        %671 = vmatpush1.msra.mxu0 %v611
        %672 = vmatprep.subr.mxu0 0.0
        %673 = vmatpush1.msra.mxu0 %v610
        %674 = vmatprep.subr.mxu0 0.0
        %675 = vmatpush1.msra.mxu0 %v609
        %676 = vmatprep.subr.mxu0 0.0
        %677 = vmatpush1.msra.mxu0 %v608
        %678 = vmatprep.subr.mxu0 0.0
        %679 = vmatpush2.msra.mxu0 0.0
        %680 = vmatprep.subr.mxu0 0.0
        %681 = vmatpush2.msra.mxu0 0.0
        %682 = vmatprep.subr.mxu0 0.0
        %683 = vmatpush2.msra.mxu0 0.0
        %684 = vmatprep.subr.mxu0 0.0
        %685 = vmatpush2.msra.mxu0 0.0
        %686 = vmatprep.subr.mxu0 0.0
        %687 = vmatpush2.msra.mxu0 0.0
        %688 = vmatprep.subr.mxu0 0.0
        %689 = vmatpush2.msra.mxu0 0.0
        %690 = vmatprep.subr.mxu0 0.0
        %691 = vmatpush2.msra.mxu0 0.0
        %692 = vmatprep.subr.mxu0 0.0
        %693 = vmatpush2.msra.mxu0 0.0
        %694 = vmatprep.subr.mxu0 0.0
        %695 = vmatpush2.msra.mxu0 0.0
        %696 = vmatprep.subr.mxu0 0.0
        %697 = vmatpush2.msra.mxu0 0.0
        %698 = vmatprep.subr.mxu0 0.0
        %699 = vmatpush2.msra.mxu0 0.0
        %700 = vmatprep.subr.mxu0 0.0
        %701 = vmatpush2.msra.mxu0 0.0
        %702 = vmatprep.subr.mxu0 0.0
        %703 = vmatpush2.msra.mxu0 0.0
        %704 = vmatprep.subr.mxu0 0.0
        %705 = vmatpush2.msra.mxu0 0.0
        %706 = vmatprep.subr.mxu0 0.0
        %707 = vmatpush2.msra.mxu0 0.0
        %708 = vmatprep.subr.mxu0 0.0
        %709 = vmatpush2.msra.mxu0 0.0
        %710 = vmatprep.mubr.f32.mxu0 0.0
        %711 = vmatmul.mubr.f32.gmra.mxu0 %v617
        %v712 = vpop.f32.mrf.mxu0
        %v713 = vadd.f32 0.0, %v712
        %v714 = vpop.f32.mrf.mxu0
        %715 = vmatprep.mubr.f32.mxu0 0.0
        %716 = vmatmul.mubr.f32.gmra.mxu0 %v620
        %v717 = vpop.f32.mrf.mxu0
        %v718 = vadd.f32 0.0, %v717
        %v719 = vpop.f32.mrf.mxu0
        %720 = vmatprep.mubr.f32.mxu0 0.0
        %721 = vmatmul.mubr.f32.gmra.mxu0 %v623
        %v722 = vpop.f32.mrf.mxu0
        %v723 = vadd.f32 0.0, %v722
        %v724 = vpop.f32.mrf.mxu0
        %725 = vmatprep.mubr.f32.mxu0 0.0
        %726 = vmatmul.mubr.f32.gmra.mxu0 %v626
        %v727 = vpop.f32.mrf.mxu0
        %v728 = vadd.f32 0.0, %v727
        %v729 = vpop.f32.mrf.mxu0
        %730 = vmatprep.mubr.f32.mxu0 0.0
        %731 = vmatmul.mubr.f32.gmra.mxu0 %v629
        %v732 = vpop.f32.mrf.mxu0
        %v733 = vadd.f32 0.0, %v732
        %v734 = vpop.f32.mrf.mxu0
        %735 = vmatprep.mubr.f32.mxu0 0.0
        %736 = vmatmul.mubr.f32.gmra.mxu0 %v632
        %v737 = vpop.f32.mrf.mxu0
        %v738 = vadd.f32 0.0, %v737
        %v739 = vpop.f32.mrf.mxu0
        %740 = vmatprep.mubr.f32.mxu0 0.0
        %741 = vmatmul.mubr.f32.gmra.mxu0 %v635
        %v742 = vpop.f32.mrf.mxu0
        %v743 = vadd.f32 0.0, %v742
        %v744 = vpop.f32.mrf.mxu0
        %745 = vmatprep.mubr.f32.mxu0 0.0
        %746 = vmatmul.mubr.f32.gmra.mxu0 %v638
        %v747 = vpop.f32.mrf.mxu0
        %v748 = vadd.f32 0.0, %v747
        %v749 = vpop.f32.mrf.mxu0
        %750 = vmatprep.mubr.f32.mxu0 0.0
        %751 = vmatmul.mubr.f32.gmra.mxu0 %v641
        %v752 = vpop.f32.mrf.mxu0
        %v753 = vadd.f32 0.0, %v752
        %v754 = vpop.f32.mrf.mxu0
        %755 = vmatprep.mubr.f32.mxu0 0.0
        %756 = vmatmul.mubr.f32.gmra.mxu0 %v644
        %v757 = vpop.f32.mrf.mxu0
        %v758 = vadd.f32 0.0, %v757
        %v759 = vpop.f32.mrf.mxu0
        %760 = vdwg.mxu0
        %v762 = vsel %vm541, %v579, 0
        %v765 = vsel %vm541, %v580, 0
        %v768 = vsel %vm541, %v581, 0
        %v771 = vsel %vm541, %v582, 0
        %v774 = vsel %vm541, %v583, 0
        %v777 = vsel %vm541, %v584, 0
        %v780 = vsel %vm541, %v585, 0
        %v783 = vsel %vm541, %v586, 0
        %v786 = vsel %vm541, %v587, 0
        %v789 = vsel %vm541, %v588, 0
        %791 = vmatprep.subr.mxu0 0.0
        %792 = vmatpush1.msra.mxu0 0.0
        %793 = vmatprep.subr.mxu0 0.0
        %794 = vmatpush1.msra.mxu0 0.0
        %795 = vmatprep.subr.mxu0 0.0
        %796 = vmatpush1.msra.mxu0 0.0
        %797 = vmatprep.subr.mxu0 0.0
        %798 = vmatpush1.msra.mxu0 0.0
        %799 = vmatprep.subr.mxu0 0.0
        %800 = vmatpush1.msra.mxu0 0.0
        %801 = vmatprep.subr.mxu0 0.0
        %802 = vmatpush1.msra.mxu0 0.0
        %803 = vmatprep.subr.mxu0 0.0
        %804 = vmatpush1.msra.mxu0 0.0
        %805 = vmatprep.subr.mxu0 0.0
        %806 = vmatpush1.msra.mxu0 0.0
        %807 = vmatprep.subr.mxu0 0.0
        %808 = vmatpush1.msra.mxu0 %v596
        %809 = vmatprep.subr.mxu0 0.0
        %810 = vmatpush1.msra.mxu0 %v595
        %811 = vmatprep.subr.mxu0 0.0
        %812 = vmatpush1.msra.mxu0 %v594
        %813 = vmatprep.subr.mxu0 0.0
        %814 = vmatpush1.msra.mxu0 %v593
        %815 = vmatprep.subr.mxu0 0.0
        %816 = vmatpush1.msra.mxu0 %v592
        %817 = vmatprep.subr.mxu0 0.0
        %818 = vmatpush1.msra.mxu0 %v591
        %819 = vmatprep.subr.mxu0 0.0
        %820 = vmatpush1.msra.mxu0 %v590
        %821 = vmatprep.subr.mxu0 0.0
        %822 = vmatpush1.msra.mxu0 %v589
        %823 = vmatprep.subr.mxu0 0.0
        %824 = vmatpush2.msra.mxu0 0.0
        %825 = vmatprep.subr.mxu0 0.0
        %826 = vmatpush2.msra.mxu0 0.0
        %827 = vmatprep.subr.mxu0 0.0
        %828 = vmatpush2.msra.mxu0 0.0
        %829 = vmatprep.subr.mxu0 0.0
        %830 = vmatpush2.msra.mxu0 0.0
        %831 = vmatprep.subr.mxu0 0.0
        %832 = vmatpush2.msra.mxu0 0.0
        %833 = vmatprep.subr.mxu0 0.0
        %834 = vmatpush2.msra.mxu0 0.0
        %835 = vmatprep.subr.mxu0 0.0
        %836 = vmatpush2.msra.mxu0 0.0
        %837 = vmatprep.subr.mxu0 0.0
        %838 = vmatpush2.msra.mxu0 0.0
        %839 = vmatprep.subr.mxu0 0.0
        %840 = vmatpush2.msra.mxu0 0.0
        %841 = vmatprep.subr.mxu0 0.0
        %842 = vmatpush2.msra.mxu0 0.0
        %843 = vmatprep.subr.mxu0 0.0
        %844 = vmatpush2.msra.mxu0 0.0
        %845 = vmatprep.subr.mxu0 0.0
        %846 = vmatpush2.msra.mxu0 0.0
        %847 = vmatprep.subr.mxu0 0.0
        %848 = vmatpush2.msra.mxu0 0.0
        %849 = vmatprep.subr.mxu0 0.0
        %850 = vmatpush2.msra.mxu0 0.0
        %851 = vmatprep.subr.mxu0 0.0
        %852 = vmatpush2.msra.mxu0 0.0
        %853 = vmatprep.subr.mxu0 0.0
        %854 = vmatpush2.msra.mxu0 0.0
        %855 = vmatprep.mubr.f32.mxu0 0.0
        %856 = vmatmul.mubr.f32.gmra.mxu0 %v762
        %v857 = vpop.f32.mrf.mxu0
        %v858 = vadd.f32 %v713, %v857
        %v859 = vpop.f32.mrf.mxu0
        %860 = vmatprep.mubr.f32.mxu0 0.0
        %861 = vmatmul.mubr.f32.gmra.mxu0 %v765
        %v862 = vpop.f32.mrf.mxu0
        %v863 = vadd.f32 %v718, %v862
        %v864 = vpop.f32.mrf.mxu0
        %865 = vmatprep.mubr.f32.mxu0 0.0
        %866 = vmatmul.mubr.f32.gmra.mxu0 %v768
        %v867 = vpop.f32.mrf.mxu0
        %v868 = vadd.f32 %v723, %v867
        %v869 = vpop.f32.mrf.mxu0
        %870 = vmatprep.mubr.f32.mxu0 0.0
        %871 = vmatmul.mubr.f32.gmra.mxu0 %v771
        %v872 = vpop.f32.mrf.mxu0
        %v873 = vadd.f32 %v728, %v872
        %v874 = vpop.f32.mrf.mxu0
        %875 = vmatprep.mubr.f32.mxu0 0.0
        %876 = vmatmul.mubr.f32.gmra.mxu0 %v774
        %v877 = vpop.f32.mrf.mxu0
        %v878 = vadd.f32 %v733, %v877
        %v879 = vpop.f32.mrf.mxu0
        %880 = vmatprep.mubr.f32.mxu0 0.0
        %881 = vmatmul.mubr.f32.gmra.mxu0 %v777
        %v882 = vpop.f32.mrf.mxu0
        %v883 = vadd.f32 %v738, %v882
        %v884 = vpop.f32.mrf.mxu0
        %885 = vmatprep.mubr.f32.mxu0 0.0
        %886 = vmatmul.mubr.f32.gmra.mxu0 %v780
        %v887 = vpop.f32.mrf.mxu0
        %v888 = vadd.f32 %v743, %v887
        %v889 = vpop.f32.mrf.mxu0
        %890 = vmatprep.mubr.f32.mxu0 0.0
        %891 = vmatmul.mubr.f32.gmra.mxu0 %v783
        %v892 = vpop.f32.mrf.mxu0
        %v893 = vadd.f32 %v748, %v892
        %v894 = vpop.f32.mrf.mxu0
        %895 = vmatprep.mubr.f32.mxu0 0.0
        %896 = vmatmul.mubr.f32.gmra.mxu0 %v786
        %v897 = vpop.f32.mrf.mxu0
        %v898 = vadd.f32 %v753, %v897
        %v899 = vpop.f32.mrf.mxu0
        %900 = vmatprep.mubr.f32.mxu0 0.0
        %901 = vmatmul.mubr.f32.gmra.mxu0 %v789
        %v902 = vpop.f32.mrf.mxu0
        %v903 = vadd.f32 %v758, %v902
        %v904 = vpop.f32.mrf.mxu0
        %905 = vdwg.mxu0
        %v906 = vld [vmem:[#allocation2 + $0x2] sm:$0xff]
        %v907 = vld [vmem:[#allocation2 + $0x12] sm:$0xff]
        %v908 = vld [vmem:[#allocation2 + $0x22] sm:$0xff]
        %v909 = vld [vmem:[#allocation2 + $0x32] sm:$0xff]
        %v910 = vld [vmem:[#allocation2 + $0x42] sm:$0xff]
        %v911 = vld [vmem:[#allocation2 + $0x52] sm:$0xff]
        %v912 = vld [vmem:[#allocation2 + $0x62] sm:$0xff]
        %v913 = vld [vmem:[#allocation2 + $0x72] sm:$0xff]
        %v914 = vld [vmem:[#allocation2 + $0x82] sm:$0xff]
        %v915 = vld [vmem:[#allocation2 + $0x92] sm:$0xff]
        %s916 = scalar_lea.vmem [#allocation10], 128
        %v917 = vld [vmem:[%s916] sm:$0xff]
        %v918 = vld [vmem:[%s916 + $0x8] sm:$0xff]
        %v919 = vld [vmem:[%s916 + $0x10] sm:$0xff]
        %v920 = vld [vmem:[%s916 + $0x18] sm:$0xff]
        %v921 = vld [vmem:[%s916 + $0x20] sm:$0xff]
        %v922 = vld [vmem:[%s916 + $0x28] sm:$0xff]
        %v923 = vld [vmem:[%s916 + $0x30] sm:$0xff]
        %v924 = vld [vmem:[%s916 + $0x38] sm:$0xff]
        %v926 = vsel %vm541, %v906, 0
        %v929 = vsel %vm541, %v907, 0
        %v932 = vsel %vm541, %v908, 0
        %v935 = vsel %vm541, %v909, 0
        %v938 = vsel %vm541, %v910, 0
        %v941 = vsel %vm541, %v911, 0
        %v944 = vsel %vm541, %v912, 0
        %v947 = vsel %vm541, %v913, 0
        %v950 = vsel %vm541, %v914, 0
        %v953 = vsel %vm541, %v915, 0
        %955 = vmatprep.subr.mxu0 0.0
        %956 = vmatpush1.msra.mxu0 0.0
        %957 = vmatprep.subr.mxu0 0.0
        %958 = vmatpush1.msra.mxu0 0.0
        %959 = vmatprep.subr.mxu0 0.0
        %960 = vmatpush1.msra.mxu0 0.0
        %961 = vmatprep.subr.mxu0 0.0
        %962 = vmatpush1.msra.mxu0 0.0
        %963 = vmatprep.subr.mxu0 0.0
        %964 = vmatpush1.msra.mxu0 0.0
        %965 = vmatprep.subr.mxu0 0.0
        %966 = vmatpush1.msra.mxu0 0.0
        %967 = vmatprep.subr.mxu0 0.0
        %968 = vmatpush1.msra.mxu0 0.0
        %969 = vmatprep.subr.mxu0 0.0
        %970 = vmatpush1.msra.mxu0 0.0
        %971 = vmatprep.subr.mxu0 0.0
        %972 = vmatpush1.msra.mxu0 %v924
        %973 = vmatprep.subr.mxu0 0.0
        %974 = vmatpush1.msra.mxu0 %v923
        %975 = vmatprep.subr.mxu0 0.0
        %976 = vmatpush1.msra.mxu0 %v922
        %977 = vmatprep.subr.mxu0 0.0
        %978 = vmatpush1.msra.mxu0 %v921
        %979 = vmatprep.subr.mxu0 0.0
        %980 = vmatpush1.msra.mxu0 %v920
        %981 = vmatprep.subr.mxu0 0.0
        %982 = vmatpush1.msra.mxu0 %v919
        %983 = vmatprep.subr.mxu0 0.0
        %984 = vmatpush1.msra.mxu0 %v918
        %985 = vmatprep.subr.mxu0 0.0
        %986 = vmatpush1.msra.mxu0 %v917
        %987 = vmatprep.subr.mxu0 0.0
        %988 = vmatpush2.msra.mxu0 0.0
        %989 = vmatprep.subr.mxu0 0.0
        %990 = vmatpush2.msra.mxu0 0.0
        %991 = vmatprep.subr.mxu0 0.0
        %992 = vmatpush2.msra.mxu0 0.0
        %993 = vmatprep.subr.mxu0 0.0
        %994 = vmatpush2.msra.mxu0 0.0
        %995 = vmatprep.subr.mxu0 0.0
        %996 = vmatpush2.msra.mxu0 0.0
        %997 = vmatprep.subr.mxu0 0.0
        %998 = vmatpush2.msra.mxu0 0.0
        %999 = vmatprep.subr.mxu0 0.0
        %1000 = vmatpush2.msra.mxu0 0.0
        %1001 = vmatprep.subr.mxu0 0.0
        %1002 = vmatpush2.msra.mxu0 0.0
        %1003 = vmatprep.subr.mxu0 0.0
        %1004 = vmatpush2.msra.mxu0 0.0
        %1005 = vmatprep.subr.mxu0 0.0
        %1006 = vmatpush2.msra.mxu0 0.0
        %1007 = vmatprep.subr.mxu0 0.0
        %1008 = vmatpush2.msra.mxu0 0.0
        %1009 = vmatprep.subr.mxu0 0.0
        %1010 = vmatpush2.msra.mxu0 0.0
        %1011 = vmatprep.subr.mxu0 0.0
        %1012 = vmatpush2.msra.mxu0 0.0
        %1013 = vmatprep.subr.mxu0 0.0
        %1014 = vmatpush2.msra.mxu0 0.0
        %1015 = vmatprep.subr.mxu0 0.0
        %1016 = vmatpush2.msra.mxu0 0.0
        %1017 = vmatprep.subr.mxu0 0.0
        %1018 = vmatpush2.msra.mxu0 0.0
        %1019 = vmatprep.mubr.f32.mxu0 0.0
        %1020 = vmatmul.mubr.f32.gmra.mxu0 %v926
        %v1021 = vpop.f32.mrf.mxu0
        %v1022 = vadd.f32 0.0, %v1021
        %v1023 = vpop.f32.mrf.mxu0
        %1024 = vmatprep.mubr.f32.mxu0 0.0
        %1025 = vmatmul.mubr.f32.gmra.mxu0 %v929
        %v1026 = vpop.f32.mrf.mxu0
        %v1027 = vadd.f32 0.0, %v1026
        %v1028 = vpop.f32.mrf.mxu0
        %1029 = vmatprep.mubr.f32.mxu0 0.0
        %1030 = vmatmul.mubr.f32.gmra.mxu0 %v932
        %v1031 = vpop.f32.mrf.mxu0
        %v1032 = vadd.f32 0.0, %v1031
        %v1033 = vpop.f32.mrf.mxu0
        %1034 = vmatprep.mubr.f32.mxu0 0.0
        %1035 = vmatmul.mubr.f32.gmra.mxu0 %v935
        %v1036 = vpop.f32.mrf.mxu0
        %v1037 = vadd.f32 0.0, %v1036
        %v1038 = vpop.f32.mrf.mxu0
        %1039 = vmatprep.mubr.f32.mxu0 0.0
        %1040 = vmatmul.mubr.f32.gmra.mxu0 %v938
        %v1041 = vpop.f32.mrf.mxu0
        %v1042 = vadd.f32 0.0, %v1041
        %v1043 = vpop.f32.mrf.mxu0
        %1044 = vmatprep.mubr.f32.mxu0 0.0
        %1045 = vmatmul.mubr.f32.gmra.mxu0 %v941
        %v1046 = vpop.f32.mrf.mxu0
        %v1047 = vadd.f32 0.0, %v1046
        %v1048 = vpop.f32.mrf.mxu0
        %1049 = vmatprep.mubr.f32.mxu0 0.0
        %1050 = vmatmul.mubr.f32.gmra.mxu0 %v944
        %v1051 = vpop.f32.mrf.mxu0
        %v1052 = vadd.f32 0.0, %v1051
        %v1053 = vpop.f32.mrf.mxu0
        %1054 = vmatprep.mubr.f32.mxu0 0.0
        %1055 = vmatmul.mubr.f32.gmra.mxu0 %v947
        %v1056 = vpop.f32.mrf.mxu0
        %v1057 = vadd.f32 0.0, %v1056
        %v1058 = vpop.f32.mrf.mxu0
        %1059 = vmatprep.mubr.f32.mxu0 0.0
        %1060 = vmatmul.mubr.f32.gmra.mxu0 %v950
        %v1061 = vpop.f32.mrf.mxu0
        %v1062 = vadd.f32 0.0, %v1061
        %v1063 = vpop.f32.mrf.mxu0
        %1064 = vmatprep.mubr.f32.mxu0 0.0
        %1065 = vmatmul.mubr.f32.gmra.mxu0 %v953
        %v1066 = vpop.f32.mrf.mxu0
        %v1067 = vadd.f32 0.0, %v1066
        %v1068 = vpop.f32.mrf.mxu0
        %1069 = vdwg.mxu0
        %v1070 = vadd.f32 %v858, %v1022
        %v1071 = vadd.f32 %v863, %v1027
        %v1072 = vadd.f32 %v868, %v1032
        %v1073 = vadd.f32 %v873, %v1037
        %v1074 = vadd.f32 %v878, %v1042
        %v1075 = vadd.f32 %v883, %v1047
        %v1076 = vadd.f32 %v888, %v1052
        %v1077 = vadd.f32 %v893, %v1057
        %v1078 = vadd.f32 %v898, %v1062
        %v1079 = vadd.f32 %v903, %v1067
        %s1080 = scalar_lea.vmem [#allocation2], 16
        %v1081 = vld [vmem:[%s1080] sm:$0xff]
        %v1082 = vld [vmem:[%s1080 + $0x10] sm:$0xff]
        %v1083 = vld [vmem:[%s1080 + $0x20] sm:$0xff]
        %v1084 = vld [vmem:[%s1080 + $0x30] sm:$0xff]
        %v1085 = vld [vmem:[%s1080 + $0x40] sm:$0xff]
        %v1086 = vld [vmem:[%s1080 + $0x50] sm:$0xff]
        %v1087 = vld [vmem:[%s1080 + $0x60] sm:$0xff]
        %v1088 = vld [vmem:[%s1080 + $0x70] sm:$0xff]
        %v1089 = vld [vmem:[%s1080 + $0x80] sm:$0xff]
        %v1090 = vld [vmem:[%s1080 + $0x90] sm:$0xff]
        %s1091 = scalar_lea.vmem [#allocation10], 192
        %v1092 = vld [vmem:[%s1091] sm:$0xff]
        %v1093 = vld [vmem:[%s1091 + $0x8] sm:$0xff]
        %v1094 = vld [vmem:[%s1091 + $0x10] sm:$0xff]
        %v1095 = vld [vmem:[%s1091 + $0x18] sm:$0xff]
        %v1096 = vld [vmem:[%s1091 + $0x20] sm:$0xff]
        %v1097 = vld [vmem:[%s1091 + $0x28] sm:$0xff]
        %v1098 = vld [vmem:[%s1091 + $0x30] sm:$0xff]
        %v1099 = vld [vmem:[%s1091 + $0x38] sm:$0xff]
        %v1101 = vsel %vm541, %v1081, 0
        %v1104 = vsel %vm541, %v1082, 0
        %v1107 = vsel %vm541, %v1083, 0
        %v1110 = vsel %vm541, %v1084, 0
        %v1113 = vsel %vm541, %v1085, 0
        %v1116 = vsel %vm541, %v1086, 0
        %v1119 = vsel %vm541, %v1087, 0
        %v1122 = vsel %vm541, %v1088, 0
        %v1125 = vsel %vm541, %v1089, 0
        %v1128 = vsel %vm541, %v1090, 0
        %1130 = vmatprep.subr.mxu0 0.0
        %1131 = vmatpush1.msra.mxu0 0.0
        %1132 = vmatprep.subr.mxu0 0.0
        %1133 = vmatpush1.msra.mxu0 0.0
        %1134 = vmatprep.subr.mxu0 0.0
        %1135 = vmatpush1.msra.mxu0 0.0
        %1136 = vmatprep.subr.mxu0 0.0
        %1137 = vmatpush1.msra.mxu0 0.0
        %1138 = vmatprep.subr.mxu0 0.0
        %1139 = vmatpush1.msra.mxu0 0.0
        %1140 = vmatprep.subr.mxu0 0.0
        %1141 = vmatpush1.msra.mxu0 0.0
        %1142 = vmatprep.subr.mxu0 0.0
        %1143 = vmatpush1.msra.mxu0 0.0
        %1144 = vmatprep.subr.mxu0 0.0
        %1145 = vmatpush1.msra.mxu0 0.0
        %1146 = vmatprep.subr.mxu0 0.0
        %1147 = vmatpush1.msra.mxu0 %v1099
        %1148 = vmatprep.subr.mxu0 0.0
        %1149 = vmatpush1.msra.mxu0 %v1098
        %1150 = vmatprep.subr.mxu0 0.0
        %1151 = vmatpush1.msra.mxu0 %v1097
        %1152 = vmatprep.subr.mxu0 0.0
        %1153 = vmatpush1.msra.mxu0 %v1096
        %1154 = vmatprep.subr.mxu0 0.0
        %1155 = vmatpush1.msra.mxu0 %v1095
        %1156 = vmatprep.subr.mxu0 0.0
        %1157 = vmatpush1.msra.mxu0 %v1094
        %1158 = vmatprep.subr.mxu0 0.0
        %1159 = vmatpush1.msra.mxu0 %v1093
        %1160 = vmatprep.subr.mxu0 0.0
        %1161 = vmatpush1.msra.mxu0 %v1092
        %1162 = vmatprep.subr.mxu0 0.0
        %1163 = vmatpush2.msra.mxu0 0.0
        %1164 = vmatprep.subr.mxu0 0.0
        %1165 = vmatpush2.msra.mxu0 0.0
        %1166 = vmatprep.subr.mxu0 0.0
        %1167 = vmatpush2.msra.mxu0 0.0
        %1168 = vmatprep.subr.mxu0 0.0
        %1169 = vmatpush2.msra.mxu0 0.0
        %1170 = vmatprep.subr.mxu0 0.0
        %1171 = vmatpush2.msra.mxu0 0.0
        %1172 = vmatprep.subr.mxu0 0.0
        %1173 = vmatpush2.msra.mxu0 0.0
        %1174 = vmatprep.subr.mxu0 0.0
        %1175 = vmatpush2.msra.mxu0 0.0
        %1176 = vmatprep.subr.mxu0 0.0
        %1177 = vmatpush2.msra.mxu0 0.0
        %1178 = vmatprep.subr.mxu0 0.0
        %1179 = vmatpush2.msra.mxu0 0.0
        %1180 = vmatprep.subr.mxu0 0.0
        %1181 = vmatpush2.msra.mxu0 0.0
        %1182 = vmatprep.subr.mxu0 0.0
        %1183 = vmatpush2.msra.mxu0 0.0
        %1184 = vmatprep.subr.mxu0 0.0
        %1185 = vmatpush2.msra.mxu0 0.0
        %1186 = vmatprep.subr.mxu0 0.0
        %1187 = vmatpush2.msra.mxu0 0.0
        %1188 = vmatprep.subr.mxu0 0.0
        %1189 = vmatpush2.msra.mxu0 0.0
        %1190 = vmatprep.subr.mxu0 0.0
        %1191 = vmatpush2.msra.mxu0 0.0
        %1192 = vmatprep.subr.mxu0 0.0
        %1193 = vmatpush2.msra.mxu0 0.0
        %1194 = vmatprep.mubr.f32.mxu0 0.0
        %1195 = vmatmul.mubr.f32.gmra.mxu0 %v1101
        %v1196 = vpop.f32.mrf.mxu0
        %v1197 = vadd.f32 0.0, %v1196
        %v1198 = vpop.f32.mrf.mxu0
        %1199 = vmatprep.mubr.f32.mxu0 0.0
        %1200 = vmatmul.mubr.f32.gmra.mxu0 %v1104
        %v1201 = vpop.f32.mrf.mxu0
        %v1202 = vadd.f32 0.0, %v1201
        %v1203 = vpop.f32.mrf.mxu0
        %1204 = vmatprep.mubr.f32.mxu0 0.0
        %1205 = vmatmul.mubr.f32.gmra.mxu0 %v1107
        %v1206 = vpop.f32.mrf.mxu0
        %v1207 = vadd.f32 0.0, %v1206
        %v1208 = vpop.f32.mrf.mxu0
        %1209 = vmatprep.mubr.f32.mxu0 0.0
        %1210 = vmatmul.mubr.f32.gmra.mxu0 %v1110
        %v1211 = vpop.f32.mrf.mxu0
        %v1212 = vadd.f32 0.0, %v1211
        %v1213 = vpop.f32.mrf.mxu0
        %1214 = vmatprep.mubr.f32.mxu0 0.0
        %1215 = vmatmul.mubr.f32.gmra.mxu0 %v1113
        %v1216 = vpop.f32.mrf.mxu0
        %v1217 = vadd.f32 0.0, %v1216
        %v1218 = vpop.f32.mrf.mxu0
        %1219 = vmatprep.mubr.f32.mxu0 0.0
        %1220 = vmatmul.mubr.f32.gmra.mxu0 %v1116
        %v1221 = vpop.f32.mrf.mxu0
        %v1222 = vadd.f32 0.0, %v1221
        %v1223 = vpop.f32.mrf.mxu0
        %1224 = vmatprep.mubr.f32.mxu0 0.0
        %1225 = vmatmul.mubr.f32.gmra.mxu0 %v1119
        %v1226 = vpop.f32.mrf.mxu0
        %v1227 = vadd.f32 0.0, %v1226
        %v1228 = vpop.f32.mrf.mxu0
        %1229 = vmatprep.mubr.f32.mxu0 0.0
        %1230 = vmatmul.mubr.f32.gmra.mxu0 %v1122
        %v1231 = vpop.f32.mrf.mxu0
        %v1232 = vadd.f32 0.0, %v1231
        %v1233 = vpop.f32.mrf.mxu0
        %1234 = vmatprep.mubr.f32.mxu0 0.0
        %1235 = vmatmul.mubr.f32.gmra.mxu0 %v1125
        %v1236 = vpop.f32.mrf.mxu0
        %v1237 = vadd.f32 0.0, %v1236
        %v1238 = vpop.f32.mrf.mxu0
        %1239 = vmatprep.mubr.f32.mxu0 0.0
        %1240 = vmatmul.mubr.f32.gmra.mxu0 %v1128
        %v1241 = vpop.f32.mrf.mxu0
        %v1242 = vadd.f32 0.0, %v1241
        %v1243 = vpop.f32.mrf.mxu0
        %1244 = vdwg.mxu0
        %v1245 = vadd.f32 %v1070, %v1197
        %v1246 = vadd.f32 %v1071, %v1202
        %v1247 = vadd.f32 %v1072, %v1207
        %v1248 = vadd.f32 %v1073, %v1212
        %v1249 = vadd.f32 %v1074, %v1217
        %v1250 = vadd.f32 %v1075, %v1222
        %v1251 = vadd.f32 %v1076, %v1227
        %v1252 = vadd.f32 %v1077, %v1232
        %v1253 = vadd.f32 %v1078, %v1237
        %v1254 = vadd.f32 %v1079, %v1242
        %v1255 = vld [vmem:[%s1080 + $0x1] sm:$0xff]
        %v1256 = vld [vmem:[%s1080 + $0x11] sm:$0xff]
        %v1257 = vld [vmem:[%s1080 + $0x21] sm:$0xff]
        %v1258 = vld [vmem:[%s1080 + $0x31] sm:$0xff]
        %v1259 = vld [vmem:[%s1080 + $0x41] sm:$0xff]
        %v1260 = vld [vmem:[%s1080 + $0x51] sm:$0xff]
        %v1261 = vld [vmem:[%s1080 + $0x61] sm:$0xff]
        %v1262 = vld [vmem:[%s1080 + $0x71] sm:$0xff]
        %v1263 = vld [vmem:[%s1080 + $0x81] sm:$0xff]
        %v1264 = vld [vmem:[%s1080 + $0x91] sm:$0xff]
        %s1265 = scalar_lea.vmem [#allocation10], 256
        %v1266 = vld [vmem:[%s1265] sm:$0xff]
        %v1267 = vld [vmem:[%s1265 + $0x8] sm:$0xff]
        %v1268 = vld [vmem:[%s1265 + $0x10] sm:$0xff]
        %v1269 = vld [vmem:[%s1265 + $0x18] sm:$0xff]
        %v1270 = vld [vmem:[%s1265 + $0x20] sm:$0xff]
        %v1271 = vld [vmem:[%s1265 + $0x28] sm:$0xff]
        %v1272 = vld [vmem:[%s1265 + $0x30] sm:$0xff]
        %v1273 = vld [vmem:[%s1265 + $0x38] sm:$0xff]
        %v1275 = vsel %vm541, %v1255, 0
        %v1278 = vsel %vm541, %v1256, 0
        %v1281 = vsel %vm541, %v1257, 0
        %v1284 = vsel %vm541, %v1258, 0
        %v1287 = vsel %vm541, %v1259, 0
        %v1290 = vsel %vm541, %v1260, 0
        %v1293 = vsel %vm541, %v1261, 0
        %v1296 = vsel %vm541, %v1262, 0
        %v1299 = vsel %vm541, %v1263, 0
        %v1302 = vsel %vm541, %v1264, 0
        %1304 = vmatprep.subr.mxu0 0.0
        %1305 = vmatpush1.msra.mxu0 0.0
        %1306 = vmatprep.subr.mxu0 0.0
        %1307 = vmatpush1.msra.mxu0 0.0
        %1308 = vmatprep.subr.mxu0 0.0
        %1309 = vmatpush1.msra.mxu0 0.0
        %1310 = vmatprep.subr.mxu0 0.0
        %1311 = vmatpush1.msra.mxu0 0.0
        %1312 = vmatprep.subr.mxu0 0.0
        %1313 = vmatpush1.msra.mxu0 0.0
        %1314 = vmatprep.subr.mxu0 0.0
        %1315 = vmatpush1.msra.mxu0 0.0
        %1316 = vmatprep.subr.mxu0 0.0
        %1317 = vmatpush1.msra.mxu0 0.0
        %1318 = vmatprep.subr.mxu0 0.0
        %1319 = vmatpush1.msra.mxu0 0.0
        %1320 = vmatprep.subr.mxu0 0.0
        %1321 = vmatpush1.msra.mxu0 %v1273
        %1322 = vmatprep.subr.mxu0 0.0
        %1323 = vmatpush1.msra.mxu0 %v1272
        %1324 = vmatprep.subr.mxu0 0.0
        %1325 = vmatpush1.msra.mxu0 %v1271
        %1326 = vmatprep.subr.mxu0 0.0
        %1327 = vmatpush1.msra.mxu0 %v1270
        %1328 = vmatprep.subr.mxu0 0.0
        %1329 = vmatpush1.msra.mxu0 %v1269
        %1330 = vmatprep.subr.mxu0 0.0
        %1331 = vmatpush1.msra.mxu0 %v1268
        %1332 = vmatprep.subr.mxu0 0.0
        %1333 = vmatpush1.msra.mxu0 %v1267
        %1334 = vmatprep.subr.mxu0 0.0
        %1335 = vmatpush1.msra.mxu0 %v1266
        %1336 = vmatprep.subr.mxu0 0.0
        %1337 = vmatpush2.msra.mxu0 0.0
        %1338 = vmatprep.subr.mxu0 0.0
        %1339 = vmatpush2.msra.mxu0 0.0
        %1340 = vmatprep.subr.mxu0 0.0
        %1341 = vmatpush2.msra.mxu0 0.0
        %1342 = vmatprep.subr.mxu0 0.0
        %1343 = vmatpush2.msra.mxu0 0.0
        %1344 = vmatprep.subr.mxu0 0.0
        %1345 = vmatpush2.msra.mxu0 0.0
        %1346 = vmatprep.subr.mxu0 0.0
        %1347 = vmatpush2.msra.mxu0 0.0
        %1348 = vmatprep.subr.mxu0 0.0
        %1349 = vmatpush2.msra.mxu0 0.0
        %1350 = vmatprep.subr.mxu0 0.0
        %1351 = vmatpush2.msra.mxu0 0.0
        %1352 = vmatprep.subr.mxu0 0.0
        %1353 = vmatpush2.msra.mxu0 0.0
        %1354 = vmatprep.subr.mxu0 0.0
        %1355 = vmatpush2.msra.mxu0 0.0
        %1356 = vmatprep.subr.mxu0 0.0
        %1357 = vmatpush2.msra.mxu0 0.0
        %1358 = vmatprep.subr.mxu0 0.0
        %1359 = vmatpush2.msra.mxu0 0.0
        %1360 = vmatprep.subr.mxu0 0.0
        %1361 = vmatpush2.msra.mxu0 0.0
        %1362 = vmatprep.subr.mxu0 0.0
        %1363 = vmatpush2.msra.mxu0 0.0
        %1364 = vmatprep.subr.mxu0 0.0
        %1365 = vmatpush2.msra.mxu0 0.0
        %1366 = vmatprep.subr.mxu0 0.0
        %1367 = vmatpush2.msra.mxu0 0.0
        %1368 = vmatprep.mubr.f32.mxu0 0.0
        %1369 = vmatmul.mubr.f32.gmra.mxu0 %v1275
        %v1370 = vpop.f32.mrf.mxu0
        %v1371 = vadd.f32 0.0, %v1370
        %v1372 = vpop.f32.mrf.mxu0
        %1373 = vmatprep.mubr.f32.mxu0 0.0
        %1374 = vmatmul.mubr.f32.gmra.mxu0 %v1278
        %v1375 = vpop.f32.mrf.mxu0
        %v1376 = vadd.f32 0.0, %v1375
        %v1377 = vpop.f32.mrf.mxu0
        %1378 = vmatprep.mubr.f32.mxu0 0.0
        %1379 = vmatmul.mubr.f32.gmra.mxu0 %v1281
        %v1380 = vpop.f32.mrf.mxu0
        %v1381 = vadd.f32 0.0, %v1380
        %v1382 = vpop.f32.mrf.mxu0
        %1383 = vmatprep.mubr.f32.mxu0 0.0
        %1384 = vmatmul.mubr.f32.gmra.mxu0 %v1284
        %v1385 = vpop.f32.mrf.mxu0
        %v1386 = vadd.f32 0.0, %v1385
        %v1387 = vpop.f32.mrf.mxu0
        %1388 = vmatprep.mubr.f32.mxu0 0.0
        %1389 = vmatmul.mubr.f32.gmra.mxu0 %v1287
        %v1390 = vpop.f32.mrf.mxu0
        %v1391 = vadd.f32 0.0, %v1390
        %v1392 = vpop.f32.mrf.mxu0
        %1393 = vmatprep.mubr.f32.mxu0 0.0
        %1394 = vmatmul.mubr.f32.gmra.mxu0 %v1290
        %v1395 = vpop.f32.mrf.mxu0
        %v1396 = vadd.f32 0.0, %v1395
        %v1397 = vpop.f32.mrf.mxu0
        %1398 = vmatprep.mubr.f32.mxu0 0.0
        %1399 = vmatmul.mubr.f32.gmra.mxu0 %v1293
        %v1400 = vpop.f32.mrf.mxu0
        %v1401 = vadd.f32 0.0, %v1400
        %v1402 = vpop.f32.mrf.mxu0
        %1403 = vmatprep.mubr.f32.mxu0 0.0
        %1404 = vmatmul.mubr.f32.gmra.mxu0 %v1296
        %v1405 = vpop.f32.mrf.mxu0
        %v1406 = vadd.f32 0.0, %v1405
        %v1407 = vpop.f32.mrf.mxu0
        %1408 = vmatprep.mubr.f32.mxu0 0.0
        %1409 = vmatmul.mubr.f32.gmra.mxu0 %v1299
        %v1410 = vpop.f32.mrf.mxu0
        %v1411 = vadd.f32 0.0, %v1410
        %v1412 = vpop.f32.mrf.mxu0
        %1413 = vmatprep.mubr.f32.mxu0 0.0
        %1414 = vmatmul.mubr.f32.gmra.mxu0 %v1302
        %v1415 = vpop.f32.mrf.mxu0
        %v1416 = vadd.f32 0.0, %v1415
        %v1417 = vpop.f32.mrf.mxu0
        %1418 = vdwg.mxu0
        %v1419 = vadd.f32 %v1245, %v1371
        %v1420 = vadd.f32 %v1246, %v1376
        %v1421 = vadd.f32 %v1247, %v1381
        %v1422 = vadd.f32 %v1248, %v1386
        %v1423 = vadd.f32 %v1249, %v1391
        %v1424 = vadd.f32 %v1250, %v1396
        %v1425 = vadd.f32 %v1251, %v1401
        %v1426 = vadd.f32 %v1252, %v1406
        %v1427 = vadd.f32 %v1253, %v1411
        %v1428 = vadd.f32 %v1254, %v1416
        %v1429 = vld [vmem:[%s1080 + $0x2] sm:$0xff]
        %v1430 = vld [vmem:[%s1080 + $0x12] sm:$0xff]
        %v1431 = vld [vmem:[%s1080 + $0x22] sm:$0xff]
        %v1432 = vld [vmem:[%s1080 + $0x32] sm:$0xff]
        %v1433 = vld [vmem:[%s1080 + $0x42] sm:$0xff]
        %v1434 = vld [vmem:[%s1080 + $0x52] sm:$0xff]
        %v1435 = vld [vmem:[%s1080 + $0x62] sm:$0xff]
        %v1436 = vld [vmem:[%s1080 + $0x72] sm:$0xff]
        %v1437 = vld [vmem:[%s1080 + $0x82] sm:$0xff]
        %v1438 = vld [vmem:[%s1080 + $0x92] sm:$0xff]
        %s1439 = scalar_lea.vmem [#allocation10], 320
        %v1440 = vld [vmem:[%s1439] sm:$0xff]
        %v1441 = vld [vmem:[%s1439 + $0x8] sm:$0xff]
        %v1442 = vld [vmem:[%s1439 + $0x10] sm:$0xff]
        %v1443 = vld [vmem:[%s1439 + $0x18] sm:$0xff]
        %v1444 = vld [vmem:[%s1439 + $0x20] sm:$0xff]
        %v1445 = vld [vmem:[%s1439 + $0x28] sm:$0xff]
        %v1446 = vld [vmem:[%s1439 + $0x30] sm:$0xff]
        %v1447 = vld [vmem:[%s1439 + $0x38] sm:$0xff]
        %v1449 = vsel %vm541, %v1429, 0
        %v1452 = vsel %vm541, %v1430, 0
        %v1455 = vsel %vm541, %v1431, 0
        %v1458 = vsel %vm541, %v1432, 0
        %v1461 = vsel %vm541, %v1433, 0
        %v1464 = vsel %vm541, %v1434, 0
        %v1467 = vsel %vm541, %v1435, 0
        %v1470 = vsel %vm541, %v1436, 0
        %v1473 = vsel %vm541, %v1437, 0
        %v1476 = vsel %vm541, %v1438, 0
        %1478 = vmatprep.subr.mxu0 0.0
        %1479 = vmatpush1.msra.mxu0 0.0
        %1480 = vmatprep.subr.mxu0 0.0
        %1481 = vmatpush1.msra.mxu0 0.0
        %1482 = vmatprep.subr.mxu0 0.0
        %1483 = vmatpush1.msra.mxu0 0.0
        %1484 = vmatprep.subr.mxu0 0.0
        %1485 = vmatpush1.msra.mxu0 0.0
        %1486 = vmatprep.subr.mxu0 0.0
        %1487 = vmatpush1.msra.mxu0 0.0
        %1488 = vmatprep.subr.mxu0 0.0
        %1489 = vmatpush1.msra.mxu0 0.0
        %1490 = vmatprep.subr.mxu0 0.0
        %1491 = vmatpush1.msra.mxu0 0.0
        %1492 = vmatprep.subr.mxu0 0.0
        %1493 = vmatpush1.msra.mxu0 0.0
        %1494 = vmatprep.subr.mxu0 0.0
        %1495 = vmatpush1.msra.mxu0 %v1447
        %1496 = vmatprep.subr.mxu0 0.0
        %1497 = vmatpush1.msra.mxu0 %v1446
        %1498 = vmatprep.subr.mxu0 0.0
        %1499 = vmatpush1.msra.mxu0 %v1445
        %1500 = vmatprep.subr.mxu0 0.0
        %1501 = vmatpush1.msra.mxu0 %v1444
        %1502 = vmatprep.subr.mxu0 0.0
        %1503 = vmatpush1.msra.mxu0 %v1443
        %1504 = vmatprep.subr.mxu0 0.0
        %1505 = vmatpush1.msra.mxu0 %v1442
        %1506 = vmatprep.subr.mxu0 0.0
        %1507 = vmatpush1.msra.mxu0 %v1441
        %1508 = vmatprep.subr.mxu0 0.0
        %1509 = vmatpush1.msra.mxu0 %v1440
        %1510 = vmatprep.subr.mxu0 0.0
        %1511 = vmatpush2.msra.mxu0 0.0
        %1512 = vmatprep.subr.mxu0 0.0
        %1513 = vmatpush2.msra.mxu0 0.0
        %1514 = vmatprep.subr.mxu0 0.0
        %1515 = vmatpush2.msra.mxu0 0.0
        %1516 = vmatprep.subr.mxu0 0.0
        %1517 = vmatpush2.msra.mxu0 0.0
        %1518 = vmatprep.subr.mxu0 0.0
        %1519 = vmatpush2.msra.mxu0 0.0
        %1520 = vmatprep.subr.mxu0 0.0
        %1521 = vmatpush2.msra.mxu0 0.0
        %1522 = vmatprep.subr.mxu0 0.0
        %1523 = vmatpush2.msra.mxu0 0.0
        %1524 = vmatprep.subr.mxu0 0.0
        %1525 = vmatpush2.msra.mxu0 0.0
        %1526 = vmatprep.subr.mxu0 0.0
        %1527 = vmatpush2.msra.mxu0 0.0
        %1528 = vmatprep.subr.mxu0 0.0
        %1529 = vmatpush2.msra.mxu0 0.0
        %1530 = vmatprep.subr.mxu0 0.0
        %1531 = vmatpush2.msra.mxu0 0.0
        %1532 = vmatprep.subr.mxu0 0.0
        %1533 = vmatpush2.msra.mxu0 0.0
        %1534 = vmatprep.subr.mxu0 0.0
        %1535 = vmatpush2.msra.mxu0 0.0
        %1536 = vmatprep.subr.mxu0 0.0
        %1537 = vmatpush2.msra.mxu0 0.0
        %1538 = vmatprep.subr.mxu0 0.0
        %1539 = vmatpush2.msra.mxu0 0.0
        %1540 = vmatprep.subr.mxu0 0.0
        %1541 = vmatpush2.msra.mxu0 0.0
        %1542 = vmatprep.mubr.f32.mxu0 0.0
        %1543 = vmatmul.mubr.f32.gmra.mxu0 %v1449
        %v1544 = vpop.f32.mrf.mxu0
        %v1545 = vadd.f32 0.0, %v1544
        %v1546 = vpop.f32.mrf.mxu0
        %1547 = vmatprep.mubr.f32.mxu0 0.0
        %1548 = vmatmul.mubr.f32.gmra.mxu0 %v1452
        %v1549 = vpop.f32.mrf.mxu0
        %v1550 = vadd.f32 0.0, %v1549
        %v1551 = vpop.f32.mrf.mxu0
        %1552 = vmatprep.mubr.f32.mxu0 0.0
        %1553 = vmatmul.mubr.f32.gmra.mxu0 %v1455
        %v1554 = vpop.f32.mrf.mxu0
        %v1555 = vadd.f32 0.0, %v1554
        %v1556 = vpop.f32.mrf.mxu0
        %1557 = vmatprep.mubr.f32.mxu0 0.0
        %1558 = vmatmul.mubr.f32.gmra.mxu0 %v1458
        %v1559 = vpop.f32.mrf.mxu0
        %v1560 = vadd.f32 0.0, %v1559
        %v1561 = vpop.f32.mrf.mxu0
        %1562 = vmatprep.mubr.f32.mxu0 0.0
        %1563 = vmatmul.mubr.f32.gmra.mxu0 %v1461
        %v1564 = vpop.f32.mrf.mxu0
        %v1565 = vadd.f32 0.0, %v1564
        %v1566 = vpop.f32.mrf.mxu0
        %1567 = vmatprep.mubr.f32.mxu0 0.0
        %1568 = vmatmul.mubr.f32.gmra.mxu0 %v1464
        %v1569 = vpop.f32.mrf.mxu0
        %v1570 = vadd.f32 0.0, %v1569
        %v1571 = vpop.f32.mrf.mxu0
        %1572 = vmatprep.mubr.f32.mxu0 0.0
        %1573 = vmatmul.mubr.f32.gmra.mxu0 %v1467
        %v1574 = vpop.f32.mrf.mxu0
        %v1575 = vadd.f32 0.0, %v1574
        %v1576 = vpop.f32.mrf.mxu0
        %1577 = vmatprep.mubr.f32.mxu0 0.0
        %1578 = vmatmul.mubr.f32.gmra.mxu0 %v1470
        %v1579 = vpop.f32.mrf.mxu0
        %v1580 = vadd.f32 0.0, %v1579
        %v1581 = vpop.f32.mrf.mxu0
        %1582 = vmatprep.mubr.f32.mxu0 0.0
        %1583 = vmatmul.mubr.f32.gmra.mxu0 %v1473
        %v1584 = vpop.f32.mrf.mxu0
        %v1585 = vadd.f32 0.0, %v1584
        %v1586 = vpop.f32.mrf.mxu0
        %1587 = vmatprep.mubr.f32.mxu0 0.0
        %1588 = vmatmul.mubr.f32.gmra.mxu0 %v1476
        %v1589 = vpop.f32.mrf.mxu0
        %v1590 = vadd.f32 0.0, %v1589
        %v1591 = vpop.f32.mrf.mxu0
        %1592 = vdwg.mxu0
        %v1593 = vadd.f32 %v1419, %v1545
        %v1594 = vadd.f32 %v1420, %v1550
        %v1595 = vadd.f32 %v1421, %v1555
        %v1596 = vadd.f32 %v1422, %v1560
        %v1597 = vadd.f32 %v1423, %v1565
        %v1598 = vadd.f32 %v1424, %v1570
        %v1599 = vadd.f32 %v1425, %v1575
        %v1600 = vadd.f32 %v1426, %v1580
        %v1601 = vadd.f32 %v1427, %v1585
        %v1602 = vadd.f32 %v1428, %v1590
        %v1603 = vld [vmem:[%s540] sm:$0xff]
        %v1604 = vld [vmem:[%s540 + $0x10] sm:$0xff]
        %v1605 = vld [vmem:[%s540 + $0x20] sm:$0xff]
        %v1606 = vld [vmem:[%s540 + $0x30] sm:$0xff]
        %v1607 = vld [vmem:[%s540 + $0x40] sm:$0xff]
        %v1608 = vld [vmem:[%s540 + $0x50] sm:$0xff]
        %v1609 = vld [vmem:[%s540 + $0x60] sm:$0xff]
        %v1610 = vld [vmem:[%s540 + $0x70] sm:$0xff]
        %v1611 = vld [vmem:[%s540 + $0x80] sm:$0xff]
        %v1612 = vld [vmem:[%s540 + $0x90] sm:$0xff]
        %s1613 = scalar_lea.vmem [#allocation10], 384
        %v1614 = vld [vmem:[%s1613] sm:$0xff]
        %v1615 = vld [vmem:[%s1613 + $0x8] sm:$0xff]
        %v1616 = vld [vmem:[%s1613 + $0x10] sm:$0xff]
        %v1617 = vld [vmem:[%s1613 + $0x18] sm:$0xff]
        %v1618 = vld [vmem:[%s1613 + $0x20] sm:$0xff]
        %v1619 = vld [vmem:[%s1613 + $0x28] sm:$0xff]
        %v1620 = vld [vmem:[%s1613 + $0x30] sm:$0xff]
        %v1621 = vld [vmem:[%s1613 + $0x38] sm:$0xff]
        %v1623 = vsel %vm541, %v1603, 0
        %v1626 = vsel %vm541, %v1604, 0
        %v1629 = vsel %vm541, %v1605, 0
        %v1632 = vsel %vm541, %v1606, 0
        %v1635 = vsel %vm541, %v1607, 0
        %v1638 = vsel %vm541, %v1608, 0
        %v1641 = vsel %vm541, %v1609, 0
        %v1644 = vsel %vm541, %v1610, 0
        %v1647 = vsel %vm541, %v1611, 0
        %v1650 = vsel %vm541, %v1612, 0
        %1652 = vmatprep.subr.mxu0 0.0
        %1653 = vmatpush1.msra.mxu0 0.0
        %1654 = vmatprep.subr.mxu0 0.0
        %1655 = vmatpush1.msra.mxu0 0.0
        %1656 = vmatprep.subr.mxu0 0.0
        %1657 = vmatpush1.msra.mxu0 0.0
        %1658 = vmatprep.subr.mxu0 0.0
        %1659 = vmatpush1.msra.mxu0 0.0
        %1660 = vmatprep.subr.mxu0 0.0
        %1661 = vmatpush1.msra.mxu0 0.0
        %1662 = vmatprep.subr.mxu0 0.0
        %1663 = vmatpush1.msra.mxu0 0.0
        %1664 = vmatprep.subr.mxu0 0.0
        %1665 = vmatpush1.msra.mxu0 0.0
        %1666 = vmatprep.subr.mxu0 0.0
        %1667 = vmatpush1.msra.mxu0 0.0
        %1668 = vmatprep.subr.mxu0 0.0
        %1669 = vmatpush1.msra.mxu0 %v1621
        %1670 = vmatprep.subr.mxu0 0.0
        %1671 = vmatpush1.msra.mxu0 %v1620
        %1672 = vmatprep.subr.mxu0 0.0
        %1673 = vmatpush1.msra.mxu0 %v1619
        %1674 = vmatprep.subr.mxu0 0.0
        %1675 = vmatpush1.msra.mxu0 %v1618
        %1676 = vmatprep.subr.mxu0 0.0
        %1677 = vmatpush1.msra.mxu0 %v1617
        %1678 = vmatprep.subr.mxu0 0.0
        %1679 = vmatpush1.msra.mxu0 %v1616
        %1680 = vmatprep.subr.mxu0 0.0
        %1681 = vmatpush1.msra.mxu0 %v1615
        %1682 = vmatprep.subr.mxu0 0.0
        %1683 = vmatpush1.msra.mxu0 %v1614
        %1684 = vmatprep.subr.mxu0 0.0
        %1685 = vmatpush2.msra.mxu0 0.0
        %1686 = vmatprep.subr.mxu0 0.0
        %1687 = vmatpush2.msra.mxu0 0.0
        %1688 = vmatprep.subr.mxu0 0.0
        %1689 = vmatpush2.msra.mxu0 0.0
        %1690 = vmatprep.subr.mxu0 0.0
        %1691 = vmatpush2.msra.mxu0 0.0
        %1692 = vmatprep.subr.mxu0 0.0
        %1693 = vmatpush2.msra.mxu0 0.0
        %1694 = vmatprep.subr.mxu0 0.0
        %1695 = vmatpush2.msra.mxu0 0.0
        %1696 = vmatprep.subr.mxu0 0.0
        %1697 = vmatpush2.msra.mxu0 0.0
        %1698 = vmatprep.subr.mxu0 0.0
        %1699 = vmatpush2.msra.mxu0 0.0
        %1700 = vmatprep.subr.mxu0 0.0
        %1701 = vmatpush2.msra.mxu0 0.0
        %1702 = vmatprep.subr.mxu0 0.0
        %1703 = vmatpush2.msra.mxu0 0.0
        %1704 = vmatprep.subr.mxu0 0.0
        %1705 = vmatpush2.msra.mxu0 0.0
        %1706 = vmatprep.subr.mxu0 0.0
        %1707 = vmatpush2.msra.mxu0 0.0
        %1708 = vmatprep.subr.mxu0 0.0
        %1709 = vmatpush2.msra.mxu0 0.0
        %1710 = vmatprep.subr.mxu0 0.0
        %1711 = vmatpush2.msra.mxu0 0.0
        %1712 = vmatprep.subr.mxu0 0.0
        %1713 = vmatpush2.msra.mxu0 0.0
        %1714 = vmatprep.subr.mxu0 0.0
        %1715 = vmatpush2.msra.mxu0 0.0
        %1716 = vmatprep.mubr.f32.mxu0 0.0
        %1717 = vmatmul.mubr.f32.gmra.mxu0 %v1623
        %v1718 = vpop.f32.mrf.mxu0
        %v1719 = vadd.f32 0.0, %v1718
        %v1720 = vpop.f32.mrf.mxu0
        %1721 = vmatprep.mubr.f32.mxu0 0.0
        %1722 = vmatmul.mubr.f32.gmra.mxu0 %v1626
        %v1723 = vpop.f32.mrf.mxu0
        %v1724 = vadd.f32 0.0, %v1723
        %v1725 = vpop.f32.mrf.mxu0
        %1726 = vmatprep.mubr.f32.mxu0 0.0
        %1727 = vmatmul.mubr.f32.gmra.mxu0 %v1629
        %v1728 = vpop.f32.mrf.mxu0
        %v1729 = vadd.f32 0.0, %v1728
        %v1730 = vpop.f32.mrf.mxu0
        %1731 = vmatprep.mubr.f32.mxu0 0.0
        %1732 = vmatmul.mubr.f32.gmra.mxu0 %v1632
        %v1733 = vpop.f32.mrf.mxu0
        %v1734 = vadd.f32 0.0, %v1733
        %v1735 = vpop.f32.mrf.mxu0
        %1736 = vmatprep.mubr.f32.mxu0 0.0
        %1737 = vmatmul.mubr.f32.gmra.mxu0 %v1635
        %v1738 = vpop.f32.mrf.mxu0
        %v1739 = vadd.f32 0.0, %v1738
        %v1740 = vpop.f32.mrf.mxu0
        %1741 = vmatprep.mubr.f32.mxu0 0.0
        %1742 = vmatmul.mubr.f32.gmra.mxu0 %v1638
        %v1743 = vpop.f32.mrf.mxu0
        %v1744 = vadd.f32 0.0, %v1743
        %v1745 = vpop.f32.mrf.mxu0
        %1746 = vmatprep.mubr.f32.mxu0 0.0
        %1747 = vmatmul.mubr.f32.gmra.mxu0 %v1641
        %v1748 = vpop.f32.mrf.mxu0
        %v1749 = vadd.f32 0.0, %v1748
        %v1750 = vpop.f32.mrf.mxu0
        %1751 = vmatprep.mubr.f32.mxu0 0.0
        %1752 = vmatmul.mubr.f32.gmra.mxu0 %v1644
        %v1753 = vpop.f32.mrf.mxu0
        %v1754 = vadd.f32 0.0, %v1753
        %v1755 = vpop.f32.mrf.mxu0
        %1756 = vmatprep.mubr.f32.mxu0 0.0
        %1757 = vmatmul.mubr.f32.gmra.mxu0 %v1647
        %v1758 = vpop.f32.mrf.mxu0
        %v1759 = vadd.f32 0.0, %v1758
        %v1760 = vpop.f32.mrf.mxu0
        %1761 = vmatprep.mubr.f32.mxu0 0.0
        %1762 = vmatmul.mubr.f32.gmra.mxu0 %v1650
        %v1763 = vpop.f32.mrf.mxu0
        %v1764 = vadd.f32 0.0, %v1763
        %v1765 = vpop.f32.mrf.mxu0
        %1766 = vdwg.mxu0
        %v1767 = vadd.f32 %v1593, %v1719
        %v1768 = vadd.f32 %v1594, %v1724
        %v1769 = vadd.f32 %v1595, %v1729
        %v1770 = vadd.f32 %v1596, %v1734
        %v1771 = vadd.f32 %v1597, %v1739
        %v1772 = vadd.f32 %v1598, %v1744
        %v1773 = vadd.f32 %v1599, %v1749
        %v1774 = vadd.f32 %v1600, %v1754
        %v1775 = vadd.f32 %v1601, %v1759
        %v1776 = vadd.f32 %v1602, %v1764
        %v1777 = vld [vmem:[%s540 + $0x1] sm:$0xff]
        %v1778 = vld [vmem:[%s540 + $0x11] sm:$0xff]
        %v1779 = vld [vmem:[%s540 + $0x21] sm:$0xff]
        %v1780 = vld [vmem:[%s540 + $0x31] sm:$0xff]
        %v1781 = vld [vmem:[%s540 + $0x41] sm:$0xff]
        %v1782 = vld [vmem:[%s540 + $0x51] sm:$0xff]
        %v1783 = vld [vmem:[%s540 + $0x61] sm:$0xff]
        %v1784 = vld [vmem:[%s540 + $0x71] sm:$0xff]
        %v1785 = vld [vmem:[%s540 + $0x81] sm:$0xff]
        %v1786 = vld [vmem:[%s540 + $0x91] sm:$0xff]
        %s1787 = scalar_lea.vmem [#allocation10], 448
        %v1788 = vld [vmem:[%s1787] sm:$0xff]
        %v1789 = vld [vmem:[%s1787 + $0x8] sm:$0xff]
        %v1790 = vld [vmem:[%s1787 + $0x10] sm:$0xff]
        %v1791 = vld [vmem:[%s1787 + $0x18] sm:$0xff]
        %v1792 = vld [vmem:[%s1787 + $0x20] sm:$0xff]
        %v1793 = vld [vmem:[%s1787 + $0x28] sm:$0xff]
        %v1794 = vld [vmem:[%s1787 + $0x30] sm:$0xff]
        %v1795 = vld [vmem:[%s1787 + $0x38] sm:$0xff]
        %v1797 = vsel %vm541, %v1777, 0
        %v1800 = vsel %vm541, %v1778, 0
        %v1803 = vsel %vm541, %v1779, 0
        %v1806 = vsel %vm541, %v1780, 0
        %v1809 = vsel %vm541, %v1781, 0
        %v1812 = vsel %vm541, %v1782, 0
        %v1815 = vsel %vm541, %v1783, 0
        %v1818 = vsel %vm541, %v1784, 0
        %v1821 = vsel %vm541, %v1785, 0
        %v1824 = vsel %vm541, %v1786, 0
        %1826 = vmatprep.subr.mxu0 0.0
        %1827 = vmatpush1.msra.mxu0 0.0
        %1828 = vmatprep.subr.mxu0 0.0
        %1829 = vmatpush1.msra.mxu0 0.0
        %1830 = vmatprep.subr.mxu0 0.0
        %1831 = vmatpush1.msra.mxu0 0.0
        %1832 = vmatprep.subr.mxu0 0.0
        %1833 = vmatpush1.msra.mxu0 0.0
        %1834 = vmatprep.subr.mxu0 0.0
        %1835 = vmatpush1.msra.mxu0 0.0
        %1836 = vmatprep.subr.mxu0 0.0
        %1837 = vmatpush1.msra.mxu0 0.0
        %1838 = vmatprep.subr.mxu0 0.0
        %1839 = vmatpush1.msra.mxu0 0.0
        %1840 = vmatprep.subr.mxu0 0.0
        %1841 = vmatpush1.msra.mxu0 0.0
        %1842 = vmatprep.subr.mxu0 0.0
        %1843 = vmatpush1.msra.mxu0 %v1795
        %1844 = vmatprep.subr.mxu0 0.0
        %1845 = vmatpush1.msra.mxu0 %v1794
        %1846 = vmatprep.subr.mxu0 0.0
        %1847 = vmatpush1.msra.mxu0 %v1793
        %1848 = vmatprep.subr.mxu0 0.0
        %1849 = vmatpush1.msra.mxu0 %v1792
        %1850 = vmatprep.subr.mxu0 0.0
        %1851 = vmatpush1.msra.mxu0 %v1791
        %1852 = vmatprep.subr.mxu0 0.0
        %1853 = vmatpush1.msra.mxu0 %v1790
        %1854 = vmatprep.subr.mxu0 0.0
        %1855 = vmatpush1.msra.mxu0 %v1789
        %1856 = vmatprep.subr.mxu0 0.0
        %1857 = vmatpush1.msra.mxu0 %v1788
        %1858 = vmatprep.subr.mxu0 0.0
        %1859 = vmatpush2.msra.mxu0 0.0
        %1860 = vmatprep.subr.mxu0 0.0
        %1861 = vmatpush2.msra.mxu0 0.0
        %1862 = vmatprep.subr.mxu0 0.0
        %1863 = vmatpush2.msra.mxu0 0.0
        %1864 = vmatprep.subr.mxu0 0.0
        %1865 = vmatpush2.msra.mxu0 0.0
        %1866 = vmatprep.subr.mxu0 0.0
        %1867 = vmatpush2.msra.mxu0 0.0
        %1868 = vmatprep.subr.mxu0 0.0
        %1869 = vmatpush2.msra.mxu0 0.0
        %1870 = vmatprep.subr.mxu0 0.0
        %1871 = vmatpush2.msra.mxu0 0.0
        %1872 = vmatprep.subr.mxu0 0.0
        %1873 = vmatpush2.msra.mxu0 0.0
        %1874 = vmatprep.subr.mxu0 0.0
        %1875 = vmatpush2.msra.mxu0 0.0
        %1876 = vmatprep.subr.mxu0 0.0
        %1877 = vmatpush2.msra.mxu0 0.0
        %1878 = vmatprep.subr.mxu0 0.0
        %1879 = vmatpush2.msra.mxu0 0.0
        %1880 = vmatprep.subr.mxu0 0.0
        %1881 = vmatpush2.msra.mxu0 0.0
        %1882 = vmatprep.subr.mxu0 0.0
        %1883 = vmatpush2.msra.mxu0 0.0
        %1884 = vmatprep.subr.mxu0 0.0
        %1885 = vmatpush2.msra.mxu0 0.0
        %1886 = vmatprep.subr.mxu0 0.0
        %1887 = vmatpush2.msra.mxu0 0.0
        %1888 = vmatprep.subr.mxu0 0.0
        %1889 = vmatpush2.msra.mxu0 0.0
        %1890 = vmatprep.mubr.f32.mxu0 0.0
        %1891 = vmatmul.mubr.f32.gmra.mxu0 %v1797
        %v1892 = vpop.f32.mrf.mxu0
        %v1893 = vadd.f32 0.0, %v1892
        %v1894 = vpop.f32.mrf.mxu0
        %1895 = vmatprep.mubr.f32.mxu0 0.0
        %1896 = vmatmul.mubr.f32.gmra.mxu0 %v1800
        %v1897 = vpop.f32.mrf.mxu0
        %v1898 = vadd.f32 0.0, %v1897
        %v1899 = vpop.f32.mrf.mxu0
        %1900 = vmatprep.mubr.f32.mxu0 0.0
        %1901 = vmatmul.mubr.f32.gmra.mxu0 %v1803
        %v1902 = vpop.f32.mrf.mxu0
        %v1903 = vadd.f32 0.0, %v1902
        %v1904 = vpop.f32.mrf.mxu0
        %1905 = vmatprep.mubr.f32.mxu0 0.0
        %1906 = vmatmul.mubr.f32.gmra.mxu0 %v1806
        %v1907 = vpop.f32.mrf.mxu0
        %v1908 = vadd.f32 0.0, %v1907
        %v1909 = vpop.f32.mrf.mxu0
        %1910 = vmatprep.mubr.f32.mxu0 0.0
        %1911 = vmatmul.mubr.f32.gmra.mxu0 %v1809
        %v1912 = vpop.f32.mrf.mxu0
        %v1913 = vadd.f32 0.0, %v1912
        %v1914 = vpop.f32.mrf.mxu0
        %1915 = vmatprep.mubr.f32.mxu0 0.0
        %1916 = vmatmul.mubr.f32.gmra.mxu0 %v1812
        %v1917 = vpop.f32.mrf.mxu0
        %v1918 = vadd.f32 0.0, %v1917
        %v1919 = vpop.f32.mrf.mxu0
        %1920 = vmatprep.mubr.f32.mxu0 0.0
        %1921 = vmatmul.mubr.f32.gmra.mxu0 %v1815
        %v1922 = vpop.f32.mrf.mxu0
        %v1923 = vadd.f32 0.0, %v1922
        %v1924 = vpop.f32.mrf.mxu0
        %1925 = vmatprep.mubr.f32.mxu0 0.0
        %1926 = vmatmul.mubr.f32.gmra.mxu0 %v1818
        %v1927 = vpop.f32.mrf.mxu0
        %v1928 = vadd.f32 0.0, %v1927
        %v1929 = vpop.f32.mrf.mxu0
        %1930 = vmatprep.mubr.f32.mxu0 0.0
        %1931 = vmatmul.mubr.f32.gmra.mxu0 %v1821
        %v1932 = vpop.f32.mrf.mxu0
        %v1933 = vadd.f32 0.0, %v1932
        %v1934 = vpop.f32.mrf.mxu0
        %1935 = vmatprep.mubr.f32.mxu0 0.0
        %1936 = vmatmul.mubr.f32.gmra.mxu0 %v1824
        %v1937 = vpop.f32.mrf.mxu0
        %v1938 = vadd.f32 0.0, %v1937
        %v1939 = vpop.f32.mrf.mxu0
        %1940 = vdwg.mxu0
        %v1941 = vadd.f32 %v1767, %v1893
        %v1942 = vadd.f32 %v1768, %v1898
        %v1943 = vadd.f32 %v1769, %v1903
        %v1944 = vadd.f32 %v1770, %v1908
        %v1945 = vadd.f32 %v1771, %v1913
        %v1946 = vadd.f32 %v1772, %v1918
        %v1947 = vadd.f32 %v1773, %v1923
        %v1948 = vadd.f32 %v1774, %v1928
        %v1949 = vadd.f32 %v1775, %v1933
        %v1950 = vadd.f32 %v1776, %v1938
        %v1951 = vld [vmem:[%s540 + $0x2] sm:$0xff]
        %v1952 = vld [vmem:[%s540 + $0x12] sm:$0xff]
        %v1953 = vld [vmem:[%s540 + $0x22] sm:$0xff]
        %v1954 = vld [vmem:[%s540 + $0x32] sm:$0xff]
        %v1955 = vld [vmem:[%s540 + $0x42] sm:$0xff]
        %v1956 = vld [vmem:[%s540 + $0x52] sm:$0xff]
        %v1957 = vld [vmem:[%s540 + $0x62] sm:$0xff]
        %v1958 = vld [vmem:[%s540 + $0x72] sm:$0xff]
        %v1959 = vld [vmem:[%s540 + $0x82] sm:$0xff]
        %v1960 = vld [vmem:[%s540 + $0x92] sm:$0xff]
        %s1961 = scalar_lea.vmem [#allocation10], 512
        %v1962 = vld [vmem:[%s1961] sm:$0xff]
        %v1963 = vld [vmem:[%s1961 + $0x8] sm:$0xff]
        %v1964 = vld [vmem:[%s1961 + $0x10] sm:$0xff]
        %v1965 = vld [vmem:[%s1961 + $0x18] sm:$0xff]
        %v1966 = vld [vmem:[%s1961 + $0x20] sm:$0xff]
        %v1967 = vld [vmem:[%s1961 + $0x28] sm:$0xff]
        %v1968 = vld [vmem:[%s1961 + $0x30] sm:$0xff]
        %v1969 = vld [vmem:[%s1961 + $0x38] sm:$0xff]
        %v1971 = vsel %vm541, %v1951, 0
        %v1974 = vsel %vm541, %v1952, 0
        %v1977 = vsel %vm541, %v1953, 0
        %v1980 = vsel %vm541, %v1954, 0
        %v1983 = vsel %vm541, %v1955, 0
        %v1986 = vsel %vm541, %v1956, 0
        %v1989 = vsel %vm541, %v1957, 0
        %v1992 = vsel %vm541, %v1958, 0
        %v1995 = vsel %vm541, %v1959, 0
        %v1998 = vsel %vm541, %v1960, 0
        %2000 = vmatprep.subr.mxu0 0.0
        %2001 = vmatpush1.msra.mxu0 0.0
        %2002 = vmatprep.subr.mxu0 0.0
        %2003 = vmatpush1.msra.mxu0 0.0
        %2004 = vmatprep.subr.mxu0 0.0
        %2005 = vmatpush1.msra.mxu0 0.0
        %2006 = vmatprep.subr.mxu0 0.0
        %2007 = vmatpush1.msra.mxu0 0.0
        %2008 = vmatprep.subr.mxu0 0.0
        %2009 = vmatpush1.msra.mxu0 0.0
        %2010 = vmatprep.subr.mxu0 0.0
        %2011 = vmatpush1.msra.mxu0 0.0
        %2012 = vmatprep.subr.mxu0 0.0
        %2013 = vmatpush1.msra.mxu0 0.0
        %2014 = vmatprep.subr.mxu0 0.0
        %2015 = vmatpush1.msra.mxu0 0.0
        %2016 = vmatprep.subr.mxu0 0.0
        %2017 = vmatpush1.msra.mxu0 %v1969
        %2018 = vmatprep.subr.mxu0 0.0
        %2019 = vmatpush1.msra.mxu0 %v1968
        %2020 = vmatprep.subr.mxu0 0.0
        %2021 = vmatpush1.msra.mxu0 %v1967
        %2022 = vmatprep.subr.mxu0 0.0
        %2023 = vmatpush1.msra.mxu0 %v1966
        %2024 = vmatprep.subr.mxu0 0.0
        %2025 = vmatpush1.msra.mxu0 %v1965
        %2026 = vmatprep.subr.mxu0 0.0
        %2027 = vmatpush1.msra.mxu0 %v1964
        %2028 = vmatprep.subr.mxu0 0.0
        %2029 = vmatpush1.msra.mxu0 %v1963
        %2030 = vmatprep.subr.mxu0 0.0
        %2031 = vmatpush1.msra.mxu0 %v1962
        %2032 = vmatprep.subr.mxu0 0.0
        %2033 = vmatpush2.msra.mxu0 0.0
        %2034 = vmatprep.subr.mxu0 0.0
        %2035 = vmatpush2.msra.mxu0 0.0
        %2036 = vmatprep.subr.mxu0 0.0
        %2037 = vmatpush2.msra.mxu0 0.0
        %2038 = vmatprep.subr.mxu0 0.0
        %2039 = vmatpush2.msra.mxu0 0.0
        %2040 = vmatprep.subr.mxu0 0.0
        %2041 = vmatpush2.msra.mxu0 0.0
        %2042 = vmatprep.subr.mxu0 0.0
        %2043 = vmatpush2.msra.mxu0 0.0
        %2044 = vmatprep.subr.mxu0 0.0
        %2045 = vmatpush2.msra.mxu0 0.0
        %2046 = vmatprep.subr.mxu0 0.0
        %2047 = vmatpush2.msra.mxu0 0.0
        %2048 = vmatprep.subr.mxu0 0.0
        %2049 = vmatpush2.msra.mxu0 0.0
        %2050 = vmatprep.subr.mxu0 0.0
        %2051 = vmatpush2.msra.mxu0 0.0
        %2052 = vmatprep.subr.mxu0 0.0
        %2053 = vmatpush2.msra.mxu0 0.0
        %2054 = vmatprep.subr.mxu0 0.0
        %2055 = vmatpush2.msra.mxu0 0.0
        %2056 = vmatprep.subr.mxu0 0.0
        %2057 = vmatpush2.msra.mxu0 0.0
        %2058 = vmatprep.subr.mxu0 0.0
        %2059 = vmatpush2.msra.mxu0 0.0
        %2060 = vmatprep.subr.mxu0 0.0
        %2061 = vmatpush2.msra.mxu0 0.0
        %2062 = vmatprep.subr.mxu0 0.0
        %2063 = vmatpush2.msra.mxu0 0.0
        %2064 = vmatprep.mubr.f32.mxu0 0.0
        %2065 = vmatmul.mubr.f32.gmra.mxu0 %v1971
        %v2066 = vpop.f32.mrf.mxu0
        %v2067 = vadd.f32 0.0, %v2066
        %v2068 = vpop.f32.mrf.mxu0
        %2069 = vmatprep.mubr.f32.mxu0 0.0
        %2070 = vmatmul.mubr.f32.gmra.mxu0 %v1974
        %v2071 = vpop.f32.mrf.mxu0
        %v2072 = vadd.f32 0.0, %v2071
        %v2073 = vpop.f32.mrf.mxu0
        %2074 = vmatprep.mubr.f32.mxu0 0.0
        %2075 = vmatmul.mubr.f32.gmra.mxu0 %v1977
        %v2076 = vpop.f32.mrf.mxu0
        %v2077 = vadd.f32 0.0, %v2076
        %v2078 = vpop.f32.mrf.mxu0
        %2079 = vmatprep.mubr.f32.mxu0 0.0
        %2080 = vmatmul.mubr.f32.gmra.mxu0 %v1980
        %v2081 = vpop.f32.mrf.mxu0
        %v2082 = vadd.f32 0.0, %v2081
        %v2083 = vpop.f32.mrf.mxu0
        %2084 = vmatprep.mubr.f32.mxu0 0.0
        %2085 = vmatmul.mubr.f32.gmra.mxu0 %v1983
        %v2086 = vpop.f32.mrf.mxu0
        %v2087 = vadd.f32 0.0, %v2086
        %v2088 = vpop.f32.mrf.mxu0
        %2089 = vmatprep.mubr.f32.mxu0 0.0
        %2090 = vmatmul.mubr.f32.gmra.mxu0 %v1986
        %v2091 = vpop.f32.mrf.mxu0
        %v2092 = vadd.f32 0.0, %v2091
        %v2093 = vpop.f32.mrf.mxu0
        %2094 = vmatprep.mubr.f32.mxu0 0.0
        %2095 = vmatmul.mubr.f32.gmra.mxu0 %v1989
        %v2096 = vpop.f32.mrf.mxu0
        %v2097 = vadd.f32 0.0, %v2096
        %v2098 = vpop.f32.mrf.mxu0
        %2099 = vmatprep.mubr.f32.mxu0 0.0
        %2100 = vmatmul.mubr.f32.gmra.mxu0 %v1992
        %v2101 = vpop.f32.mrf.mxu0
        %v2102 = vadd.f32 0.0, %v2101
        %v2103 = vpop.f32.mrf.mxu0
        %2104 = vmatprep.mubr.f32.mxu0 0.0
        %2105 = vmatmul.mubr.f32.gmra.mxu0 %v1995
        %v2106 = vpop.f32.mrf.mxu0
        %v2107 = vadd.f32 0.0, %v2106
        %v2108 = vpop.f32.mrf.mxu0
        %2109 = vmatprep.mubr.f32.mxu0 0.0
        %2110 = vmatmul.mubr.f32.gmra.mxu0 %v1998
        %v2111 = vpop.f32.mrf.mxu0
        %v2112 = vadd.f32 0.0, %v2111
        %v2113 = vpop.f32.mrf.mxu0
        %2114 = vdwg.mxu0
        %v2115 = vadd.f32 %v1941, %v2067
        %v2116 = vadd.f32 %v1942, %v2072
        %v2117 = vadd.f32 %v1943, %v2077
        %v2118 = vadd.f32 %v1944, %v2082
        %v2119 = vadd.f32 %v1945, %v2087
        %v2120 = vadd.f32 %v1946, %v2092
        %v2121 = vadd.f32 %v1947, %v2097
        %v2122 = vadd.f32 %v1948, %v2102
        %v2123 = vadd.f32 %v1949, %v2107
        %v2124 = vadd.f32 %v1950, %v2112
        %v2125 = vld [vmem:[%s4] sm:$0x1]
        %v2127 = vlaneseq
        %v2128 = vshrl.u32 %v2127, 7
        %v2129 = vsub.s32 0, %v2128
        %v2130 = vrot.slane %v2125, %v2129
        %v2132 = vadd.f32 %v2115, %v2130
        %v2133 = vadd.f32 %v2116, %v2130
        %v2134 = vadd.f32 %v2117, %v2130
        %v2135 = vadd.f32 %v2118, %v2130
        %v2136 = vadd.f32 %v2119, %v2130
        %v2137 = vadd.f32 %v2120, %v2130
        %v2138 = vadd.f32 %v2121, %v2130
        %v2139 = vadd.f32 %v2122, %v2130
        %v2140 = vadd.f32 %v2123, %v2130
        %v2141 = vadd.f32 %v2124, %v2130
        %v2142 = vmax.f32 %v2132, 0.0
        %v2143 = vmax.f32 %v2133, 0.0
        %v2144 = vmax.f32 %v2134, 0.0
        %v2145 = vmax.f32 %v2135, 0.0
        %v2146 = vmax.f32 %v2136, 0.0
        %v2147 = vmax.f32 %v2137, 0.0
        %v2148 = vmax.f32 %v2138, 0.0
        %v2149 = vmax.f32 %v2139, 0.0
        %v2150 = vmax.f32 %v2140, 0.0
        %v2151 = vmax.f32 %v2141, 0.0
        %2152 = vst [vmem:[#allocation3] sm:$0x1] 0.0
        %2153 = vst [vmem:[#allocation3 + $0x10] sm:$0x1] 0.0
        %2154 = vst [vmem:[#allocation3 + $0x20] sm:$0x1] 0.0
        %2155 = vst [vmem:[#allocation3 + $0x30] sm:$0x1] 0.0
        %2156 = vst [vmem:[#allocation3 + $0x40] sm:$0x1] 0.0
        %2157 = vst [vmem:[#allocation3 + $0x50] sm:$0x1] 0.0
        %2158 = vst [vmem:[#allocation3 + $0x60] sm:$0x1] 0.0
        %2159 = vst [vmem:[#allocation3 + $0x70] sm:$0x1] 0.0
        %2160 = vst [vmem:[#allocation3 + $0x80] sm:$0x1] 0.0
        %2161 = vst [vmem:[#allocation3 + $0x90] sm:$0x1] 0.0
        %2162 = vst [vmem:[#allocation3 + $0x9] sm:$0x1] 0.0
        %2163 = vst [vmem:[#allocation3 + $0x19] sm:$0x1] 0.0
        %2164 = vst [vmem:[#allocation3 + $0x29] sm:$0x1] 0.0
        %2165 = vst [vmem:[#allocation3 + $0x39] sm:$0x1] 0.0
        %2166 = vst [vmem:[#allocation3 + $0x49] sm:$0x1] 0.0
        %2167 = vst [vmem:[#allocation3 + $0x59] sm:$0x1] 0.0
        %2168 = vst [vmem:[#allocation3 + $0x69] sm:$0x1] 0.0
        %2169 = vst [vmem:[#allocation3 + $0x79] sm:$0x1] 0.0
        %2170 = vst [vmem:[#allocation3 + $0x89] sm:$0x1] 0.0
        %2171 = vst [vmem:[#allocation3 + $0x99] sm:$0x1] 0.0
        %2172 = vst [vmem:[#allocation3 + $0x1] sm:$0xff] %v2142
        %2173 = vst [vmem:[#allocation3 + $0x11] sm:$0xff] %v2143
        %2174 = vst [vmem:[#allocation3 + $0x21] sm:$0xff] %v2144
        %2175 = vst [vmem:[#allocation3 + $0x31] sm:$0xff] %v2145
        %2176 = vst [vmem:[#allocation3 + $0x41] sm:$0xff] %v2146
        %2177 = vst [vmem:[#allocation3 + $0x51] sm:$0xff] %v2147
        %2178 = vst [vmem:[#allocation3 + $0x61] sm:$0xff] %v2148
        %2179 = vst [vmem:[#allocation3 + $0x71] sm:$0xff] %v2149
        %2180 = vst [vmem:[#allocation3 + $0x81] sm:$0xff] %v2150
        %2181 = vst [vmem:[#allocation3 + $0x91] sm:$0xff] %v2151
        // Predicated region
        $region93: #{tpu_custom_call.1} parent=51 // pred_check
          %p2182 = pneg %p558
        $region94: #{tpu_custom_call.1} parent=51 // pred_check_branch
          %2184 = sbr.rel (%p2182) target = $region96
        $region95: #{tpu_custom_call.1} parent=51 // pred_region
          %2185 = vst [vmem:[#allocation3 + $0x1] sm:$0xff] 0.0
          %s2186 = scalar_lea.vmem [#allocation3], 144
          %2187 = vst [vmem:[%s2186 + $0x1] sm:$0xff] 0.0
        $region96: #{tpu_custom_call.1} parent=51 // pred_fallthru
          _
        %v2188 = vld [vmem:[%s422] sm:$0xff]
        %v2189 = vld [vmem:[%s422 + $0x8] sm:$0xff]
        %v2190 = vld [vmem:[%s422 + $0x10] sm:$0xff]
        %v2191 = vld [vmem:[%s422 + $0x18] sm:$0xff]
        %v2192 = vld [vmem:[%s422 + $0x20] sm:$0xff]
        %v2193 = vld [vmem:[%s422 + $0x28] sm:$0xff]
        %v2194 = vld [vmem:[%s422 + $0x30] sm:$0xff]
        %v2195 = vld [vmem:[%s422 + $0x38] sm:$0xff]
        %v2196 = vld [vmem:[#allocation13] sm:$0xff]
        %v2197 = vld [vmem:[#allocation13 + $0x8] sm:$0xff]
        %v2198 = vld [vmem:[#allocation13 + $0x10] sm:$0xff]
        %v2199 = vld [vmem:[#allocation13 + $0x18] sm:$0xff]
        %v2200 = vld [vmem:[#allocation13 + $0x20] sm:$0xff]
        %v2201 = vld [vmem:[#allocation13 + $0x28] sm:$0xff]
        %v2202 = vld [vmem:[#allocation13 + $0x30] sm:$0xff]
        %v2203 = vld [vmem:[#allocation13 + $0x38] sm:$0xff]
        %v2204 = vld [vmem:[#allocation3] sm:$0xff]
        %v2205 = vld [vmem:[#allocation3 + $0x10] sm:$0xff]
        %v2206 = vld [vmem:[#allocation3 + $0x20] sm:$0xff]
        %v2207 = vld [vmem:[#allocation3 + $0x30] sm:$0xff]
        %v2208 = vld [vmem:[#allocation3 + $0x40] sm:$0xff]
        %v2209 = vld [vmem:[#allocation3 + $0x50] sm:$0xff]
        %v2210 = vld [vmem:[#allocation3 + $0x60] sm:$0xff]
        %v2211 = vld [vmem:[#allocation3 + $0x70] sm:$0xff]
        %v2212 = vld [vmem:[#allocation12] sm:$0xff]
        %v2213 = vld [vmem:[#allocation12 + $0x8] sm:$0xff]
        %v2214 = vld [vmem:[#allocation12 + $0x10] sm:$0xff]
        %v2215 = vld [vmem:[#allocation12 + $0x18] sm:$0xff]
        %v2216 = vld [vmem:[#allocation12 + $0x20] sm:$0xff]
        %v2217 = vld [vmem:[#allocation12 + $0x28] sm:$0xff]
        %v2218 = vld [vmem:[#allocation12 + $0x30] sm:$0xff]
        %v2219 = vld [vmem:[#allocation12 + $0x38] sm:$0xff]
        %v2220 = vld [vmem:[#allocation12 + $0x40] sm:$0xff]
        %v2221 = vld [vmem:[#allocation12 + $0x48] sm:$0xff]
        %v2222 = vld [vmem:[#allocation12 + $0x50] sm:$0xff]
        %v2223 = vld [vmem:[#allocation12 + $0x58] sm:$0xff]
        %v2224 = vld [vmem:[#allocation12 + $0x60] sm:$0xff]
        %v2225 = vld [vmem:[#allocation12 + $0x68] sm:$0xff]
        %v2226 = vld [vmem:[#allocation12 + $0x70] sm:$0xff]
        %v2227 = vld [vmem:[#allocation12 + $0x78] sm:$0xff]
        %2228 = vmatprep.subr.mxu0 0.0
        %2229 = vmatpush1.msra.mxu0 %v2227
        %2230 = vmatprep.subr.mxu0 0.0
        %2231 = vmatpush1.msra.mxu0 %v2226
        %2232 = vmatprep.subr.mxu0 0.0
        %2233 = vmatpush1.msra.mxu0 %v2225
        %2234 = vmatprep.subr.mxu0 0.0
        %2235 = vmatpush1.msra.mxu0 %v2224
        %2236 = vmatprep.subr.mxu0 0.0
        %2237 = vmatpush1.msra.mxu0 %v2223
        %2238 = vmatprep.subr.mxu0 0.0
        %2239 = vmatpush1.msra.mxu0 %v2222
        %2240 = vmatprep.subr.mxu0 0.0
        %2241 = vmatpush1.msra.mxu0 %v2221
        %2242 = vmatprep.subr.mxu0 0.0
        %2243 = vmatpush1.msra.mxu0 %v2220
        %2244 = vmatprep.subr.mxu0 0.0
        %2245 = vmatpush1.msra.mxu0 %v2219
        %2246 = vmatprep.subr.mxu0 0.0
        %2247 = vmatpush1.msra.mxu0 %v2218
        %2248 = vmatprep.subr.mxu0 0.0
        %2249 = vmatpush1.msra.mxu0 %v2217
        %2250 = vmatprep.subr.mxu0 0.0
        %2251 = vmatpush1.msra.mxu0 %v2216
        %2252 = vmatprep.subr.mxu0 0.0
        %2253 = vmatpush1.msra.mxu0 %v2215
        %2254 = vmatprep.subr.mxu0 0.0
        %2255 = vmatpush1.msra.mxu0 %v2214
        %2256 = vmatprep.subr.mxu0 0.0
        %2257 = vmatpush1.msra.mxu0 %v2213
        %2258 = vmatprep.subr.mxu0 0.0
        %2259 = vmatpush1.msra.mxu0 %v2212
        %2260 = vmatprep.subr.mxu0 0.0
        %2261 = vmatpush2.msra.mxu0 0.0
        %2262 = vmatprep.subr.mxu0 0.0
        %2263 = vmatpush2.msra.mxu0 0.0
        %2264 = vmatprep.subr.mxu0 0.0
        %2265 = vmatpush2.msra.mxu0 0.0
        %2266 = vmatprep.subr.mxu0 0.0
        %2267 = vmatpush2.msra.mxu0 0.0
        %2268 = vmatprep.subr.mxu0 0.0
        %2269 = vmatpush2.msra.mxu0 0.0
        %2270 = vmatprep.subr.mxu0 0.0
        %2271 = vmatpush2.msra.mxu0 0.0
        %2272 = vmatprep.subr.mxu0 0.0
        %2273 = vmatpush2.msra.mxu0 0.0
        %2274 = vmatprep.subr.mxu0 0.0
        %2275 = vmatpush2.msra.mxu0 0.0
        %2276 = vmatprep.subr.mxu0 0.0
        %2277 = vmatpush2.msra.mxu0 0.0
        %2278 = vmatprep.subr.mxu0 0.0
        %2279 = vmatpush2.msra.mxu0 0.0
        %2280 = vmatprep.subr.mxu0 0.0
        %2281 = vmatpush2.msra.mxu0 0.0
        %2282 = vmatprep.subr.mxu0 0.0
        %2283 = vmatpush2.msra.mxu0 0.0
        %2284 = vmatprep.subr.mxu0 0.0
        %2285 = vmatpush2.msra.mxu0 0.0
        %2286 = vmatprep.subr.mxu0 0.0
        %2287 = vmatpush2.msra.mxu0 0.0
        %2288 = vmatprep.subr.mxu0 0.0
        %2289 = vmatpush2.msra.mxu0 0.0
        %2290 = vmatprep.subr.mxu0 0.0
        %2291 = vmatpush2.msra.mxu0 0.0
        %2292 = vmatprep.mubr.f32.mxu0 0.0
        %2293 = vmatmul.mubr.f32.gmra.mxu0 %v2204
        %v2294 = vpop.f32.mrf.mxu0
        %v2295 = vadd.f32 0.0, %v2294
        %v2296 = vpop.f32.mrf.mxu0
        %2297 = vmatprep.mubr.f32.mxu0 0.0
        %2298 = vmatmul.mubr.f32.gmra.mxu0 %v2205
        %v2299 = vpop.f32.mrf.mxu0
        %v2300 = vadd.f32 0.0, %v2299
        %v2301 = vpop.f32.mrf.mxu0
        %2302 = vmatprep.mubr.f32.mxu0 0.0
        %2303 = vmatmul.mubr.f32.gmra.mxu0 %v2206
        %v2304 = vpop.f32.mrf.mxu0
        %v2305 = vadd.f32 0.0, %v2304
        %v2306 = vpop.f32.mrf.mxu0
        %2307 = vmatprep.mubr.f32.mxu0 0.0
        %2308 = vmatmul.mubr.f32.gmra.mxu0 %v2207
        %v2309 = vpop.f32.mrf.mxu0
        %v2310 = vadd.f32 0.0, %v2309
        %v2311 = vpop.f32.mrf.mxu0
        %2312 = vmatprep.mubr.f32.mxu0 0.0
        %2313 = vmatmul.mubr.f32.gmra.mxu0 %v2208
        %v2314 = vpop.f32.mrf.mxu0
        %v2315 = vadd.f32 0.0, %v2314
        %v2316 = vpop.f32.mrf.mxu0
        %2317 = vmatprep.mubr.f32.mxu0 0.0
        %2318 = vmatmul.mubr.f32.gmra.mxu0 %v2209
        %v2319 = vpop.f32.mrf.mxu0
        %v2320 = vadd.f32 0.0, %v2319
        %v2321 = vpop.f32.mrf.mxu0
        %2322 = vmatprep.mubr.f32.mxu0 0.0
        %2323 = vmatmul.mubr.f32.gmra.mxu0 %v2210
        %v2324 = vpop.f32.mrf.mxu0
        %v2325 = vadd.f32 0.0, %v2324
        %v2326 = vpop.f32.mrf.mxu0
        %2327 = vmatprep.mubr.f32.mxu0 0.0
        %2328 = vmatmul.mubr.f32.gmra.mxu0 %v2211
        %v2329 = vpop.f32.mrf.mxu0
        %v2330 = vadd.f32 0.0, %v2329
        %v2331 = vpop.f32.mrf.mxu0
        %2332 = vdwg.mxu0
        %v2334 = vsel %vm541, %v2188, 0
        %v2337 = vsel %vm541, %v2189, 0
        %v2340 = vsel %vm541, %v2190, 0
        %v2343 = vsel %vm541, %v2191, 0
        %v2346 = vsel %vm541, %v2192, 0
        %v2349 = vsel %vm541, %v2193, 0
        %v2352 = vsel %vm541, %v2194, 0
        %v2355 = vsel %vm541, %v2195, 0
        %2357 = vmatprep.subr.mxu0 0.0
        %2358 = vmatpush1.msra.mxu0 0.0
        %2359 = vmatprep.subr.mxu0 0.0
        %2360 = vmatpush1.msra.mxu0 0.0
        %2361 = vmatprep.subr.mxu0 0.0
        %2362 = vmatpush1.msra.mxu0 0.0
        %2363 = vmatprep.subr.mxu0 0.0
        %2364 = vmatpush1.msra.mxu0 0.0
        %2365 = vmatprep.subr.mxu0 0.0
        %2366 = vmatpush1.msra.mxu0 0.0
        %2367 = vmatprep.subr.mxu0 0.0
        %2368 = vmatpush1.msra.mxu0 0.0
        %2369 = vmatprep.subr.mxu0 0.0
        %2370 = vmatpush1.msra.mxu0 0.0
        %2371 = vmatprep.subr.mxu0 0.0
        %2372 = vmatpush1.msra.mxu0 0.0
        %2373 = vmatprep.subr.mxu0 0.0
        %2374 = vmatpush1.msra.mxu0 %v2203
        %2375 = vmatprep.subr.mxu0 0.0
        %2376 = vmatpush1.msra.mxu0 %v2202
        %2377 = vmatprep.subr.mxu0 0.0
        %2378 = vmatpush1.msra.mxu0 %v2201
        %2379 = vmatprep.subr.mxu0 0.0
        %2380 = vmatpush1.msra.mxu0 %v2200
        %2381 = vmatprep.subr.mxu0 0.0
        %2382 = vmatpush1.msra.mxu0 %v2199
        %2383 = vmatprep.subr.mxu0 0.0
        %2384 = vmatpush1.msra.mxu0 %v2198
        %2385 = vmatprep.subr.mxu0 0.0
        %2386 = vmatpush1.msra.mxu0 %v2197
        %2387 = vmatprep.subr.mxu0 0.0
        %2388 = vmatpush1.msra.mxu0 %v2196
        %2389 = vmatprep.subr.mxu0 0.0
        %2390 = vmatpush2.msra.mxu0 0.0
        %2391 = vmatprep.subr.mxu0 0.0
        %2392 = vmatpush2.msra.mxu0 0.0
        %2393 = vmatprep.subr.mxu0 0.0
        %2394 = vmatpush2.msra.mxu0 0.0
        %2395 = vmatprep.subr.mxu0 0.0
        %2396 = vmatpush2.msra.mxu0 0.0
        %2397 = vmatprep.subr.mxu0 0.0
        %2398 = vmatpush2.msra.mxu0 0.0
        %2399 = vmatprep.subr.mxu0 0.0
        %2400 = vmatpush2.msra.mxu0 0.0
        %2401 = vmatprep.subr.mxu0 0.0
        %2402 = vmatpush2.msra.mxu0 0.0
        %2403 = vmatprep.subr.mxu0 0.0
        %2404 = vmatpush2.msra.mxu0 0.0
        %2405 = vmatprep.subr.mxu0 0.0
        %2406 = vmatpush2.msra.mxu0 0.0
        %2407 = vmatprep.subr.mxu0 0.0
        %2408 = vmatpush2.msra.mxu0 0.0
        %2409 = vmatprep.subr.mxu0 0.0
        %2410 = vmatpush2.msra.mxu0 0.0
        %2411 = vmatprep.subr.mxu0 0.0
        %2412 = vmatpush2.msra.mxu0 0.0
        %2413 = vmatprep.subr.mxu0 0.0
        %2414 = vmatpush2.msra.mxu0 0.0
        %2415 = vmatprep.subr.mxu0 0.0
        %2416 = vmatpush2.msra.mxu0 0.0
        %2417 = vmatprep.subr.mxu0 0.0
        %2418 = vmatpush2.msra.mxu0 0.0
        %2419 = vmatprep.subr.mxu0 0.0
        %2420 = vmatpush2.msra.mxu0 0.0
        %2421 = vmatprep.mubr.f32.mxu0 0.0
        %2422 = vmatmul.mubr.f32.gmra.mxu0 %v2334
        %v2423 = vpop.f32.mrf.mxu0
        %v2424 = vadd.f32 %v2295, %v2423
        %v2425 = vpop.f32.mrf.mxu0
        %2426 = vmatprep.mubr.f32.mxu0 0.0
        %2427 = vmatmul.mubr.f32.gmra.mxu0 %v2337
        %v2428 = vpop.f32.mrf.mxu0
        %v2429 = vadd.f32 %v2300, %v2428
        %v2430 = vpop.f32.mrf.mxu0
        %2431 = vmatprep.mubr.f32.mxu0 0.0
        %2432 = vmatmul.mubr.f32.gmra.mxu0 %v2340
        %v2433 = vpop.f32.mrf.mxu0
        %v2434 = vadd.f32 %v2305, %v2433
        %v2435 = vpop.f32.mrf.mxu0
        %2436 = vmatprep.mubr.f32.mxu0 0.0
        %2437 = vmatmul.mubr.f32.gmra.mxu0 %v2343
        %v2438 = vpop.f32.mrf.mxu0
        %v2439 = vadd.f32 %v2310, %v2438
        %v2440 = vpop.f32.mrf.mxu0
        %2441 = vmatprep.mubr.f32.mxu0 0.0
        %2442 = vmatmul.mubr.f32.gmra.mxu0 %v2346
        %v2443 = vpop.f32.mrf.mxu0
        %v2444 = vadd.f32 %v2315, %v2443
        %v2445 = vpop.f32.mrf.mxu0
        %2446 = vmatprep.mubr.f32.mxu0 0.0
        %2447 = vmatmul.mubr.f32.gmra.mxu0 %v2349
        %v2448 = vpop.f32.mrf.mxu0
        %v2449 = vadd.f32 %v2320, %v2448
        %v2450 = vpop.f32.mrf.mxu0
        %2451 = vmatprep.mubr.f32.mxu0 0.0
        %2452 = vmatmul.mubr.f32.gmra.mxu0 %v2352
        %v2453 = vpop.f32.mrf.mxu0
        %v2454 = vadd.f32 %v2325, %v2453
        %v2455 = vpop.f32.mrf.mxu0
        %2456 = vmatprep.mubr.f32.mxu0 0.0
        %2457 = vmatmul.mubr.f32.gmra.mxu0 %v2355
        %v2458 = vpop.f32.mrf.mxu0
        %v2459 = vadd.f32 %v2330, %v2458
        %v2460 = vpop.f32.mrf.mxu0
        %2461 = vdwg.mxu0
        %v2462 = vld [vmem:[#allocation3 + $0x1] sm:$0xff]
        %v2463 = vld [vmem:[#allocation3 + $0x11] sm:$0xff]
        %v2464 = vld [vmem:[#allocation3 + $0x21] sm:$0xff]
        %v2465 = vld [vmem:[#allocation3 + $0x31] sm:$0xff]
        %v2466 = vld [vmem:[#allocation3 + $0x41] sm:$0xff]
        %v2467 = vld [vmem:[#allocation3 + $0x51] sm:$0xff]
        %v2468 = vld [vmem:[#allocation3 + $0x61] sm:$0xff]
        %v2469 = vld [vmem:[#allocation3 + $0x71] sm:$0xff]
        %s2470 = scalar_lea.vmem [#allocation12], 128
        %v2471 = vld [vmem:[%s2470] sm:$0xff]
        %v2472 = vld [vmem:[%s2470 + $0x8] sm:$0xff]
        %v2473 = vld [vmem:[%s2470 + $0x10] sm:$0xff]
        %v2474 = vld [vmem:[%s2470 + $0x18] sm:$0xff]
        %v2475 = vld [vmem:[%s2470 + $0x20] sm:$0xff]
        %v2476 = vld [vmem:[%s2470 + $0x28] sm:$0xff]
        %v2477 = vld [vmem:[%s2470 + $0x30] sm:$0xff]
        %v2478 = vld [vmem:[%s2470 + $0x38] sm:$0xff]
        %v2479 = vld [vmem:[%s2470 + $0x40] sm:$0xff]
        %v2480 = vld [vmem:[%s2470 + $0x48] sm:$0xff]
        %v2481 = vld [vmem:[%s2470 + $0x50] sm:$0xff]
        %v2482 = vld [vmem:[%s2470 + $0x58] sm:$0xff]
        %v2483 = vld [vmem:[%s2470 + $0x60] sm:$0xff]
        %v2484 = vld [vmem:[%s2470 + $0x68] sm:$0xff]
        %v2485 = vld [vmem:[%s2470 + $0x70] sm:$0xff]
        %v2486 = vld [vmem:[%s2470 + $0x78] sm:$0xff]
        %2487 = vmatprep.subr.mxu0 0.0
        %2488 = vmatpush1.msra.mxu0 %v2486
        %2489 = vmatprep.subr.mxu0 0.0
        %2490 = vmatpush1.msra.mxu0 %v2485
        %2491 = vmatprep.subr.mxu0 0.0
        %2492 = vmatpush1.msra.mxu0 %v2484
        %2493 = vmatprep.subr.mxu0 0.0
        %2494 = vmatpush1.msra.mxu0 %v2483
        %2495 = vmatprep.subr.mxu0 0.0
        %2496 = vmatpush1.msra.mxu0 %v2482
        %2497 = vmatprep.subr.mxu0 0.0
        %2498 = vmatpush1.msra.mxu0 %v2481
        %2499 = vmatprep.subr.mxu0 0.0
        %2500 = vmatpush1.msra.mxu0 %v2480
        %2501 = vmatprep.subr.mxu0 0.0
        %2502 = vmatpush1.msra.mxu0 %v2479
        %2503 = vmatprep.subr.mxu0 0.0
        %2504 = vmatpush1.msra.mxu0 %v2478
        %2505 = vmatprep.subr.mxu0 0.0
        %2506 = vmatpush1.msra.mxu0 %v2477
        %2507 = vmatprep.subr.mxu0 0.0
        %2508 = vmatpush1.msra.mxu0 %v2476
        %2509 = vmatprep.subr.mxu0 0.0
        %2510 = vmatpush1.msra.mxu0 %v2475
        %2511 = vmatprep.subr.mxu0 0.0
        %2512 = vmatpush1.msra.mxu0 %v2474
        %2513 = vmatprep.subr.mxu0 0.0
        %2514 = vmatpush1.msra.mxu0 %v2473
        %2515 = vmatprep.subr.mxu0 0.0
        %2516 = vmatpush1.msra.mxu0 %v2472
        %2517 = vmatprep.subr.mxu0 0.0
        %2518 = vmatpush1.msra.mxu0 %v2471
        %2519 = vmatprep.subr.mxu0 0.0
        %2520 = vmatpush2.msra.mxu0 0.0
        %2521 = vmatprep.subr.mxu0 0.0
        %2522 = vmatpush2.msra.mxu0 0.0
        %2523 = vmatprep.subr.mxu0 0.0
        %2524 = vmatpush2.msra.mxu0 0.0
        %2525 = vmatprep.subr.mxu0 0.0
        %2526 = vmatpush2.msra.mxu0 0.0
        %2527 = vmatprep.subr.mxu0 0.0
        %2528 = vmatpush2.msra.mxu0 0.0
        %2529 = vmatprep.subr.mxu0 0.0
        %2530 = vmatpush2.msra.mxu0 0.0
        %2531 = vmatprep.subr.mxu0 0.0
        %2532 = vmatpush2.msra.mxu0 0.0
        %2533 = vmatprep.subr.mxu0 0.0
        %2534 = vmatpush2.msra.mxu0 0.0
        %2535 = vmatprep.subr.mxu0 0.0
        %2536 = vmatpush2.msra.mxu0 0.0
        %2537 = vmatprep.subr.mxu0 0.0
        %2538 = vmatpush2.msra.mxu0 0.0
        %2539 = vmatprep.subr.mxu0 0.0
        %2540 = vmatpush2.msra.mxu0 0.0
        %2541 = vmatprep.subr.mxu0 0.0
        %2542 = vmatpush2.msra.mxu0 0.0
        %2543 = vmatprep.subr.mxu0 0.0
        %2544 = vmatpush2.msra.mxu0 0.0
        %2545 = vmatprep.subr.mxu0 0.0
        %2546 = vmatpush2.msra.mxu0 0.0
        %2547 = vmatprep.subr.mxu0 0.0
        %2548 = vmatpush2.msra.mxu0 0.0
        %2549 = vmatprep.subr.mxu0 0.0
        %2550 = vmatpush2.msra.mxu0 0.0
        %2551 = vmatprep.mubr.f32.mxu0 0.0
        %2552 = vmatmul.mubr.f32.gmra.mxu0 %v2462
        %v2553 = vpop.f32.mrf.mxu0
        %v2554 = vadd.f32 0.0, %v2553
        %v2555 = vpop.f32.mrf.mxu0
        %2556 = vmatprep.mubr.f32.mxu0 0.0
        %2557 = vmatmul.mubr.f32.gmra.mxu0 %v2463
        %v2558 = vpop.f32.mrf.mxu0
        %v2559 = vadd.f32 0.0, %v2558
        %v2560 = vpop.f32.mrf.mxu0
        %2561 = vmatprep.mubr.f32.mxu0 0.0
        %2562 = vmatmul.mubr.f32.gmra.mxu0 %v2464
        %v2563 = vpop.f32.mrf.mxu0
        %v2564 = vadd.f32 0.0, %v2563
        %v2565 = vpop.f32.mrf.mxu0
        %2566 = vmatprep.mubr.f32.mxu0 0.0
        %2567 = vmatmul.mubr.f32.gmra.mxu0 %v2465
        %v2568 = vpop.f32.mrf.mxu0
        %v2569 = vadd.f32 0.0, %v2568
        %v2570 = vpop.f32.mrf.mxu0
        %2571 = vmatprep.mubr.f32.mxu0 0.0
        %2572 = vmatmul.mubr.f32.gmra.mxu0 %v2466
        %v2573 = vpop.f32.mrf.mxu0
        %v2574 = vadd.f32 0.0, %v2573
        %v2575 = vpop.f32.mrf.mxu0
        %2576 = vmatprep.mubr.f32.mxu0 0.0
        %2577 = vmatmul.mubr.f32.gmra.mxu0 %v2467
        %v2578 = vpop.f32.mrf.mxu0
        %v2579 = vadd.f32 0.0, %v2578
        %v2580 = vpop.f32.mrf.mxu0
        %2581 = vmatprep.mubr.f32.mxu0 0.0
        %2582 = vmatmul.mubr.f32.gmra.mxu0 %v2468
        %v2583 = vpop.f32.mrf.mxu0
        %v2584 = vadd.f32 0.0, %v2583
        %v2585 = vpop.f32.mrf.mxu0
        %2586 = vmatprep.mubr.f32.mxu0 0.0
        %2587 = vmatmul.mubr.f32.gmra.mxu0 %v2469
        %v2588 = vpop.f32.mrf.mxu0
        %v2589 = vadd.f32 0.0, %v2588
        %v2590 = vpop.f32.mrf.mxu0
        %2591 = vdwg.mxu0
        %v2592 = vadd.f32 %v2424, %v2554
        %v2593 = vadd.f32 %v2429, %v2559
        %v2594 = vadd.f32 %v2434, %v2564
        %v2595 = vadd.f32 %v2439, %v2569
        %v2596 = vadd.f32 %v2444, %v2574
        %v2597 = vadd.f32 %v2449, %v2579
        %v2598 = vadd.f32 %v2454, %v2584
        %v2599 = vadd.f32 %v2459, %v2589
        %v2600 = vld [vmem:[#allocation3 + $0x2] sm:$0xff]
        %v2601 = vld [vmem:[#allocation3 + $0x12] sm:$0xff]
        %v2602 = vld [vmem:[#allocation3 + $0x22] sm:$0xff]
        %v2603 = vld [vmem:[#allocation3 + $0x32] sm:$0xff]
        %v2604 = vld [vmem:[#allocation3 + $0x42] sm:$0xff]
        %v2605 = vld [vmem:[#allocation3 + $0x52] sm:$0xff]
        %v2606 = vld [vmem:[#allocation3 + $0x62] sm:$0xff]
        %v2607 = vld [vmem:[#allocation3 + $0x72] sm:$0xff]
        %s2608 = scalar_lea.vmem [#allocation12], 256
        %v2609 = vld [vmem:[%s2608] sm:$0xff]
        %v2610 = vld [vmem:[%s2608 + $0x8] sm:$0xff]
        %v2611 = vld [vmem:[%s2608 + $0x10] sm:$0xff]
        %v2612 = vld [vmem:[%s2608 + $0x18] sm:$0xff]
        %v2613 = vld [vmem:[%s2608 + $0x20] sm:$0xff]
        %v2614 = vld [vmem:[%s2608 + $0x28] sm:$0xff]
        %v2615 = vld [vmem:[%s2608 + $0x30] sm:$0xff]
        %v2616 = vld [vmem:[%s2608 + $0x38] sm:$0xff]
        %v2617 = vld [vmem:[%s2608 + $0x40] sm:$0xff]
        %v2618 = vld [vmem:[%s2608 + $0x48] sm:$0xff]
        %v2619 = vld [vmem:[%s2608 + $0x50] sm:$0xff]
        %v2620 = vld [vmem:[%s2608 + $0x58] sm:$0xff]
        %v2621 = vld [vmem:[%s2608 + $0x60] sm:$0xff]
        %v2622 = vld [vmem:[%s2608 + $0x68] sm:$0xff]
        %v2623 = vld [vmem:[%s2608 + $0x70] sm:$0xff]
        %v2624 = vld [vmem:[%s2608 + $0x78] sm:$0xff]
        %2625 = vmatprep.subr.mxu0 0.0
        %2626 = vmatpush1.msra.mxu0 %v2624
        %2627 = vmatprep.subr.mxu0 0.0
        %2628 = vmatpush1.msra.mxu0 %v2623
        %2629 = vmatprep.subr.mxu0 0.0
        %2630 = vmatpush1.msra.mxu0 %v2622
        %2631 = vmatprep.subr.mxu0 0.0
        %2632 = vmatpush1.msra.mxu0 %v2621
        %2633 = vmatprep.subr.mxu0 0.0
        %2634 = vmatpush1.msra.mxu0 %v2620
        %2635 = vmatprep.subr.mxu0 0.0
        %2636 = vmatpush1.msra.mxu0 %v2619
        %2637 = vmatprep.subr.mxu0 0.0
        %2638 = vmatpush1.msra.mxu0 %v2618
        %2639 = vmatprep.subr.mxu0 0.0
        %2640 = vmatpush1.msra.mxu0 %v2617
        %2641 = vmatprep.subr.mxu0 0.0
        %2642 = vmatpush1.msra.mxu0 %v2616
        %2643 = vmatprep.subr.mxu0 0.0
        %2644 = vmatpush1.msra.mxu0 %v2615
        %2645 = vmatprep.subr.mxu0 0.0
        %2646 = vmatpush1.msra.mxu0 %v2614
        %2647 = vmatprep.subr.mxu0 0.0
        %2648 = vmatpush1.msra.mxu0 %v2613
        %2649 = vmatprep.subr.mxu0 0.0
        %2650 = vmatpush1.msra.mxu0 %v2612
        %2651 = vmatprep.subr.mxu0 0.0
        %2652 = vmatpush1.msra.mxu0 %v2611
        %2653 = vmatprep.subr.mxu0 0.0
        %2654 = vmatpush1.msra.mxu0 %v2610
        %2655 = vmatprep.subr.mxu0 0.0
        %2656 = vmatpush1.msra.mxu0 %v2609
        %2657 = vmatprep.subr.mxu0 0.0
        %2658 = vmatpush2.msra.mxu0 0.0
        %2659 = vmatprep.subr.mxu0 0.0
        %2660 = vmatpush2.msra.mxu0 0.0
        %2661 = vmatprep.subr.mxu0 0.0
        %2662 = vmatpush2.msra.mxu0 0.0
        %2663 = vmatprep.subr.mxu0 0.0
        %2664 = vmatpush2.msra.mxu0 0.0
        %2665 = vmatprep.subr.mxu0 0.0
        %2666 = vmatpush2.msra.mxu0 0.0
        %2667 = vmatprep.subr.mxu0 0.0
        %2668 = vmatpush2.msra.mxu0 0.0
        %2669 = vmatprep.subr.mxu0 0.0
        %2670 = vmatpush2.msra.mxu0 0.0
        %2671 = vmatprep.subr.mxu0 0.0
        %2672 = vmatpush2.msra.mxu0 0.0
        %2673 = vmatprep.subr.mxu0 0.0
        %2674 = vmatpush2.msra.mxu0 0.0
        %2675 = vmatprep.subr.mxu0 0.0
        %2676 = vmatpush2.msra.mxu0 0.0
        %2677 = vmatprep.subr.mxu0 0.0
        %2678 = vmatpush2.msra.mxu0 0.0
        %2679 = vmatprep.subr.mxu0 0.0
        %2680 = vmatpush2.msra.mxu0 0.0
        %2681 = vmatprep.subr.mxu0 0.0
        %2682 = vmatpush2.msra.mxu0 0.0
        %2683 = vmatprep.subr.mxu0 0.0
        %2684 = vmatpush2.msra.mxu0 0.0
        %2685 = vmatprep.subr.mxu0 0.0
        %2686 = vmatpush2.msra.mxu0 0.0
        %2687 = vmatprep.subr.mxu0 0.0
        %2688 = vmatpush2.msra.mxu0 0.0
        %2689 = vmatprep.mubr.f32.mxu0 0.0
        %2690 = vmatmul.mubr.f32.gmra.mxu0 %v2600
        %v2691 = vpop.f32.mrf.mxu0
        %v2692 = vadd.f32 0.0, %v2691
        %v2693 = vpop.f32.mrf.mxu0
        %2694 = vmatprep.mubr.f32.mxu0 0.0
        %2695 = vmatmul.mubr.f32.gmra.mxu0 %v2601
        %v2696 = vpop.f32.mrf.mxu0
        %v2697 = vadd.f32 0.0, %v2696
        %v2698 = vpop.f32.mrf.mxu0
        %2699 = vmatprep.mubr.f32.mxu0 0.0
        %2700 = vmatmul.mubr.f32.gmra.mxu0 %v2602
        %v2701 = vpop.f32.mrf.mxu0
        %v2702 = vadd.f32 0.0, %v2701
        %v2703 = vpop.f32.mrf.mxu0
        %2704 = vmatprep.mubr.f32.mxu0 0.0
        %2705 = vmatmul.mubr.f32.gmra.mxu0 %v2603
        %v2706 = vpop.f32.mrf.mxu0
        %v2707 = vadd.f32 0.0, %v2706
        %v2708 = vpop.f32.mrf.mxu0
        %2709 = vmatprep.mubr.f32.mxu0 0.0
        %2710 = vmatmul.mubr.f32.gmra.mxu0 %v2604
        %v2711 = vpop.f32.mrf.mxu0
        %v2712 = vadd.f32 0.0, %v2711
        %v2713 = vpop.f32.mrf.mxu0
        %2714 = vmatprep.mubr.f32.mxu0 0.0
        %2715 = vmatmul.mubr.f32.gmra.mxu0 %v2605
        %v2716 = vpop.f32.mrf.mxu0
        %v2717 = vadd.f32 0.0, %v2716
        %v2718 = vpop.f32.mrf.mxu0
        %2719 = vmatprep.mubr.f32.mxu0 0.0
        %2720 = vmatmul.mubr.f32.gmra.mxu0 %v2606
        %v2721 = vpop.f32.mrf.mxu0
        %v2722 = vadd.f32 0.0, %v2721
        %v2723 = vpop.f32.mrf.mxu0
        %2724 = vmatprep.mubr.f32.mxu0 0.0
        %2725 = vmatmul.mubr.f32.gmra.mxu0 %v2607
        %v2726 = vpop.f32.mrf.mxu0
        %v2727 = vadd.f32 0.0, %v2726
        %v2728 = vpop.f32.mrf.mxu0
        %2729 = vdwg.mxu0
        %v2730 = vadd.f32 %v2592, %v2692
        %v2731 = vadd.f32 %v2593, %v2697
        %v2732 = vadd.f32 %v2594, %v2702
        %v2733 = vadd.f32 %v2595, %v2707
        %v2734 = vadd.f32 %v2596, %v2712
        %v2735 = vadd.f32 %v2597, %v2717
        %v2736 = vadd.f32 %v2598, %v2722
        %v2737 = vadd.f32 %v2599, %v2727
        %s2738 = scalar_lea.vmem [#allocation3], 16
        %v2739 = vld [vmem:[%s2738] sm:$0xff]
        %v2740 = vld [vmem:[%s2738 + $0x10] sm:$0xff]
        %v2741 = vld [vmem:[%s2738 + $0x20] sm:$0xff]
        %v2742 = vld [vmem:[%s2738 + $0x30] sm:$0xff]
        %v2743 = vld [vmem:[%s2738 + $0x40] sm:$0xff]
        %v2744 = vld [vmem:[%s2738 + $0x50] sm:$0xff]
        %v2745 = vld [vmem:[%s2738 + $0x60] sm:$0xff]
        %v2746 = vld [vmem:[%s2738 + $0x70] sm:$0xff]
        %s2747 = scalar_lea.vmem [#allocation12], 384
        %v2748 = vld [vmem:[%s2747] sm:$0xff]
        %v2749 = vld [vmem:[%s2747 + $0x8] sm:$0xff]
        %v2750 = vld [vmem:[%s2747 + $0x10] sm:$0xff]
        %v2751 = vld [vmem:[%s2747 + $0x18] sm:$0xff]
        %v2752 = vld [vmem:[%s2747 + $0x20] sm:$0xff]
        %v2753 = vld [vmem:[%s2747 + $0x28] sm:$0xff]
        %v2754 = vld [vmem:[%s2747 + $0x30] sm:$0xff]
        %v2755 = vld [vmem:[%s2747 + $0x38] sm:$0xff]
        %v2756 = vld [vmem:[%s2747 + $0x40] sm:$0xff]
        %v2757 = vld [vmem:[%s2747 + $0x48] sm:$0xff]
        %v2758 = vld [vmem:[%s2747 + $0x50] sm:$0xff]
        %v2759 = vld [vmem:[%s2747 + $0x58] sm:$0xff]
        %v2760 = vld [vmem:[%s2747 + $0x60] sm:$0xff]
        %v2761 = vld [vmem:[%s2747 + $0x68] sm:$0xff]
        %v2762 = vld [vmem:[%s2747 + $0x70] sm:$0xff]
        %v2763 = vld [vmem:[%s2747 + $0x78] sm:$0xff]
        %2764 = vmatprep.subr.mxu0 0.0
        %2765 = vmatpush1.msra.mxu0 %v2763
        %2766 = vmatprep.subr.mxu0 0.0
        %2767 = vmatpush1.msra.mxu0 %v2762
        %2768 = vmatprep.subr.mxu0 0.0
        %2769 = vmatpush1.msra.mxu0 %v2761
        %2770 = vmatprep.subr.mxu0 0.0
        %2771 = vmatpush1.msra.mxu0 %v2760
        %2772 = vmatprep.subr.mxu0 0.0
        %2773 = vmatpush1.msra.mxu0 %v2759
        %2774 = vmatprep.subr.mxu0 0.0
        %2775 = vmatpush1.msra.mxu0 %v2758
        %2776 = vmatprep.subr.mxu0 0.0
        %2777 = vmatpush1.msra.mxu0 %v2757
        %2778 = vmatprep.subr.mxu0 0.0
        %2779 = vmatpush1.msra.mxu0 %v2756
        %2780 = vmatprep.subr.mxu0 0.0
        %2781 = vmatpush1.msra.mxu0 %v2755
        %2782 = vmatprep.subr.mxu0 0.0
        %2783 = vmatpush1.msra.mxu0 %v2754
        %2784 = vmatprep.subr.mxu0 0.0
        %2785 = vmatpush1.msra.mxu0 %v2753
        %2786 = vmatprep.subr.mxu0 0.0
        %2787 = vmatpush1.msra.mxu0 %v2752
        %2788 = vmatprep.subr.mxu0 0.0
        %2789 = vmatpush1.msra.mxu0 %v2751
        %2790 = vmatprep.subr.mxu0 0.0
        %2791 = vmatpush1.msra.mxu0 %v2750
        %2792 = vmatprep.subr.mxu0 0.0
        %2793 = vmatpush1.msra.mxu0 %v2749
        %2794 = vmatprep.subr.mxu0 0.0
        %2795 = vmatpush1.msra.mxu0 %v2748
        %2796 = vmatprep.subr.mxu0 0.0
        %2797 = vmatpush2.msra.mxu0 0.0
        %2798 = vmatprep.subr.mxu0 0.0
        %2799 = vmatpush2.msra.mxu0 0.0
        %2800 = vmatprep.subr.mxu0 0.0
        %2801 = vmatpush2.msra.mxu0 0.0
        %2802 = vmatprep.subr.mxu0 0.0
        %2803 = vmatpush2.msra.mxu0 0.0
        %2804 = vmatprep.subr.mxu0 0.0
        %2805 = vmatpush2.msra.mxu0 0.0
        %2806 = vmatprep.subr.mxu0 0.0
        %2807 = vmatpush2.msra.mxu0 0.0
        %2808 = vmatprep.subr.mxu0 0.0
        %2809 = vmatpush2.msra.mxu0 0.0
        %2810 = vmatprep.subr.mxu0 0.0
        %2811 = vmatpush2.msra.mxu0 0.0
        %2812 = vmatprep.subr.mxu0 0.0
        %2813 = vmatpush2.msra.mxu0 0.0
        %2814 = vmatprep.subr.mxu0 0.0
        %2815 = vmatpush2.msra.mxu0 0.0
        %2816 = vmatprep.subr.mxu0 0.0
        %2817 = vmatpush2.msra.mxu0 0.0
        %2818 = vmatprep.subr.mxu0 0.0
        %2819 = vmatpush2.msra.mxu0 0.0
        %2820 = vmatprep.subr.mxu0 0.0
        %2821 = vmatpush2.msra.mxu0 0.0
        %2822 = vmatprep.subr.mxu0 0.0
        %2823 = vmatpush2.msra.mxu0 0.0
        %2824 = vmatprep.subr.mxu0 0.0
        %2825 = vmatpush2.msra.mxu0 0.0
        %2826 = vmatprep.subr.mxu0 0.0
        %2827 = vmatpush2.msra.mxu0 0.0
        %2828 = vmatprep.mubr.f32.mxu0 0.0
        %2829 = vmatmul.mubr.f32.gmra.mxu0 %v2739
        %v2830 = vpop.f32.mrf.mxu0
        %v2831 = vadd.f32 0.0, %v2830
        %v2832 = vpop.f32.mrf.mxu0
        %2833 = vmatprep.mubr.f32.mxu0 0.0
        %2834 = vmatmul.mubr.f32.gmra.mxu0 %v2740
        %v2835 = vpop.f32.mrf.mxu0
        %v2836 = vadd.f32 0.0, %v2835
        %v2837 = vpop.f32.mrf.mxu0
        %2838 = vmatprep.mubr.f32.mxu0 0.0
        %2839 = vmatmul.mubr.f32.gmra.mxu0 %v2741
        %v2840 = vpop.f32.mrf.mxu0
        %v2841 = vadd.f32 0.0, %v2840
        %v2842 = vpop.f32.mrf.mxu0
        %2843 = vmatprep.mubr.f32.mxu0 0.0
        %2844 = vmatmul.mubr.f32.gmra.mxu0 %v2742
        %v2845 = vpop.f32.mrf.mxu0
        %v2846 = vadd.f32 0.0, %v2845
        %v2847 = vpop.f32.mrf.mxu0
        %2848 = vmatprep.mubr.f32.mxu0 0.0
        %2849 = vmatmul.mubr.f32.gmra.mxu0 %v2743
        %v2850 = vpop.f32.mrf.mxu0
        %v2851 = vadd.f32 0.0, %v2850
        %v2852 = vpop.f32.mrf.mxu0
        %2853 = vmatprep.mubr.f32.mxu0 0.0
        %2854 = vmatmul.mubr.f32.gmra.mxu0 %v2744
        %v2855 = vpop.f32.mrf.mxu0
        %v2856 = vadd.f32 0.0, %v2855
        %v2857 = vpop.f32.mrf.mxu0
        %2858 = vmatprep.mubr.f32.mxu0 0.0
        %2859 = vmatmul.mubr.f32.gmra.mxu0 %v2745
        %v2860 = vpop.f32.mrf.mxu0
        %v2861 = vadd.f32 0.0, %v2860
        %v2862 = vpop.f32.mrf.mxu0
        %2863 = vmatprep.mubr.f32.mxu0 0.0
        %2864 = vmatmul.mubr.f32.gmra.mxu0 %v2746
        %v2865 = vpop.f32.mrf.mxu0
        %v2866 = vadd.f32 0.0, %v2865
        %v2867 = vpop.f32.mrf.mxu0
        %2868 = vdwg.mxu0
        %v2869 = vadd.f32 %v2730, %v2831
        %v2870 = vadd.f32 %v2731, %v2836
        %v2871 = vadd.f32 %v2732, %v2841
        %v2872 = vadd.f32 %v2733, %v2846
        %v2873 = vadd.f32 %v2734, %v2851
        %v2874 = vadd.f32 %v2735, %v2856
        %v2875 = vadd.f32 %v2736, %v2861
        %v2876 = vadd.f32 %v2737, %v2866
        %v2877 = vld [vmem:[%s2738 + $0x1] sm:$0xff]
        %v2878 = vld [vmem:[%s2738 + $0x11] sm:$0xff]
        %v2879 = vld [vmem:[%s2738 + $0x21] sm:$0xff]
        %v2880 = vld [vmem:[%s2738 + $0x31] sm:$0xff]
        %v2881 = vld [vmem:[%s2738 + $0x41] sm:$0xff]
        %v2882 = vld [vmem:[%s2738 + $0x51] sm:$0xff]
        %v2883 = vld [vmem:[%s2738 + $0x61] sm:$0xff]
        %v2884 = vld [vmem:[%s2738 + $0x71] sm:$0xff]
        %s2885 = scalar_lea.vmem [#allocation12], 512
        %v2886 = vld [vmem:[%s2885] sm:$0xff]
        %v2887 = vld [vmem:[%s2885 + $0x8] sm:$0xff]
        %v2888 = vld [vmem:[%s2885 + $0x10] sm:$0xff]
        %v2889 = vld [vmem:[%s2885 + $0x18] sm:$0xff]
        %v2890 = vld [vmem:[%s2885 + $0x20] sm:$0xff]
        %v2891 = vld [vmem:[%s2885 + $0x28] sm:$0xff]
        %v2892 = vld [vmem:[%s2885 + $0x30] sm:$0xff]
        %v2893 = vld [vmem:[%s2885 + $0x38] sm:$0xff]
        %v2894 = vld [vmem:[%s2885 + $0x40] sm:$0xff]
        %v2895 = vld [vmem:[%s2885 + $0x48] sm:$0xff]
        %v2896 = vld [vmem:[%s2885 + $0x50] sm:$0xff]
        %v2897 = vld [vmem:[%s2885 + $0x58] sm:$0xff]
        %v2898 = vld [vmem:[%s2885 + $0x60] sm:$0xff]
        %v2899 = vld [vmem:[%s2885 + $0x68] sm:$0xff]
        %v2900 = vld [vmem:[%s2885 + $0x70] sm:$0xff]
        %v2901 = vld [vmem:[%s2885 + $0x78] sm:$0xff]
        %2902 = vmatprep.subr.mxu0 0.0
        %2903 = vmatpush1.msra.mxu0 %v2901
        %2904 = vmatprep.subr.mxu0 0.0
        %2905 = vmatpush1.msra.mxu0 %v2900
        %2906 = vmatprep.subr.mxu0 0.0
        %2907 = vmatpush1.msra.mxu0 %v2899
        %2908 = vmatprep.subr.mxu0 0.0
        %2909 = vmatpush1.msra.mxu0 %v2898
        %2910 = vmatprep.subr.mxu0 0.0
        %2911 = vmatpush1.msra.mxu0 %v2897
        %2912 = vmatprep.subr.mxu0 0.0
        %2913 = vmatpush1.msra.mxu0 %v2896
        %2914 = vmatprep.subr.mxu0 0.0
        %2915 = vmatpush1.msra.mxu0 %v2895
        %2916 = vmatprep.subr.mxu0 0.0
        %2917 = vmatpush1.msra.mxu0 %v2894
        %2918 = vmatprep.subr.mxu0 0.0
        %2919 = vmatpush1.msra.mxu0 %v2893
        %2920 = vmatprep.subr.mxu0 0.0
        %2921 = vmatpush1.msra.mxu0 %v2892
        %2922 = vmatprep.subr.mxu0 0.0
        %2923 = vmatpush1.msra.mxu0 %v2891
        %2924 = vmatprep.subr.mxu0 0.0
        %2925 = vmatpush1.msra.mxu0 %v2890
        %2926 = vmatprep.subr.mxu0 0.0
        %2927 = vmatpush1.msra.mxu0 %v2889
        %2928 = vmatprep.subr.mxu0 0.0
        %2929 = vmatpush1.msra.mxu0 %v2888
        %2930 = vmatprep.subr.mxu0 0.0
        %2931 = vmatpush1.msra.mxu0 %v2887
        %2932 = vmatprep.subr.mxu0 0.0
        %2933 = vmatpush1.msra.mxu0 %v2886
        %2934 = vmatprep.subr.mxu0 0.0
        %2935 = vmatpush2.msra.mxu0 0.0
        %2936 = vmatprep.subr.mxu0 0.0
        %2937 = vmatpush2.msra.mxu0 0.0
        %2938 = vmatprep.subr.mxu0 0.0
        %2939 = vmatpush2.msra.mxu0 0.0
        %2940 = vmatprep.subr.mxu0 0.0
        %2941 = vmatpush2.msra.mxu0 0.0
        %2942 = vmatprep.subr.mxu0 0.0
        %2943 = vmatpush2.msra.mxu0 0.0
        %2944 = vmatprep.subr.mxu0 0.0
        %2945 = vmatpush2.msra.mxu0 0.0
        %2946 = vmatprep.subr.mxu0 0.0
        %2947 = vmatpush2.msra.mxu0 0.0
        %2948 = vmatprep.subr.mxu0 0.0
        %2949 = vmatpush2.msra.mxu0 0.0
        %2950 = vmatprep.subr.mxu0 0.0
        %2951 = vmatpush2.msra.mxu0 0.0
        %2952 = vmatprep.subr.mxu0 0.0
        %2953 = vmatpush2.msra.mxu0 0.0
        %2954 = vmatprep.subr.mxu0 0.0
        %2955 = vmatpush2.msra.mxu0 0.0
        %2956 = vmatprep.subr.mxu0 0.0
        %2957 = vmatpush2.msra.mxu0 0.0
        %2958 = vmatprep.subr.mxu0 0.0
        %2959 = vmatpush2.msra.mxu0 0.0
        %2960 = vmatprep.subr.mxu0 0.0
        %2961 = vmatpush2.msra.mxu0 0.0
        %2962 = vmatprep.subr.mxu0 0.0
        %2963 = vmatpush2.msra.mxu0 0.0
        %2964 = vmatprep.subr.mxu0 0.0
        %2965 = vmatpush2.msra.mxu0 0.0
        %2966 = vmatprep.mubr.f32.mxu0 0.0
        %2967 = vmatmul.mubr.f32.gmra.mxu0 %v2877
        %v2968 = vpop.f32.mrf.mxu0
        %v2969 = vadd.f32 0.0, %v2968
        %v2970 = vpop.f32.mrf.mxu0
        %2971 = vmatprep.mubr.f32.mxu0 0.0
        %2972 = vmatmul.mubr.f32.gmra.mxu0 %v2878
        %v2973 = vpop.f32.mrf.mxu0
        %v2974 = vadd.f32 0.0, %v2973
        %v2975 = vpop.f32.mrf.mxu0
        %2976 = vmatprep.mubr.f32.mxu0 0.0
        %2977 = vmatmul.mubr.f32.gmra.mxu0 %v2879
        %v2978 = vpop.f32.mrf.mxu0
        %v2979 = vadd.f32 0.0, %v2978
        %v2980 = vpop.f32.mrf.mxu0
        %2981 = vmatprep.mubr.f32.mxu0 0.0
        %2982 = vmatmul.mubr.f32.gmra.mxu0 %v2880
        %v2983 = vpop.f32.mrf.mxu0
        %v2984 = vadd.f32 0.0, %v2983
        %v2985 = vpop.f32.mrf.mxu0
        %2986 = vmatprep.mubr.f32.mxu0 0.0
        %2987 = vmatmul.mubr.f32.gmra.mxu0 %v2881
        %v2988 = vpop.f32.mrf.mxu0
        %v2989 = vadd.f32 0.0, %v2988
        %v2990 = vpop.f32.mrf.mxu0
        %2991 = vmatprep.mubr.f32.mxu0 0.0
        %2992 = vmatmul.mubr.f32.gmra.mxu0 %v2882
        %v2993 = vpop.f32.mrf.mxu0
        %v2994 = vadd.f32 0.0, %v2993
        %v2995 = vpop.f32.mrf.mxu0
        %2996 = vmatprep.mubr.f32.mxu0 0.0
        %2997 = vmatmul.mubr.f32.gmra.mxu0 %v2883
        %v2998 = vpop.f32.mrf.mxu0
        %v2999 = vadd.f32 0.0, %v2998
        %v3000 = vpop.f32.mrf.mxu0
        %3001 = vmatprep.mubr.f32.mxu0 0.0
        %3002 = vmatmul.mubr.f32.gmra.mxu0 %v2884
        %v3003 = vpop.f32.mrf.mxu0
        %v3004 = vadd.f32 0.0, %v3003
        %v3005 = vpop.f32.mrf.mxu0
        %3006 = vdwg.mxu0
        %v3007 = vadd.f32 %v2869, %v2969
        %v3008 = vadd.f32 %v2870, %v2974
        %v3009 = vadd.f32 %v2871, %v2979
        %v3010 = vadd.f32 %v2872, %v2984
        %v3011 = vadd.f32 %v2873, %v2989
        %v3012 = vadd.f32 %v2874, %v2994
        %v3013 = vadd.f32 %v2875, %v2999
        %v3014 = vadd.f32 %v2876, %v3004
        %v3015 = vld [vmem:[%s2738 + $0x2] sm:$0xff]
        %v3016 = vld [vmem:[%s2738 + $0x12] sm:$0xff]
        %v3017 = vld [vmem:[%s2738 + $0x22] sm:$0xff]
        %v3018 = vld [vmem:[%s2738 + $0x32] sm:$0xff]
        %v3019 = vld [vmem:[%s2738 + $0x42] sm:$0xff]
        %v3020 = vld [vmem:[%s2738 + $0x52] sm:$0xff]
        %v3021 = vld [vmem:[%s2738 + $0x62] sm:$0xff]
        %v3022 = vld [vmem:[%s2738 + $0x72] sm:$0xff]
        %s3023 = scalar_lea.vmem [#allocation12], 640
        %v3024 = vld [vmem:[%s3023] sm:$0xff]
        %v3025 = vld [vmem:[%s3023 + $0x8] sm:$0xff]
        %v3026 = vld [vmem:[%s3023 + $0x10] sm:$0xff]
        %v3027 = vld [vmem:[%s3023 + $0x18] sm:$0xff]
        %v3028 = vld [vmem:[%s3023 + $0x20] sm:$0xff]
        %v3029 = vld [vmem:[%s3023 + $0x28] sm:$0xff]
        %v3030 = vld [vmem:[%s3023 + $0x30] sm:$0xff]
        %v3031 = vld [vmem:[%s3023 + $0x38] sm:$0xff]
        %v3032 = vld [vmem:[%s3023 + $0x40] sm:$0xff]
        %v3033 = vld [vmem:[%s3023 + $0x48] sm:$0xff]
        %v3034 = vld [vmem:[%s3023 + $0x50] sm:$0xff]
        %v3035 = vld [vmem:[%s3023 + $0x58] sm:$0xff]
        %v3036 = vld [vmem:[%s3023 + $0x60] sm:$0xff]
        %v3037 = vld [vmem:[%s3023 + $0x68] sm:$0xff]
        %v3038 = vld [vmem:[%s3023 + $0x70] sm:$0xff]
        %v3039 = vld [vmem:[%s3023 + $0x78] sm:$0xff]
        %3040 = vmatprep.subr.mxu0 0.0
        %3041 = vmatpush1.msra.mxu0 %v3039
        %3042 = vmatprep.subr.mxu0 0.0
        %3043 = vmatpush1.msra.mxu0 %v3038
        %3044 = vmatprep.subr.mxu0 0.0
        %3045 = vmatpush1.msra.mxu0 %v3037
        %3046 = vmatprep.subr.mxu0 0.0
        %3047 = vmatpush1.msra.mxu0 %v3036
        %3048 = vmatprep.subr.mxu0 0.0
        %3049 = vmatpush1.msra.mxu0 %v3035
        %3050 = vmatprep.subr.mxu0 0.0
        %3051 = vmatpush1.msra.mxu0 %v3034
        %3052 = vmatprep.subr.mxu0 0.0
        %3053 = vmatpush1.msra.mxu0 %v3033
        %3054 = vmatprep.subr.mxu0 0.0
        %3055 = vmatpush1.msra.mxu0 %v3032
        %3056 = vmatprep.subr.mxu0 0.0
        %3057 = vmatpush1.msra.mxu0 %v3031
        %3058 = vmatprep.subr.mxu0 0.0
        %3059 = vmatpush1.msra.mxu0 %v3030
        %3060 = vmatprep.subr.mxu0 0.0
        %3061 = vmatpush1.msra.mxu0 %v3029
        %3062 = vmatprep.subr.mxu0 0.0
        %3063 = vmatpush1.msra.mxu0 %v3028
        %3064 = vmatprep.subr.mxu0 0.0
        %3065 = vmatpush1.msra.mxu0 %v3027
        %3066 = vmatprep.subr.mxu0 0.0
        %3067 = vmatpush1.msra.mxu0 %v3026
        %3068 = vmatprep.subr.mxu0 0.0
        %3069 = vmatpush1.msra.mxu0 %v3025
        %3070 = vmatprep.subr.mxu0 0.0
        %3071 = vmatpush1.msra.mxu0 %v3024
        %3072 = vmatprep.subr.mxu0 0.0
        %3073 = vmatpush2.msra.mxu0 0.0
        %3074 = vmatprep.subr.mxu0 0.0
        %3075 = vmatpush2.msra.mxu0 0.0
        %3076 = vmatprep.subr.mxu0 0.0
        %3077 = vmatpush2.msra.mxu0 0.0
        %3078 = vmatprep.subr.mxu0 0.0
        %3079 = vmatpush2.msra.mxu0 0.0
        %3080 = vmatprep.subr.mxu0 0.0
        %3081 = vmatpush2.msra.mxu0 0.0
        %3082 = vmatprep.subr.mxu0 0.0
        %3083 = vmatpush2.msra.mxu0 0.0
        %3084 = vmatprep.subr.mxu0 0.0
        %3085 = vmatpush2.msra.mxu0 0.0
        %3086 = vmatprep.subr.mxu0 0.0
        %3087 = vmatpush2.msra.mxu0 0.0
        %3088 = vmatprep.subr.mxu0 0.0
        %3089 = vmatpush2.msra.mxu0 0.0
        %3090 = vmatprep.subr.mxu0 0.0
        %3091 = vmatpush2.msra.mxu0 0.0
        %3092 = vmatprep.subr.mxu0 0.0
        %3093 = vmatpush2.msra.mxu0 0.0
        %3094 = vmatprep.subr.mxu0 0.0
        %3095 = vmatpush2.msra.mxu0 0.0
        %3096 = vmatprep.subr.mxu0 0.0
        %3097 = vmatpush2.msra.mxu0 0.0
        %3098 = vmatprep.subr.mxu0 0.0
        %3099 = vmatpush2.msra.mxu0 0.0
        %3100 = vmatprep.subr.mxu0 0.0
        %3101 = vmatpush2.msra.mxu0 0.0
        %3102 = vmatprep.subr.mxu0 0.0
        %3103 = vmatpush2.msra.mxu0 0.0
        %3104 = vmatprep.mubr.f32.mxu0 0.0
        %3105 = vmatmul.mubr.f32.gmra.mxu0 %v3015
        %v3106 = vpop.f32.mrf.mxu0
        %v3107 = vadd.f32 0.0, %v3106
        %v3108 = vpop.f32.mrf.mxu0
        %3109 = vmatprep.mubr.f32.mxu0 0.0
        %3110 = vmatmul.mubr.f32.gmra.mxu0 %v3016
        %v3111 = vpop.f32.mrf.mxu0
        %v3112 = vadd.f32 0.0, %v3111
        %v3113 = vpop.f32.mrf.mxu0
        %3114 = vmatprep.mubr.f32.mxu0 0.0
        %3115 = vmatmul.mubr.f32.gmra.mxu0 %v3017
        %v3116 = vpop.f32.mrf.mxu0
        %v3117 = vadd.f32 0.0, %v3116
        %v3118 = vpop.f32.mrf.mxu0
        %3119 = vmatprep.mubr.f32.mxu0 0.0
        %3120 = vmatmul.mubr.f32.gmra.mxu0 %v3018
        %v3121 = vpop.f32.mrf.mxu0
        %v3122 = vadd.f32 0.0, %v3121
        %v3123 = vpop.f32.mrf.mxu0
        %3124 = vmatprep.mubr.f32.mxu0 0.0
        %3125 = vmatmul.mubr.f32.gmra.mxu0 %v3019
        %v3126 = vpop.f32.mrf.mxu0
        %v3127 = vadd.f32 0.0, %v3126
        %v3128 = vpop.f32.mrf.mxu0
        %3129 = vmatprep.mubr.f32.mxu0 0.0
        %3130 = vmatmul.mubr.f32.gmra.mxu0 %v3020
        %v3131 = vpop.f32.mrf.mxu0
        %v3132 = vadd.f32 0.0, %v3131
        %v3133 = vpop.f32.mrf.mxu0
        %3134 = vmatprep.mubr.f32.mxu0 0.0
        %3135 = vmatmul.mubr.f32.gmra.mxu0 %v3021
        %v3136 = vpop.f32.mrf.mxu0
        %v3137 = vadd.f32 0.0, %v3136
        %v3138 = vpop.f32.mrf.mxu0
        %3139 = vmatprep.mubr.f32.mxu0 0.0
        %3140 = vmatmul.mubr.f32.gmra.mxu0 %v3022
        %v3141 = vpop.f32.mrf.mxu0
        %v3142 = vadd.f32 0.0, %v3141
        %v3143 = vpop.f32.mrf.mxu0
        %3144 = vdwg.mxu0
        %v3145 = vadd.f32 %v3007, %v3107
        %v3146 = vadd.f32 %v3008, %v3112
        %v3147 = vadd.f32 %v3009, %v3117
        %v3148 = vadd.f32 %v3010, %v3122
        %v3149 = vadd.f32 %v3011, %v3127
        %v3150 = vadd.f32 %v3012, %v3132
        %v3151 = vadd.f32 %v3013, %v3137
        %v3152 = vadd.f32 %v3014, %v3142
        %s3153 = scalar_lea.vmem [#allocation3], 32
        %v3154 = vld [vmem:[%s3153] sm:$0xff]
        %v3155 = vld [vmem:[%s3153 + $0x10] sm:$0xff]
        %v3156 = vld [vmem:[%s3153 + $0x20] sm:$0xff]
        %v3157 = vld [vmem:[%s3153 + $0x30] sm:$0xff]
        %v3158 = vld [vmem:[%s3153 + $0x40] sm:$0xff]
        %v3159 = vld [vmem:[%s3153 + $0x50] sm:$0xff]
        %v3160 = vld [vmem:[%s3153 + $0x60] sm:$0xff]
        %v3161 = vld [vmem:[%s3153 + $0x70] sm:$0xff]
        %s3162 = scalar_lea.vmem [#allocation12], 768
        %v3163 = vld [vmem:[%s3162] sm:$0xff]
        %v3164 = vld [vmem:[%s3162 + $0x8] sm:$0xff]
        %v3165 = vld [vmem:[%s3162 + $0x10] sm:$0xff]
        %v3166 = vld [vmem:[%s3162 + $0x18] sm:$0xff]
        %v3167 = vld [vmem:[%s3162 + $0x20] sm:$0xff]
        %v3168 = vld [vmem:[%s3162 + $0x28] sm:$0xff]
        %v3169 = vld [vmem:[%s3162 + $0x30] sm:$0xff]
        %v3170 = vld [vmem:[%s3162 + $0x38] sm:$0xff]
        %v3171 = vld [vmem:[%s3162 + $0x40] sm:$0xff]
        %v3172 = vld [vmem:[%s3162 + $0x48] sm:$0xff]
        %v3173 = vld [vmem:[%s3162 + $0x50] sm:$0xff]
        %v3174 = vld [vmem:[%s3162 + $0x58] sm:$0xff]
        %v3175 = vld [vmem:[%s3162 + $0x60] sm:$0xff]
        %v3176 = vld [vmem:[%s3162 + $0x68] sm:$0xff]
        %v3177 = vld [vmem:[%s3162 + $0x70] sm:$0xff]
        %v3178 = vld [vmem:[%s3162 + $0x78] sm:$0xff]
        %3179 = vmatprep.subr.mxu0 0.0
        %3180 = vmatpush1.msra.mxu0 %v3178
        %3181 = vmatprep.subr.mxu0 0.0
        %3182 = vmatpush1.msra.mxu0 %v3177
        %3183 = vmatprep.subr.mxu0 0.0
        %3184 = vmatpush1.msra.mxu0 %v3176
        %3185 = vmatprep.subr.mxu0 0.0
        %3186 = vmatpush1.msra.mxu0 %v3175
        %3187 = vmatprep.subr.mxu0 0.0
        %3188 = vmatpush1.msra.mxu0 %v3174
        %3189 = vmatprep.subr.mxu0 0.0
        %3190 = vmatpush1.msra.mxu0 %v3173
        %3191 = vmatprep.subr.mxu0 0.0
        %3192 = vmatpush1.msra.mxu0 %v3172
        %3193 = vmatprep.subr.mxu0 0.0
        %3194 = vmatpush1.msra.mxu0 %v3171
        %3195 = vmatprep.subr.mxu0 0.0
        %3196 = vmatpush1.msra.mxu0 %v3170
        %3197 = vmatprep.subr.mxu0 0.0
        %3198 = vmatpush1.msra.mxu0 %v3169
        %3199 = vmatprep.subr.mxu0 0.0
        %3200 = vmatpush1.msra.mxu0 %v3168
        %3201 = vmatprep.subr.mxu0 0.0
        %3202 = vmatpush1.msra.mxu0 %v3167
        %3203 = vmatprep.subr.mxu0 0.0
        %3204 = vmatpush1.msra.mxu0 %v3166
        %3205 = vmatprep.subr.mxu0 0.0
        %3206 = vmatpush1.msra.mxu0 %v3165
        %3207 = vmatprep.subr.mxu0 0.0
        %3208 = vmatpush1.msra.mxu0 %v3164
        %3209 = vmatprep.subr.mxu0 0.0
        %3210 = vmatpush1.msra.mxu0 %v3163
        %3211 = vmatprep.subr.mxu0 0.0
        %3212 = vmatpush2.msra.mxu0 0.0
        %3213 = vmatprep.subr.mxu0 0.0
        %3214 = vmatpush2.msra.mxu0 0.0
        %3215 = vmatprep.subr.mxu0 0.0
        %3216 = vmatpush2.msra.mxu0 0.0
        %3217 = vmatprep.subr.mxu0 0.0
        %3218 = vmatpush2.msra.mxu0 0.0
        %3219 = vmatprep.subr.mxu0 0.0
        %3220 = vmatpush2.msra.mxu0 0.0
        %3221 = vmatprep.subr.mxu0 0.0
        %3222 = vmatpush2.msra.mxu0 0.0
        %3223 = vmatprep.subr.mxu0 0.0
        %3224 = vmatpush2.msra.mxu0 0.0
        %3225 = vmatprep.subr.mxu0 0.0
        %3226 = vmatpush2.msra.mxu0 0.0
        %3227 = vmatprep.subr.mxu0 0.0
        %3228 = vmatpush2.msra.mxu0 0.0
        %3229 = vmatprep.subr.mxu0 0.0
        %3230 = vmatpush2.msra.mxu0 0.0
        %3231 = vmatprep.subr.mxu0 0.0
        %3232 = vmatpush2.msra.mxu0 0.0
        %3233 = vmatprep.subr.mxu0 0.0
        %3234 = vmatpush2.msra.mxu0 0.0
        %3235 = vmatprep.subr.mxu0 0.0
        %3236 = vmatpush2.msra.mxu0 0.0
        %3237 = vmatprep.subr.mxu0 0.0
        %3238 = vmatpush2.msra.mxu0 0.0
        %3239 = vmatprep.subr.mxu0 0.0
        %3240 = vmatpush2.msra.mxu0 0.0
        %3241 = vmatprep.subr.mxu0 0.0
        %3242 = vmatpush2.msra.mxu0 0.0
        %3243 = vmatprep.mubr.f32.mxu0 0.0
        %3244 = vmatmul.mubr.f32.gmra.mxu0 %v3154
        %v3245 = vpop.f32.mrf.mxu0
        %v3246 = vadd.f32 0.0, %v3245
        %v3247 = vpop.f32.mrf.mxu0
        %3248 = vmatprep.mubr.f32.mxu0 0.0
        %3249 = vmatmul.mubr.f32.gmra.mxu0 %v3155
        %v3250 = vpop.f32.mrf.mxu0
        %v3251 = vadd.f32 0.0, %v3250
        %v3252 = vpop.f32.mrf.mxu0
        %3253 = vmatprep.mubr.f32.mxu0 0.0
        %3254 = vmatmul.mubr.f32.gmra.mxu0 %v3156
        %v3255 = vpop.f32.mrf.mxu0
        %v3256 = vadd.f32 0.0, %v3255
        %v3257 = vpop.f32.mrf.mxu0
        %3258 = vmatprep.mubr.f32.mxu0 0.0
        %3259 = vmatmul.mubr.f32.gmra.mxu0 %v3157
        %v3260 = vpop.f32.mrf.mxu0
        %v3261 = vadd.f32 0.0, %v3260
        %v3262 = vpop.f32.mrf.mxu0
        %3263 = vmatprep.mubr.f32.mxu0 0.0
        %3264 = vmatmul.mubr.f32.gmra.mxu0 %v3158
        %v3265 = vpop.f32.mrf.mxu0
        %v3266 = vadd.f32 0.0, %v3265
        %v3267 = vpop.f32.mrf.mxu0
        %3268 = vmatprep.mubr.f32.mxu0 0.0
        %3269 = vmatmul.mubr.f32.gmra.mxu0 %v3159
        %v3270 = vpop.f32.mrf.mxu0
        %v3271 = vadd.f32 0.0, %v3270
        %v3272 = vpop.f32.mrf.mxu0
        %3273 = vmatprep.mubr.f32.mxu0 0.0
        %3274 = vmatmul.mubr.f32.gmra.mxu0 %v3160
        %v3275 = vpop.f32.mrf.mxu0
        %v3276 = vadd.f32 0.0, %v3275
        %v3277 = vpop.f32.mrf.mxu0
        %3278 = vmatprep.mubr.f32.mxu0 0.0
        %3279 = vmatmul.mubr.f32.gmra.mxu0 %v3161
        %v3280 = vpop.f32.mrf.mxu0
        %v3281 = vadd.f32 0.0, %v3280
        %v3282 = vpop.f32.mrf.mxu0
        %3283 = vdwg.mxu0
        %v3284 = vadd.f32 %v3145, %v3246
        %v3285 = vadd.f32 %v3146, %v3251
        %v3286 = vadd.f32 %v3147, %v3256
        %v3287 = vadd.f32 %v3148, %v3261
        %v3288 = vadd.f32 %v3149, %v3266
        %v3289 = vadd.f32 %v3150, %v3271
        %v3290 = vadd.f32 %v3151, %v3276
        %v3291 = vadd.f32 %v3152, %v3281
        %v3292 = vld [vmem:[%s3153 + $0x1] sm:$0xff]
        %v3293 = vld [vmem:[%s3153 + $0x11] sm:$0xff]
        %v3294 = vld [vmem:[%s3153 + $0x21] sm:$0xff]
        %v3295 = vld [vmem:[%s3153 + $0x31] sm:$0xff]
        %v3296 = vld [vmem:[%s3153 + $0x41] sm:$0xff]
        %v3297 = vld [vmem:[%s3153 + $0x51] sm:$0xff]
        %v3298 = vld [vmem:[%s3153 + $0x61] sm:$0xff]
        %v3299 = vld [vmem:[%s3153 + $0x71] sm:$0xff]
        %s3300 = scalar_lea.vmem [#allocation12], 896
        %v3301 = vld [vmem:[%s3300] sm:$0xff]
        %v3302 = vld [vmem:[%s3300 + $0x8] sm:$0xff]
        %v3303 = vld [vmem:[%s3300 + $0x10] sm:$0xff]
        %v3304 = vld [vmem:[%s3300 + $0x18] sm:$0xff]
        %v3305 = vld [vmem:[%s3300 + $0x20] sm:$0xff]
        %v3306 = vld [vmem:[%s3300 + $0x28] sm:$0xff]
        %v3307 = vld [vmem:[%s3300 + $0x30] sm:$0xff]
        %v3308 = vld [vmem:[%s3300 + $0x38] sm:$0xff]
        %v3309 = vld [vmem:[%s3300 + $0x40] sm:$0xff]
        %v3310 = vld [vmem:[%s3300 + $0x48] sm:$0xff]
        %v3311 = vld [vmem:[%s3300 + $0x50] sm:$0xff]
        %v3312 = vld [vmem:[%s3300 + $0x58] sm:$0xff]
        %v3313 = vld [vmem:[%s3300 + $0x60] sm:$0xff]
        %v3314 = vld [vmem:[%s3300 + $0x68] sm:$0xff]
        %v3315 = vld [vmem:[%s3300 + $0x70] sm:$0xff]
        %v3316 = vld [vmem:[%s3300 + $0x78] sm:$0xff]
        %3317 = vmatprep.subr.mxu0 0.0
        %3318 = vmatpush1.msra.mxu0 %v3316
        %3319 = vmatprep.subr.mxu0 0.0
        %3320 = vmatpush1.msra.mxu0 %v3315
        %3321 = vmatprep.subr.mxu0 0.0
        %3322 = vmatpush1.msra.mxu0 %v3314
        %3323 = vmatprep.subr.mxu0 0.0
        %3324 = vmatpush1.msra.mxu0 %v3313
        %3325 = vmatprep.subr.mxu0 0.0
        %3326 = vmatpush1.msra.mxu0 %v3312
        %3327 = vmatprep.subr.mxu0 0.0
        %3328 = vmatpush1.msra.mxu0 %v3311
        %3329 = vmatprep.subr.mxu0 0.0
        %3330 = vmatpush1.msra.mxu0 %v3310
        %3331 = vmatprep.subr.mxu0 0.0
        %3332 = vmatpush1.msra.mxu0 %v3309
        %3333 = vmatprep.subr.mxu0 0.0
        %3334 = vmatpush1.msra.mxu0 %v3308
        %3335 = vmatprep.subr.mxu0 0.0
        %3336 = vmatpush1.msra.mxu0 %v3307
        %3337 = vmatprep.subr.mxu0 0.0
        %3338 = vmatpush1.msra.mxu0 %v3306
        %3339 = vmatprep.subr.mxu0 0.0
        %3340 = vmatpush1.msra.mxu0 %v3305
        %3341 = vmatprep.subr.mxu0 0.0
        %3342 = vmatpush1.msra.mxu0 %v3304
        %3343 = vmatprep.subr.mxu0 0.0
        %3344 = vmatpush1.msra.mxu0 %v3303
        %3345 = vmatprep.subr.mxu0 0.0
        %3346 = vmatpush1.msra.mxu0 %v3302
        %3347 = vmatprep.subr.mxu0 0.0
        %3348 = vmatpush1.msra.mxu0 %v3301
        %3349 = vmatprep.subr.mxu0 0.0
        %3350 = vmatpush2.msra.mxu0 0.0
        %3351 = vmatprep.subr.mxu0 0.0
        %3352 = vmatpush2.msra.mxu0 0.0
        %3353 = vmatprep.subr.mxu0 0.0
        %3354 = vmatpush2.msra.mxu0 0.0
        %3355 = vmatprep.subr.mxu0 0.0
        %3356 = vmatpush2.msra.mxu0 0.0
        %3357 = vmatprep.subr.mxu0 0.0
        %3358 = vmatpush2.msra.mxu0 0.0
        %3359 = vmatprep.subr.mxu0 0.0
        %3360 = vmatpush2.msra.mxu0 0.0
        %3361 = vmatprep.subr.mxu0 0.0
        %3362 = vmatpush2.msra.mxu0 0.0
        %3363 = vmatprep.subr.mxu0 0.0
        %3364 = vmatpush2.msra.mxu0 0.0
        %3365 = vmatprep.subr.mxu0 0.0
        %3366 = vmatpush2.msra.mxu0 0.0
        %3367 = vmatprep.subr.mxu0 0.0
        %3368 = vmatpush2.msra.mxu0 0.0
        %3369 = vmatprep.subr.mxu0 0.0
        %3370 = vmatpush2.msra.mxu0 0.0
        %3371 = vmatprep.subr.mxu0 0.0
        %3372 = vmatpush2.msra.mxu0 0.0
        %3373 = vmatprep.subr.mxu0 0.0
        %3374 = vmatpush2.msra.mxu0 0.0
        %3375 = vmatprep.subr.mxu0 0.0
        %3376 = vmatpush2.msra.mxu0 0.0
        %3377 = vmatprep.subr.mxu0 0.0
        %3378 = vmatpush2.msra.mxu0 0.0
        %3379 = vmatprep.subr.mxu0 0.0
        %3380 = vmatpush2.msra.mxu0 0.0
        %3381 = vmatprep.mubr.f32.mxu0 0.0
        %3382 = vmatmul.mubr.f32.gmra.mxu0 %v3292
        %v3383 = vpop.f32.mrf.mxu0
        %v3384 = vadd.f32 0.0, %v3383
        %v3385 = vpop.f32.mrf.mxu0
        %3386 = vmatprep.mubr.f32.mxu0 0.0
        %3387 = vmatmul.mubr.f32.gmra.mxu0 %v3293
        %v3388 = vpop.f32.mrf.mxu0
        %v3389 = vadd.f32 0.0, %v3388
        %v3390 = vpop.f32.mrf.mxu0
        %3391 = vmatprep.mubr.f32.mxu0 0.0
        %3392 = vmatmul.mubr.f32.gmra.mxu0 %v3294
        %v3393 = vpop.f32.mrf.mxu0
        %v3394 = vadd.f32 0.0, %v3393
        %v3395 = vpop.f32.mrf.mxu0
        %3396 = vmatprep.mubr.f32.mxu0 0.0
        %3397 = vmatmul.mubr.f32.gmra.mxu0 %v3295
        %v3398 = vpop.f32.mrf.mxu0
        %v3399 = vadd.f32 0.0, %v3398
        %v3400 = vpop.f32.mrf.mxu0
        %3401 = vmatprep.mubr.f32.mxu0 0.0
        %3402 = vmatmul.mubr.f32.gmra.mxu0 %v3296
        %v3403 = vpop.f32.mrf.mxu0
        %v3404 = vadd.f32 0.0, %v3403
        %v3405 = vpop.f32.mrf.mxu0
        %3406 = vmatprep.mubr.f32.mxu0 0.0
        %3407 = vmatmul.mubr.f32.gmra.mxu0 %v3297
        %v3408 = vpop.f32.mrf.mxu0
        %v3409 = vadd.f32 0.0, %v3408
        %v3410 = vpop.f32.mrf.mxu0
        %3411 = vmatprep.mubr.f32.mxu0 0.0
        %3412 = vmatmul.mubr.f32.gmra.mxu0 %v3298
        %v3413 = vpop.f32.mrf.mxu0
        %v3414 = vadd.f32 0.0, %v3413
        %v3415 = vpop.f32.mrf.mxu0
        %3416 = vmatprep.mubr.f32.mxu0 0.0
        %3417 = vmatmul.mubr.f32.gmra.mxu0 %v3299
        %v3418 = vpop.f32.mrf.mxu0
        %v3419 = vadd.f32 0.0, %v3418
        %v3420 = vpop.f32.mrf.mxu0
        %3421 = vdwg.mxu0
        %v3422 = vadd.f32 %v3284, %v3384
        %v3423 = vadd.f32 %v3285, %v3389
        %v3424 = vadd.f32 %v3286, %v3394
        %v3425 = vadd.f32 %v3287, %v3399
        %v3426 = vadd.f32 %v3288, %v3404
        %v3427 = vadd.f32 %v3289, %v3409
        %v3428 = vadd.f32 %v3290, %v3414
        %v3429 = vadd.f32 %v3291, %v3419
        %v3430 = vld [vmem:[%s3153 + $0x2] sm:$0xff]
        %v3431 = vld [vmem:[%s3153 + $0x12] sm:$0xff]
        %v3432 = vld [vmem:[%s3153 + $0x22] sm:$0xff]
        %v3433 = vld [vmem:[%s3153 + $0x32] sm:$0xff]
        %v3434 = vld [vmem:[%s3153 + $0x42] sm:$0xff]
        %v3435 = vld [vmem:[%s3153 + $0x52] sm:$0xff]
        %v3436 = vld [vmem:[%s3153 + $0x62] sm:$0xff]
        %v3437 = vld [vmem:[%s3153 + $0x72] sm:$0xff]
        %s3438 = scalar_lea.vmem [#allocation12], 1024
        %v3439 = vld [vmem:[%s3438] sm:$0xff]
        %v3440 = vld [vmem:[%s3438 + $0x8] sm:$0xff]
        %v3441 = vld [vmem:[%s3438 + $0x10] sm:$0xff]
        %v3442 = vld [vmem:[%s3438 + $0x18] sm:$0xff]
        %v3443 = vld [vmem:[%s3438 + $0x20] sm:$0xff]
        %v3444 = vld [vmem:[%s3438 + $0x28] sm:$0xff]
        %v3445 = vld [vmem:[%s3438 + $0x30] sm:$0xff]
        %v3446 = vld [vmem:[%s3438 + $0x38] sm:$0xff]
        %v3447 = vld [vmem:[%s3438 + $0x40] sm:$0xff]
        %v3448 = vld [vmem:[%s3438 + $0x48] sm:$0xff]
        %v3449 = vld [vmem:[%s3438 + $0x50] sm:$0xff]
        %v3450 = vld [vmem:[%s3438 + $0x58] sm:$0xff]
        %v3451 = vld [vmem:[%s3438 + $0x60] sm:$0xff]
        %v3452 = vld [vmem:[%s3438 + $0x68] sm:$0xff]
        %v3453 = vld [vmem:[%s3438 + $0x70] sm:$0xff]
        %v3454 = vld [vmem:[%s3438 + $0x78] sm:$0xff]
        %3455 = vmatprep.subr.mxu0 0.0
        %3456 = vmatpush1.msra.mxu0 %v3454
        %3457 = vmatprep.subr.mxu0 0.0
        %3458 = vmatpush1.msra.mxu0 %v3453
        %3459 = vmatprep.subr.mxu0 0.0
        %3460 = vmatpush1.msra.mxu0 %v3452
        %3461 = vmatprep.subr.mxu0 0.0
        %3462 = vmatpush1.msra.mxu0 %v3451
        %3463 = vmatprep.subr.mxu0 0.0
        %3464 = vmatpush1.msra.mxu0 %v3450
        %3465 = vmatprep.subr.mxu0 0.0
        %3466 = vmatpush1.msra.mxu0 %v3449
        %3467 = vmatprep.subr.mxu0 0.0
        %3468 = vmatpush1.msra.mxu0 %v3448
        %3469 = vmatprep.subr.mxu0 0.0
        %3470 = vmatpush1.msra.mxu0 %v3447
        %3471 = vmatprep.subr.mxu0 0.0
        %3472 = vmatpush1.msra.mxu0 %v3446
        %3473 = vmatprep.subr.mxu0 0.0
        %3474 = vmatpush1.msra.mxu0 %v3445
        %3475 = vmatprep.subr.mxu0 0.0
        %3476 = vmatpush1.msra.mxu0 %v3444
        %3477 = vmatprep.subr.mxu0 0.0
        %3478 = vmatpush1.msra.mxu0 %v3443
        %3479 = vmatprep.subr.mxu0 0.0
        %3480 = vmatpush1.msra.mxu0 %v3442
        %3481 = vmatprep.subr.mxu0 0.0
        %3482 = vmatpush1.msra.mxu0 %v3441
        %3483 = vmatprep.subr.mxu0 0.0
        %3484 = vmatpush1.msra.mxu0 %v3440
        %3485 = vmatprep.subr.mxu0 0.0
        %3486 = vmatpush1.msra.mxu0 %v3439
        %3487 = vmatprep.subr.mxu0 0.0
        %3488 = vmatpush2.msra.mxu0 0.0
        %3489 = vmatprep.subr.mxu0 0.0
        %3490 = vmatpush2.msra.mxu0 0.0
        %3491 = vmatprep.subr.mxu0 0.0
        %3492 = vmatpush2.msra.mxu0 0.0
        %3493 = vmatprep.subr.mxu0 0.0
        %3494 = vmatpush2.msra.mxu0 0.0
        %3495 = vmatprep.subr.mxu0 0.0
        %3496 = vmatpush2.msra.mxu0 0.0
        %3497 = vmatprep.subr.mxu0 0.0
        %3498 = vmatpush2.msra.mxu0 0.0
        %3499 = vmatprep.subr.mxu0 0.0
        %3500 = vmatpush2.msra.mxu0 0.0
        %3501 = vmatprep.subr.mxu0 0.0
        %3502 = vmatpush2.msra.mxu0 0.0
        %3503 = vmatprep.subr.mxu0 0.0
        %3504 = vmatpush2.msra.mxu0 0.0
        %3505 = vmatprep.subr.mxu0 0.0
        %3506 = vmatpush2.msra.mxu0 0.0
        %3507 = vmatprep.subr.mxu0 0.0
        %3508 = vmatpush2.msra.mxu0 0.0
        %3509 = vmatprep.subr.mxu0 0.0
        %3510 = vmatpush2.msra.mxu0 0.0
        %3511 = vmatprep.subr.mxu0 0.0
        %3512 = vmatpush2.msra.mxu0 0.0
        %3513 = vmatprep.subr.mxu0 0.0
        %3514 = vmatpush2.msra.mxu0 0.0
        %3515 = vmatprep.subr.mxu0 0.0
        %3516 = vmatpush2.msra.mxu0 0.0
        %3517 = vmatprep.subr.mxu0 0.0
        %3518 = vmatpush2.msra.mxu0 0.0
        %3519 = vmatprep.mubr.f32.mxu0 0.0
        %3520 = vmatmul.mubr.f32.gmra.mxu0 %v3430
        %v3521 = vpop.f32.mrf.mxu0
        %v3522 = vadd.f32 0.0, %v3521
        %v3523 = vpop.f32.mrf.mxu0
        %3524 = vmatprep.mubr.f32.mxu0 0.0
        %3525 = vmatmul.mubr.f32.gmra.mxu0 %v3431
        %v3526 = vpop.f32.mrf.mxu0
        %v3527 = vadd.f32 0.0, %v3526
        %v3528 = vpop.f32.mrf.mxu0
        %3529 = vmatprep.mubr.f32.mxu0 0.0
        %3530 = vmatmul.mubr.f32.gmra.mxu0 %v3432
        %v3531 = vpop.f32.mrf.mxu0
        %v3532 = vadd.f32 0.0, %v3531
        %v3533 = vpop.f32.mrf.mxu0
        %3534 = vmatprep.mubr.f32.mxu0 0.0
        %3535 = vmatmul.mubr.f32.gmra.mxu0 %v3433
        %v3536 = vpop.f32.mrf.mxu0
        %v3537 = vadd.f32 0.0, %v3536
        %v3538 = vpop.f32.mrf.mxu0
        %3539 = vmatprep.mubr.f32.mxu0 0.0
        %3540 = vmatmul.mubr.f32.gmra.mxu0 %v3434
        %v3541 = vpop.f32.mrf.mxu0
        %v3542 = vadd.f32 0.0, %v3541
        %v3543 = vpop.f32.mrf.mxu0
        %3544 = vmatprep.mubr.f32.mxu0 0.0
        %3545 = vmatmul.mubr.f32.gmra.mxu0 %v3435
        %v3546 = vpop.f32.mrf.mxu0
        %v3547 = vadd.f32 0.0, %v3546
        %v3548 = vpop.f32.mrf.mxu0
        %3549 = vmatprep.mubr.f32.mxu0 0.0
        %3550 = vmatmul.mubr.f32.gmra.mxu0 %v3436
        %v3551 = vpop.f32.mrf.mxu0
        %v3552 = vadd.f32 0.0, %v3551
        %v3553 = vpop.f32.mrf.mxu0
        %3554 = vmatprep.mubr.f32.mxu0 0.0
        %3555 = vmatmul.mubr.f32.gmra.mxu0 %v3437
        %v3556 = vpop.f32.mrf.mxu0
        %v3557 = vadd.f32 0.0, %v3556
        %v3558 = vpop.f32.mrf.mxu0
        %3559 = vdwg.mxu0
        %v3560 = vadd.f32 %v3422, %v3522
        %v3561 = vadd.f32 %v3423, %v3527
        %v3562 = vadd.f32 %v3424, %v3532
        %v3563 = vadd.f32 %v3425, %v3537
        %v3564 = vadd.f32 %v3426, %v3542
        %v3565 = vadd.f32 %v3427, %v3547
        %v3566 = vadd.f32 %v3428, %v3552
        %v3567 = vadd.f32 %v3429, %v3557
        %v3568 = vld [vmem:[%s7] sm:$0x1]
        %v3570 = vlaneseq
        %v3571 = vshrl.u32 %v3570, 7
        %v3572 = vsub.s32 0, %v3571
        %v3573 = vrot.slane %v3568, %v3572
        %v3575 = vadd.f32 %v3560, %v3573
        %v3576 = vadd.f32 %v3561, %v3573
        %v3577 = vadd.f32 %v3562, %v3573
        %v3578 = vadd.f32 %v3563, %v3573
        %v3579 = vadd.f32 %v3564, %v3573
        %v3580 = vadd.f32 %v3565, %v3573
        %v3581 = vadd.f32 %v3566, %v3573
        %v3582 = vadd.f32 %v3567, %v3573
        %v3583 = vmax.f32 %v3575, 0.0
        %v3584 = vmax.f32 %v3576, 0.0
        %v3585 = vmax.f32 %v3577, 0.0
        %v3586 = vmax.f32 %v3578, 0.0
        %v3587 = vmax.f32 %v3579, 0.0
        %v3588 = vmax.f32 %v3580, 0.0
        %v3589 = vmax.f32 %v3581, 0.0
        %v3590 = vmax.f32 %v3582, 0.0
        %3591 = vst [vmem:[%s494] sm:$0xff] %v3583
        %3592 = vst [vmem:[%s494 + $0x8] sm:$0xff] %v3584
        %3593 = vst [vmem:[%s494 + $0x10] sm:$0xff] %v3585
        %3594 = vst [vmem:[%s494 + $0x18] sm:$0xff] %v3586
        %3595 = vst [vmem:[%s494 + $0x20] sm:$0xff] %v3587
        %3596 = vst [vmem:[%s494 + $0x28] sm:$0xff] %v3588
        %3597 = vst [vmem:[%s494 + $0x30] sm:$0xff] %v3589
        %3598 = vst [vmem:[%s494 + $0x38] sm:$0xff] %v3590
        %s3599 = sand.u32 %s257, 1
        %s3600 = scalar_lea.sflag [#allocation6], %s3599
        %s3601 = sand.u32 %s257, 1
        %s3602 = smul.addr %s3601, 64
        %s3603 = scalar_lea.vmem [#allocation15], %s3602
        // Predicated region
        $region97: #{tpu_custom_call.1} parent=51 // pred_check
          %p3604 = pneg %p267
        $region98: #{tpu_custom_call.1} parent=51 // pred_check_branch
          %3606 = sbr.rel (%p3604) target = $region100
        $region99: #{tpu_custom_call.1} parent=51 // pred_region
          %s3607 = smul.u32 8, %s35
          %s3609 = ssub.s32 1024, 1024
          %3610 = vsyncadd %s3600, %s3609
          %s3611 = smul.addr %s34, 8
          %s3612 = sadd.s32 %s3607, %s3611
          %s3613 = smul.addr %s3612, 128
          %s3614 = scalar_lea.hbm %s8, %s3613
          %s3615 = sshll.u32 %s3603, 4
          %s3616 = int_to_ptr.vmem [resolvable:$true] %s3615
          %3621 = dma.vmem_to_hbm [thread:$0]  %s3616, 1024, %s3614, %s3600, 128, 128, 8
        $region100: #{tpu_custom_call.1} parent=51 // pred_fallthru
          _
      $region52: #{tpu_custom_call.1} parent=5 // pred_fallthru
        _
      %p3622 = scmp.le.s32.totalorder 2, %s25
      // Predicated region
      $region101: #{tpu_custom_call.1} parent=5 // pred_check
        %p3623 = pneg %p3622
      $region102: #{tpu_custom_call.1} parent=5 // pred_check_branch
        %3625 = sbr.rel (%p3623) target = $region104
      $region103: #{tpu_custom_call.1} parent=5 // pred_region
        %s3626 = ssub.s32 %s25, 2
        // Predicated region
        $region105: #{tpu_custom_call.1} parent=103 // pred_check
          %p3627 = pneg %p273
        $region106: #{tpu_custom_call.1} parent=103 // pred_check_branch
          %3629 = sbr.rel (%p3627) target = $region108
        $region107: #{tpu_custom_call.1} parent=103 // pred_region
          %s3630 = sand.u32 %s258, 1
          %s3631 = scalar_lea.sflag [#allocation6], %s3630
          %s3632 = sand.u32 %s258, 1
          %s3633 = smul.addr %s3632, 64
          %s3634 = scalar_lea.vmem [#allocation15], %s3633
          %3635 = dma.done %s3631, 1024
        $region108: #{tpu_custom_call.1} parent=103 // pred_fallthru
          _
      $region104: #{tpu_custom_call.1} parent=5 // pred_fallthru
        _
    $region6: #{tpu_custom_call.1} parent=1 // loop_footer
      %s29 = sadd.s32 1, %s25
    $region7: #{tpu_custom_call.1} parent=1 // loop_footer_branch
      %24 = sbr.rel target = $region3
    $region8: #{tpu_custom_call.1} parent=1 // loop_exit
      _
    %3636 = vsyncpa [#allocation5], 1
    %s3637 = scalar_lea.sflag [#allocation5], 1
    %3638 = vsyncpa %s3637, 1
    %3639 = vsyncpa [#allocation8], 1
    %s3640 = scalar_lea.sflag [#allocation8], 1
    %3641 = vsyncpa %s3640, 1
    %3642 = vsyncpa [#allocation11], 1
    %3643 = vsyncpa [#allocation14], 1
    %3644 = vsyncpa [#allocation6], 1
    %s3645 = scalar_lea.sflag [#allocation6], 1
    %3646 = vsyncpa %s3645, 1

</llo_original>
